<compile_context>
chip_gen: v7x
topology: tpu7x:2x2x1
jax: 0.10.0
libtpu: 0.0.40
codegen_flags: <defaults>
</compile_context>

<pallas_src>
import functools
import math

import jax
import jax.numpy as jnp
from jax import lax
from jax.experimental import pallas as pl
from jax.experimental.pallas import tpu as pltpu

_NEG_INF = -1e30


# ----------------------------------------------------------------------------
# Fused Pallas kernel: embedding -> n_layers encoder -> decoder head
# ----------------------------------------------------------------------------
def _layer_norm(x, gamma, beta, eps=1e-5):
    mean = jnp.mean(x, axis=-1, keepdims=True)
    var = jnp.mean((x - mean) ** 2, axis=-1, keepdims=True)
    return (x - mean) * lax.rsqrt(var + eps) * gamma + beta


def _fused_actor_kernel(
    # inputs
    nodes_ref, sig_ref,
    eu_w_ref, eu_b_ref, ef_w_ref, ef_b_ref,
    wqkv_ref, bqkv_ref, wo_ref, bo_ref, ln1g_ref, ln1b_ref,
    w1_ref, b1_ref, w2_ref, b2_ref, ln2g_ref, ln2b_ref,
    dwqs_ref, dwk_ref,
    # outputs
    emb_out_ref, logp_out_ref,
    # scratch
    h_ref,
    *, n_heads, n_users, v_range, nf_pad,
):
    layer = pl.program_id(1)
    n_layers = pl.num_programs(1)
    bf16 = jnp.bfloat16

    tb, n, _ = nodes_ref.shape
    d = h_ref.shape[-1]
    dh = d // n_heads
    rows = tb * n
    nf = n - n_users

    # ---- first layer step: node embedding (node_dim == 2 -> VPU broadcast) --
    @pl.when(layer == 0)
    def _embed():
        nodes = nodes_ref[...]                       # [TB, N, 2] f32
        c0 = nodes[..., 0:1]                         # [TB, N, 1]
        c1 = nodes[..., 1:2]
        wu = eu_w_ref[...]                           # [2, D]
        wf = ef_w_ref[...]
        u_emb = c0 * wu[0:1, :] + c1 * wu[1:2, :] + eu_b_ref[...]   # [TB, N, D]
        f_emb = c0 * wf[0:1, :] + c1 * wf[1:2, :] + ef_b_ref[...]
        node_idx = lax.broadcasted_iota(jnp.int32, (tb, n, 1), 1)
        emb = jnp.where(node_idx < n_users, u_emb, f_emb)           # users ++ facilities
        # torch Actor feeds the critic the *pre-encoder* embedder outputs.
        emb_out_ref[...] = emb
        h_ref[...] = emb.reshape(rows, d)

    # ---- encoder layer `layer` (weights resident in VMEM, indexed by layer) --
    x = h_ref[...]                                   # [TB*N, D] f32, VMEM-resident
    scale = 1.0 / math.sqrt(dh)

    xb = x.astype(bf16)
    qkv = (jnp.dot(xb, wqkv_ref[layer], preferred_element_type=jnp.float32)
           + bqkv_ref[layer])                        # [TB*N, 3D], one big MXU matmul

    # Per-head attention: scores / softmax / PV stay per head (tiny), but are
    # batched over the TB batch elements via a leading batch dim.
    heads_out = []
    for h in range(n_heads):
        q_h = qkv[:, h * dh:(h + 1) * dh].reshape(tb, n, dh).astype(bf16)
        k_h = qkv[:, d + h * dh:d + (h + 1) * dh].reshape(tb, n, dh).astype(bf16)
        v_h = qkv[:, 2 * d + h * dh:2 * d + (h + 1) * dh].reshape(tb, n, dh).astype(bf16)
        s = jnp.einsum("bnd,bmd->bnm", q_h, k_h,
                       preferred_element_type=jnp.float32) * scale      # [TB,N,N]
        # TODO(synk): for large N this materializes [TB,N,N] scores per head;
        # switch to a KV-tiled (flash-style) loop if N grows past ~512.
        s = s - jnp.max(s, axis=-1, keepdims=True)
        p = jnp.exp(s)
        p = p / jnp.sum(p, axis=-1, keepdims=True)   # exact softmax
        o_h = jnp.einsum("bnm,bmd->bnd", p.astype(bf16), v_h,
                         preferred_element_type=jnp.float32)            # [TB,N,dh]
        heads_out.append(o_h.reshape(rows, dh))

    # Heads back onto lanes, ONE full-contraction output projection.
    o_cat = jnp.concatenate(heads_out, axis=-1)                         # [TB*N, D]
    attn = (jnp.dot(o_cat.astype(bf16), wo_ref[layer],
                    preferred_element_type=jnp.float32) + bo_ref[layer])

    h1 = _layer_norm(x + attn, ln1g_ref[layer], ln1b_ref[layer])
    ff = jnp.maximum(
        jnp.dot(h1.astype(bf16), w1_ref[layer],
                preferred_element_type=jnp.float32) + b1_ref[layer], 0.0)
    ff = (jnp.dot(ff.astype(bf16), w2_ref[layer],
                  preferred_element_type=jnp.float32) + b2_ref[layer])
    y = _layer_norm(h1 + ff, ln2g_ref[layer], ln2b_ref[layer])
    h_ref[...] = y

    # ---- last layer step: decoder compatibility -> lane-dense log-probs -----
    @pl.when(layer == n_layers - 1)
    def _decode():
        y3 = y.reshape(tb, n, d)
        fac = y3[:, n_users:, :]                                  # [TB, Nf, D]
        graph = jnp.mean(fac, axis=1)                             # [TB, D]
        sig = sig_ref[...].reshape(tb, -1)                        # [TB, S]
        qin = jnp.concatenate([graph, sig], axis=-1)              # [TB, D+S]
        q = jnp.dot(qin.astype(bf16), dwqs_ref[...],
                    preferred_element_type=jnp.float32)           # [TB, D]
        k = jnp.dot(fac.reshape(tb * nf, d).astype(bf16), dwk_ref[...],
                    preferred_element_type=jnp.float32).reshape(tb, nf, d)
        compat = jnp.einsum("bqd,bnd->bqn",
                            q.reshape(tb, 1, d).astype(bf16), k.astype(bf16),
                            preferred_element_type=jnp.float32)   # [TB, 1, Nf]
        compat = compat * (1.0 / math.sqrt(d))
        logits = v_range * jnp.tanh(compat)                       # tanh clip
        if nf_pad > nf:                                           # lane-dense pad
            pad = jnp.full((tb, 1, nf_pad - nf), _NEG_INF, jnp.float32)
            logits = jnp.concatenate([logits, pad], axis=-1)
        m = jnp.max(logits, axis=-1, keepdims=True)
        z = logits - m
        lse = jnp.log(jnp.sum(jnp.exp(z), axis=-1, keepdims=True))
        logp_out_ref[...] = z - lse                               # [TB, 1, nf_pad]


# ----------------------------------------------------------------------------
# Pallas wrapper
# ----------------------------------------------------------------------------
def _pick_tb(batch, n, target_rows=256):
    """Largest divisor of `batch` keeping TB*N near the MXU row target,
    preferring >=2 batch blocks (v7x megacore) when rows stay >=128."""
    best = 1
    for tb in range(1, batch + 1):
        if batch % tb == 0 and tb * n <= max(target_rows, n):
            best = tb
    tb = best
    if batch // tb < 2:
        for cand in range(tb - 1, 0, -1):
            if batch % cand == 0 and cand * n >= 128 and batch // cand >= 2:
                tb = cand
                break
    return tb


def actor_fused(params, nodes, action_sig, n_users):
    B, N, _ = nodes.shape
    D = params["emb_u_w"].shape[1]
    L = params["enc_wqkv"].shape[0]
    H = params["enc_w1"].shape[2]
    S = action_sig.shape[-1]
    Nf = N - n_users
    nf_pad = ((Nf + 127) // 128) * 128
    TB = _pick_tb(B, N)

    kernel = functools.partial(
        _fused_actor_kernel,
        n_heads=params["n_heads"], n_users=n_users,
        v_range=params["v_range"], nf_pad=nf_pad)

    batch3 = lambda b, l: (b, 0, 0)          # per-batch-block tensors
    const3 = lambda b, l: (0, 0, 0)          # resident [L, ...] weight stacks
    const2 = lambda b, l: (0, 0)             # resident 2-D weights

    # VMEM budget: resident weight stacks + double-buffered IO + scratch + slack.
    weight_keys = ("emb_u_w", "emb_u_b", "emb_f_w", "emb_f_b",
                   "enc_wqkv", "enc_bqkv", "enc_wo", "enc_bo",
                   "enc_ln1_g", "enc_ln1_b", "enc_w1", "enc_b1",
                   "enc_w2", "enc_b2", "enc_ln2_g", "enc_ln2_b",
                   "dec_wqs", "dec_wk")
    weight_bytes = sum(int(params[k].size) * params[k].dtype.itemsize
                       for k in weight_keys)
    io_bytes = 2 * 4 * (TB * N * 2 + TB * S + TB * N * D + TB * nf_pad)
    scratch_bytes = 4 * TB * N * D
    # TODO(synk): if a future config pushes this past 64 MiB (v7x physical),
    # fall back to layer-streamed weight BlockSpecs instead of residency.
    vmem_limit = min(64 * 1024 * 1024,
                     max(32 * 1024 * 1024,
                         weight_bytes + io_bytes + scratch_bytes + 8 * 1024 * 1024))

    emb_out, logp_out = pl.pallas_call(
        kernel,
        out_shape=(
            jax.ShapeDtypeStruct((B, N, D), jnp.float32),
            jax.ShapeDtypeStruct((B, 1, nf_pad), jnp.float32),
        ),
        grid=(B // TB, L),
        in_specs=[
            pl.BlockSpec((TB, N, 2), batch3),              # nodes (users ++ facilities)
            pl.BlockSpec((TB, 1, S), batch3),              # action signature
            pl.BlockSpec((2, D), const2),                  # emb_u_w
            pl.BlockSpec((1, D), const2),                  # emb_u_b
            pl.BlockSpec((2, D), const2),                  # emb_f_w
            pl.BlockSpec((1, D), const2),                  # emb_f_b
            pl.BlockSpec((L, D, 3 * D), const3),           # wqkv  (bf16, resident)
            pl.BlockSpec((L, 1, 3 * D), const3),           # bqkv
            pl.BlockSpec((L, D, D), const3),               # wo    (bf16, resident)
            pl.BlockSpec((L, 1, D), const3),               # bo
            pl.BlockSpec((L, 1, D), const3),               # ln1_g
            pl.BlockSpec((L, 1, D), const3),               # ln1_b
            pl.BlockSpec((L, D, H), const3),               # w1    (bf16, resident)
            pl.BlockSpec((L, 1, H), const3),               # b1
            pl.BlockSpec((L, H, D), const3),               # w2    (bf16, resident)
            pl.BlockSpec((L, 1, D), const3),               # b2
            pl.BlockSpec((L, 1, D), const3),               # ln2_g
            pl.BlockSpec((L, 1, D), const3),               # ln2_b
            pl.BlockSpec((D + S, D), const2),              # dec_[wq;wsig] folded (bf16)
            pl.BlockSpec((D, D), const2),                  # dec_wk  (bf16)
        ],
        out_specs=(
            pl.BlockSpec((TB, N, D), batch3),
            pl.BlockSpec((TB, 1, nf_pad), batch3),
        ),
        scratch_shapes=[pltpu.VMEM((TB * N, D), jnp.float32)],  # resident activation
        compiler_params=pltpu.CompilerParams(
            dimension_semantics=("parallel", "arbitrary"),
            vmem_limit_bytes=int(vmem_limit),
        ),
    )(
        nodes, action_sig,
        params["emb_u_w"], params["emb_u_b"],
        params["emb_f_w"], params["emb_f_b"],
        params["enc_wqkv"], params["enc_bqkv"],
        params["enc_wo"], params["enc_bo"],
        params["enc_ln1_g"], params["enc_ln1_b"],
        params["enc_w1"], params["enc_b1"],
        params["enc_w2"], params["enc_b2"],
        params["enc_ln2_g"], params["enc_ln2_b"],
        params["dec_wqs"], params["dec_wk"],
    )
    return emb_out, logp_out


# ----------------------------------------------------------------------------
# Model glue (parameters, get_action_sig, forward)
# ----------------------------------------------------------------------------
def get_action_sig(action_record):
    # mirrors torch: stack -> last 3 transposed, concat with mean over records
    t = jnp.stack(action_record)                   # [T, B]
    last3 = jnp.transpose(t[-3:], (1, 0))          # [B, 3]
    mean = jnp.mean(t, axis=0)[:, None]            # [B, 1]
    return jnp.concatenate([last3, mean], axis=1)  # [B, 4]


def init_actor_params(key, embedding_dim, hidden_dim, n_heads, n_layers, v_range):
    node_dim, sig_dim = 2, 4
    D, H, L = embedding_dim, hidden_dim, n_layers
    bf16 = jnp.bfloat16

    def uni(k, shape, fan_in, dtype=jnp.float32):
        bound = 1.0 / math.sqrt(fan_in)
        return jax.random.uniform(k, shape, jnp.float32, -bound, bound).astype(dtype)

    keys = iter(jax.random.split(key, 32))
    dec_wq = uni(next(keys), (D, D), D, bf16)
    dec_wsig = uni(next(keys), (sig_dim, D), sig_dim, bf16)
    return {
        "n_heads": n_heads,
        "v_range": float(v_range),
        # embedding (VPU path) in f32
        "emb_u_w": uni(next(keys), (node_dim, D), node_dim),
        "emb_u_b": uni(next(keys), (1, D), node_dim),
        "emb_f_w": uni(next(keys), (node_dim, D), node_dim),
        "emb_f_b": uni(next(keys), (1, D), node_dim),
        # encoder weights stacked over layers; matmul weights in bf16
        "enc_wqkv": uni(next(keys), (L, D, 3 * D), D, bf16),
        "enc_bqkv": uni(next(keys), (L, 1, 3 * D), D),
        "enc_wo": uni(next(keys), (L, D, D), D, bf16),
        "enc_bo": uni(next(keys), (L, 1, D), D),
        "enc_ln1_g": jnp.ones((L, 1, D), jnp.float32),
        "enc_ln1_b": jnp.zeros((L, 1, D), jnp.float32),
        "enc_w1": uni(next(keys), (L, D, H), D, bf16),
        "enc_b1": uni(next(keys), (L, 1, H), D),
        "enc_w2": uni(next(keys), (L, H, D), H, bf16),
        "enc_b2": uni(next(keys), (L, 1, D), H),
        "enc_ln2_g": jnp.ones((L, 1, D), jnp.float32),
        "enc_ln2_b": jnp.zeros((L, 1, D), jnp.float32),
        # decoder: query / signature weights folded into one matmul
        "dec_wqs": jnp.concatenate([dec_wq, dec_wsig], axis=0),   # [D+S, D] bf16
        "dec_wk": uni(next(keys), (D, D), D, bf16),
    }


def actor_forward(params, problem, users, facilities, solution, exchange,
                  action_record, do_sample=False, fixed_action=None,
                  require_entropy=False, to_critic=False, only_critic=False,
                  rng_key=None):
    # --- whole forward in one fused Pallas kernel ---
    Nu = users.shape[1]
    Nf = facilities.shape[1]
    nodes = jnp.concatenate([users, facilities], axis=1).astype(jnp.float32)
    action_sig = get_action_sig(action_record)[:, None, :]        # [B, 1, 4]

    emb, logp_pad = actor_fused(params, nodes, action_sig, Nu)
    users_embed = emb[:, :Nu]
    facilities_embed = emb[:, Nu:]
    if only_critic:
        # TODO(synk): only_critic still runs the fused encoder/decoder; the
        # extra work is negligible at these sizes and embeddings are identical.
        return users_embed, facilities_embed

    # TODO(synk): MultiHeadEncoder / MultiHeadDecoder sources not provided;
    # encoder = joint self-attention over (users ++ facilities), decoder =
    # tanh-clipped compatibility head; `problem`/`solution`/`exchange` unused.
    logp = logp_pad[:, 0, :Nf]                                    # [B, Nf]

    if fixed_action is not None:
        action = jnp.asarray(fixed_action, jnp.int32)
    elif do_sample:
        key = rng_key if rng_key is not None else jax.random.PRNGKey(0)
        action = jax.random.categorical(key, logp, axis=-1)
    else:
        action = jnp.argmax(logp, axis=-1)
    log_ll = jnp.take_along_axis(logp, action[:, None], axis=-1)[:, 0]  # squeeze()

    embeds = (users_embed, facilities_embed if to_critic else None)
    if require_entropy:
        entropy = -jnp.sum(jnp.exp(logp) * logp, axis=-1)   # cheap, plain JAX
        return action, log_ll, embeds, entropy
    return action, log_ll, embeds


# ----------------------------------------------------------------------------
# Smoke test
# ----------------------------------------------------------------------------
if __name__ == "__main__":
    B, Nu, Nf = 2, 8, 8
    embedding_dim, hidden_dim, n_heads, n_layers = 32, 64, 4, 2
    v_range = 6.0

    key = jax.random.PRNGKey(0)
    k_params, k_u, k_f, k_rec = jax.random.split(key, 4)

    params = init_actor_params(k_params, embedding_dim, hidden_dim,
                               n_heads, n_layers, v_range)

    users = jax.random.uniform(k_u, (B, Nu, 2), jnp.float32)
    facilities = jax.random.uniform(k_f, (B, Nf, 2), jnp.float32)
    solution = jnp.zeros((B, Nf), jnp.int32)     # placeholder problem state
    exchange = jnp.zeros((B, 2), jnp.int32)      # placeholder exchange move
    action_record = [
        jax.random.uniform(jax.random.fold_in(k_rec, i), (B,), jnp.float32)
        for i in range(4)
    ]

    action, log_ll, (u_emb, f_emb), entropy = actor_forward(
        params, "pmedian", users, facilities, solution, exchange, action_record,
        do_sample=False, require_entropy=True, to_critic=True,
    )
    jax.block_until_ready((action, log_ll, u_emb, f_emb, entropy))
    print("KERNEL_OK")
</pallas_src>

<mosaic_0001>
module attributes {stable_mosaic.version = 11 : i64} {
  func.func @_fused_actor_kernel(%arg0: i32, %arg1: i32, %arg2: memref<2x16x2xf32, #tpu.memory_space<vmem>>, %arg3: memref<2x1x4xf32, #tpu.memory_space<vmem>>, %arg4: memref<2x32xf32, #tpu.memory_space<vmem>>, %arg5: memref<1x32xf32, #tpu.memory_space<vmem>>, %arg6: memref<2x32xf32, #tpu.memory_space<vmem>>, %arg7: memref<1x32xf32, #tpu.memory_space<vmem>>, %arg8: memref<2x32x96xbf16, #tpu.memory_space<vmem>>, %arg9: memref<2x1x96xf32, #tpu.memory_space<vmem>>, %arg10: memref<2x32x32xbf16, #tpu.memory_space<vmem>>, %arg11: memref<2x1x32xf32, #tpu.memory_space<vmem>>, %arg12: memref<2x1x32xf32, #tpu.memory_space<vmem>>, %arg13: memref<2x1x32xf32, #tpu.memory_space<vmem>>, %arg14: memref<2x32x64xbf16, #tpu.memory_space<vmem>>, %arg15: memref<2x1x64xf32, #tpu.memory_space<vmem>>, %arg16: memref<2x64x32xbf16, #tpu.memory_space<vmem>>, %arg17: memref<2x1x32xf32, #tpu.memory_space<vmem>>, %arg18: memref<2x1x32xf32, #tpu.memory_space<vmem>>, %arg19: memref<2x1x32xf32, #tpu.memory_space<vmem>>, %arg20: memref<36x32xbf16, #tpu.memory_space<vmem>>, %arg21: memref<32x32xbf16, #tpu.memory_space<vmem>>, %arg22: memref<2x16x32xf32, #tpu.memory_space<vmem>>, %arg23: memref<2x1x128xf32, #tpu.memory_space<vmem>>, %arg24: memref<32x32xf32, #tpu.memory_space<vmem>>) attributes {dimension_semantics = [#tpu.dimension_semantics<parallel>, #tpu.dimension_semantics<arbitrary>], iteration_bounds = array<i64: 1, 2>, scalar_prefetch = 0 : i64, scratch_operands = 1 : i64, tpu.core_type = #tpu.core_type<tc>, window_params = [{transform_indices = @transform_0, window_bounds = array<i64: 2, 16, 2>}, {transform_indices = @transform_1, window_bounds = array<i64: 2, 1, 4>}, {pipeline_mode = #tpu.pipeline_mode<synchronous>, transform_indices = @transform_2, window_bounds = array<i64: 2, 32>}, {pipeline_mode = #tpu.pipeline_mode<synchronous>, transform_indices = @transform_3, window_bounds = array<i64: 1, 32>}, {pipeline_mode = #tpu.pipeline_mode<synchronous>, transform_indices = @transform_4, window_bounds = array<i64: 2, 32>}, {pipeline_mode = #tpu.pipeline_mode<synchronous>, transform_indices = @transform_5, window_bounds = array<i64: 1, 32>}, {pipeline_mode = #tpu.pipeline_mode<synchronous>, transform_indices = @transform_6, window_bounds = array<i64: 2, 32, 96>}, {pipeline_mode = #tpu.pipeline_mode<synchronous>, transform_indices = @transform_7, window_bounds = array<i64: 2, 1, 96>}, {pipeline_mode = #tpu.pipeline_mode<synchronous>, transform_indices = @transform_8, window_bounds = array<i64: 2, 32, 32>}, {pipeline_mode = #tpu.pipeline_mode<synchronous>, transform_indices = @transform_9, window_bounds = array<i64: 2, 1, 32>}, {pipeline_mode = #tpu.pipeline_mode<synchronous>, transform_indices = @transform_10, window_bounds = array<i64: 2, 1, 32>}, {pipeline_mode = #tpu.pipeline_mode<synchronous>, transform_indices = @transform_11, window_bounds = array<i64: 2, 1, 32>}, {pipeline_mode = #tpu.pipeline_mode<synchronous>, transform_indices = @transform_12, window_bounds = array<i64: 2, 32, 64>}, {pipeline_mode = #tpu.pipeline_mode<synchronous>, transform_indices = @transform_13, window_bounds = array<i64: 2, 1, 64>}, {pipeline_mode = #tpu.pipeline_mode<synchronous>, transform_indices = @transform_14, window_bounds = array<i64: 2, 64, 32>}, {pipeline_mode = #tpu.pipeline_mode<synchronous>, transform_indices = @transform_15, window_bounds = array<i64: 2, 1, 32>}, {pipeline_mode = #tpu.pipeline_mode<synchronous>, transform_indices = @transform_16, window_bounds = array<i64: 2, 1, 32>}, {pipeline_mode = #tpu.pipeline_mode<synchronous>, transform_indices = @transform_17, window_bounds = array<i64: 2, 1, 32>}, {pipeline_mode = #tpu.pipeline_mode<synchronous>, transform_indices = @transform_18, window_bounds = array<i64: 36, 32>}, {pipeline_mode = #tpu.pipeline_mode<synchronous>, transform_indices = @transform_19, window_bounds = array<i64: 32, 32>}, {transform_indices = @transform_20, window_bounds = array<i64: 2, 16, 32>}, {transform_indices = @transform_21, window_bounds = array<i64: 2, 1, 128>}]} {
    %c0_i32 = arith.constant 0 : i32
    %0 = arith.cmpi eq, %arg1, %c0_i32 : i32
    %1 = arith.extui %0 : i1 to i32
    %c0_i32_0 = arith.constant 0 : i32
    %2 = arith.cmpi ne, %1, %c0_i32_0 : i32
    scf.if %2 {
      %c0_63 = arith.constant 0 : index
      %c0_64 = arith.constant 0 : index
      %c0_65 = arith.constant 0 : index
      %205 = vector.load %arg2[%c0_63, %c0_64, %c0_65] : memref<2x16x2xf32, #tpu.memory_space<vmem>>, vector<2x16x2xf32>
      %206 = vector.extract_strided_slice %205 {offsets = [0, 0, 0], sizes = [2, 16, 1], strides = [1, 1, 1]} : vector<2x16x2xf32> to vector<2x16x1xf32>
      %207 = vector.extract_strided_slice %205 {offsets = [0, 0, 1], sizes = [2, 16, 1], strides = [1, 1, 1]} : vector<2x16x2xf32> to vector<2x16x1xf32>
      %c0_66 = arith.constant 0 : index
      %c0_67 = arith.constant 0 : index
      %208 = vector.load %arg4[%c0_66, %c0_67] : memref<2x32xf32, #tpu.memory_space<vmem>>, vector<2x32xf32>
      %c0_68 = arith.constant 0 : index
      %c0_69 = arith.constant 0 : index
      %209 = vector.load %arg6[%c0_68, %c0_69] : memref<2x32xf32, #tpu.memory_space<vmem>>, vector<2x32xf32>
      %210 = vector.extract_strided_slice %208 {offsets = [0, 0], sizes = [1, 32], strides = [1, 1]} : vector<2x32xf32> to vector<1x32xf32>
      %211 = vector.shape_cast %210 : vector<1x32xf32> to vector<1x1x32xf32>
      %212 = vector.broadcast %206 : vector<2x16x1xf32> to vector<2x16x32xf32>
      %213 = vector.broadcast %211 : vector<1x1x32xf32> to vector<2x16x32xf32>
      %214 = arith.mulf %212, %213 : vector<2x16x32xf32>
      %215 = vector.extract_strided_slice %208 {offsets = [1, 0], sizes = [1, 32], strides = [1, 1]} : vector<2x32xf32> to vector<1x32xf32>
      %216 = vector.shape_cast %215 : vector<1x32xf32> to vector<1x1x32xf32>
      %217 = vector.broadcast %207 : vector<2x16x1xf32> to vector<2x16x32xf32>
      %218 = vector.broadcast %216 : vector<1x1x32xf32> to vector<2x16x32xf32>
      %219 = arith.mulf %217, %218 : vector<2x16x32xf32>
      %220 = arith.addf %214, %219 : vector<2x16x32xf32>
      %c0_70 = arith.constant 0 : index
      %c0_71 = arith.constant 0 : index
      %221 = vector.load %arg5[%c0_70, %c0_71] : memref<1x32xf32, #tpu.memory_space<vmem>>, vector<1x32xf32>
      %222 = vector.shape_cast %221 : vector<1x32xf32> to vector<1x1x32xf32>
      %223 = vector.broadcast %222 : vector<1x1x32xf32> to vector<2x16x32xf32>
      %224 = arith.addf %220, %223 : vector<2x16x32xf32>
      %225 = vector.extract_strided_slice %209 {offsets = [0, 0], sizes = [1, 32], strides = [1, 1]} : vector<2x32xf32> to vector<1x32xf32>
      %226 = vector.shape_cast %225 : vector<1x32xf32> to vector<1x1x32xf32>
      %227 = vector.broadcast %206 : vector<2x16x1xf32> to vector<2x16x32xf32>
      %228 = vector.broadcast %226 : vector<1x1x32xf32> to vector<2x16x32xf32>
      %229 = arith.mulf %227, %228 : vector<2x16x32xf32>
      %230 = vector.extract_strided_slice %209 {offsets = [1, 0], sizes = [1, 32], strides = [1, 1]} : vector<2x32xf32> to vector<1x32xf32>
      %231 = vector.shape_cast %230 : vector<1x32xf32> to vector<1x1x32xf32>
      %232 = vector.broadcast %207 : vector<2x16x1xf32> to vector<2x16x32xf32>
      %233 = vector.broadcast %231 : vector<1x1x32xf32> to vector<2x16x32xf32>
      %234 = arith.mulf %232, %233 : vector<2x16x32xf32>
      %235 = arith.addf %229, %234 : vector<2x16x32xf32>
      %c0_72 = arith.constant 0 : index
      %c0_73 = arith.constant 0 : index
      %236 = vector.load %arg7[%c0_72, %c0_73] : memref<1x32xf32, #tpu.memory_space<vmem>>, vector<1x32xf32>
      %237 = vector.shape_cast %236 : vector<1x32xf32> to vector<1x1x32xf32>
      %238 = vector.broadcast %237 : vector<1x1x32xf32> to vector<2x16x32xf32>
      %239 = arith.addf %235, %238 : vector<2x16x32xf32>
      %240 = tpu.iota {dimensions = array<i32: 1>} : vector<2x16x1xi32>
      %c8_i32 = arith.constant 8 : i32
      %241 = vector.broadcast %c8_i32 : i32 to vector<2x16x1xi32>
      %242 = arith.cmpi slt, %240, %241 : vector<2x16x1xi32>
      %243 = vector.shape_cast %242 : vector<2x16x1xi1> to vector<2x16x1xi1>
      %244 = vector.broadcast %243 : vector<2x16x1xi1> to vector<2x16x32xi1>
      %245 = arith.select %244, %224, %239 : vector<2x16x32xi1>, vector<2x16x32xf32>
      %c0_74 = arith.constant 0 : index
      %c0_75 = arith.constant 0 : index
      %c0_76 = arith.constant 0 : index
      %246 = vector.load %arg22[%c0_74, %c0_75, %c0_76] : memref<2x16x32xf32, #tpu.memory_space<vmem>>, vector<2x16x32xf32>
      tpu.vector_store %arg22[%c0_74, %c0_75, %c0_76], %245 {strides = array<i32>} : memref<2x16x32xf32, #tpu.memory_space<vmem>>, vector<2x16x32xf32>,
      %247 = vector.shape_cast %245 : vector<2x16x32xf32> to vector<32x32xf32>
      %c0_77 = arith.constant 0 : index
      %c0_78 = arith.constant 0 : index
      %248 = vector.load %arg24[%c0_77, %c0_78] : memref<32x32xf32, #tpu.memory_space<vmem>>, vector<32x32xf32>
      tpu.vector_store %arg24[%c0_77, %c0_78], %247 {strides = array<i32>} : memref<32x32xf32, #tpu.memory_space<vmem>>, vector<32x32xf32>,
    } else {
    }
    %c0 = arith.constant 0 : index
    %c0_1 = arith.constant 0 : index
    %3 = vector.load %arg24[%c0, %c0_1] : memref<32x32xf32, #tpu.memory_space<vmem>>, vector<32x32xf32>
    %4 = arith.truncf %3 : vector<32x32xf32> to vector<32x32xbf16>
    %5 = arith.index_cast %arg1 : i32 to index
    %c0_2 = arith.constant 0 : index
    %c0_3 = arith.constant 0 : index
    %6 = vector.load %arg8[%5, %c0_2, %c0_3] : memref<2x32x96xbf16, #tpu.memory_space<vmem>>, vector<1x32x96xbf16>
    %7 = vector.shape_cast %6 : vector<1x32x96xbf16> to vector<32x96xbf16>
    %cst = arith.constant dense<0.000000e+00> : vector<32x96xf32>
    %8 = tpu.matmul %4, %7, %cst {dimension_numbers = #tpu.dot_dimension_numbers<[1], [0], [0], [1], [0, 0, 1, 1], [], []>} : vector<32x32xbf16>, vector<32x96xbf16>, vector<32x96xf32> -> vector<32x96xf32>
    %9 = arith.index_cast %arg1 : i32 to index
    %c0_4 = arith.constant 0 : index
    %c0_5 = arith.constant 0 : index
    %10 = vector.load %arg9[%9, %c0_4, %c0_5] : memref<2x1x96xf32, #tpu.memory_space<vmem>>, vector<1x1x96xf32>
    %11 = vector.shape_cast %10 : vector<1x1x96xf32> to vector<1x96xf32>
    %12 = vector.broadcast %11 : vector<1x96xf32> to vector<32x96xf32>
    %13 = arith.addf %8, %12 : vector<32x96xf32>
    %14 = vector.extract_strided_slice %13 {offsets = [0, 0], sizes = [32, 8], strides = [1, 1]} : vector<32x96xf32> to vector<32x8xf32>
    %15 = vector.shape_cast %14 : vector<32x8xf32> to vector<2x16x8xf32>
    %16 = arith.truncf %15 : vector<2x16x8xf32> to vector<2x16x8xbf16>
    %17 = vector.extract_strided_slice %13 {offsets = [0, 32], sizes = [32, 8], strides = [1, 1]} : vector<32x96xf32> to vector<32x8xf32>
    %18 = vector.shape_cast %17 : vector<32x8xf32> to vector<2x16x8xf32>
    %19 = arith.truncf %18 : vector<2x16x8xf32> to vector<2x16x8xbf16>
    %20 = vector.extract_strided_slice %13 {offsets = [0, 64], sizes = [32, 8], strides = [1, 1]} : vector<32x96xf32> to vector<32x8xf32>
    %21 = vector.shape_cast %20 : vector<32x8xf32> to vector<2x16x8xf32>
    %22 = arith.truncf %21 : vector<2x16x8xf32> to vector<2x16x8xbf16>
    "tpu.trace_start"() <{level = 10 : i32, message = "bnd,bmd->bnm"}> : () -> ()
    %cst_6 = arith.constant dense<0.000000e+00> : vector<2x16x16xf32>
    %23 = tpu.matmul %16, %19, %cst_6 {dimension_numbers = #tpu.dot_dimension_numbers<[2], [2], [1], [1], [0, 0, 0, 1, 1, 1], [0], [0]>} : vector<2x16x8xbf16>, vector<2x16x8xbf16>, vector<2x16x16xf32> -> vector<2x16x16xf32>
    "tpu.trace_stop"() : () -> ()
    %cst_7 = arith.constant 0.353553385 : f32
    %24 = vector.broadcast %cst_7 : f32 to vector<2x16x16xf32>
    %25 = arith.mulf %23, %24 : vector<2x16x16xf32>
    %cst_8 = arith.constant dense<0xFF800000> : vector<2x16xf32>
    %26 = vector.multi_reduction <maximumf>, %25, %cst_8 [2] : vector<2x16x16xf32> to vector<2x16xf32>
    %27 = vector.shape_cast %26 : vector<2x16xf32> to vector<2x16x1xf32>
    %28 = vector.broadcast %27 : vector<2x16x1xf32> to vector<2x16x16xf32>
    %29 = arith.subf %25, %28 : vector<2x16x16xf32>
    %30 = math.exp %29 : vector<2x16x16xf32>
    %cst_9 = arith.constant dense<0.000000e+00> : vector<2x16xf32>
    %31 = vector.multi_reduction <add>, %30, %cst_9 [2] : vector<2x16x16xf32> to vector<2x16xf32>
    %32 = vector.shape_cast %31 : vector<2x16xf32> to vector<2x16x1xf32>
    %33 = vector.broadcast %32 : vector<2x16x1xf32> to vector<2x16x16xf32>
    %34 = arith.divf %30, %33 : vector<2x16x16xf32>
    %35 = arith.truncf %34 : vector<2x16x16xf32> to vector<2x16x16xbf16>
    "tpu.trace_start"() <{level = 10 : i32, message = "bnm,bmd->bnd"}> : () -> ()
    %cst_10 = arith.constant dense<0.000000e+00> : vector<2x16x8xf32>
    %36 = tpu.matmul %35, %22, %cst_10 {dimension_numbers = #tpu.dot_dimension_numbers<[2], [1], [1], [2], [0, 0, 0, 1, 1, 2], [0], [0]>} : vector<2x16x16xbf16>, vector<2x16x8xbf16>, vector<2x16x8xf32> -> vector<2x16x8xf32>
    "tpu.trace_stop"() : () -> ()
    %37 = vector.shape_cast %36 : vector<2x16x8xf32> to vector<32x8xf32>
    %38 = vector.extract_strided_slice %13 {offsets = [0, 8], sizes = [32, 8], strides = [1, 1]} : vector<32x96xf32> to vector<32x8xf32>
    %39 = vector.shape_cast %38 : vector<32x8xf32> to vector<2x16x8xf32>
    %40 = arith.truncf %39 : vector<2x16x8xf32> to vector<2x16x8xbf16>
    %41 = vector.extract_strided_slice %13 {offsets = [0, 40], sizes = [32, 8], strides = [1, 1]} : vector<32x96xf32> to vector<32x8xf32>
    %42 = vector.shape_cast %41 : vector<32x8xf32> to vector<2x16x8xf32>
    %43 = arith.truncf %42 : vector<2x16x8xf32> to vector<2x16x8xbf16>
    %44 = vector.extract_strided_slice %13 {offsets = [0, 72], sizes = [32, 8], strides = [1, 1]} : vector<32x96xf32> to vector<32x8xf32>
    %45 = vector.shape_cast %44 : vector<32x8xf32> to vector<2x16x8xf32>
    %46 = arith.truncf %45 : vector<2x16x8xf32> to vector<2x16x8xbf16>
    "tpu.trace_start"() <{level = 10 : i32, message = "bnd,bmd->bnm"}> : () -> ()
    %cst_11 = arith.constant dense<0.000000e+00> : vector<2x16x16xf32>
    %47 = tpu.matmul %40, %43, %cst_11 {dimension_numbers = #tpu.dot_dimension_numbers<[2], [2], [1], [1], [0, 0, 0, 1, 1, 1], [0], [0]>} : vector<2x16x8xbf16>, vector<2x16x8xbf16>, vector<2x16x16xf32> -> vector<2x16x16xf32>
    "tpu.trace_stop"() : () -> ()
    %cst_12 = arith.constant 0.353553385 : f32
    %48 = vector.broadcast %cst_12 : f32 to vector<2x16x16xf32>
    %49 = arith.mulf %47, %48 : vector<2x16x16xf32>
    %cst_13 = arith.constant dense<0xFF800000> : vector<2x16xf32>
    %50 = vector.multi_reduction <maximumf>, %49, %cst_13 [2] : vector<2x16x16xf32> to vector<2x16xf32>
    %51 = vector.shape_cast %50 : vector<2x16xf32> to vector<2x16x1xf32>
    %52 = vector.broadcast %51 : vector<2x16x1xf32> to vector<2x16x16xf32>
    %53 = arith.subf %49, %52 : vector<2x16x16xf32>
    %54 = math.exp %53 : vector<2x16x16xf32>
    %cst_14 = arith.constant dense<0.000000e+00> : vector<2x16xf32>
    %55 = vector.multi_reduction <add>, %54, %cst_14 [2] : vector<2x16x16xf32> to vector<2x16xf32>
    %56 = vector.shape_cast %55 : vector<2x16xf32> to vector<2x16x1xf32>
    %57 = vector.broadcast %56 : vector<2x16x1xf32> to vector<2x16x16xf32>
    %58 = arith.divf %54, %57 : vector<2x16x16xf32>
    %59 = arith.truncf %58 : vector<2x16x16xf32> to vector<2x16x16xbf16>
    "tpu.trace_start"() <{level = 10 : i32, message = "bnm,bmd->bnd"}> : () -> ()
    %cst_15 = arith.constant dense<0.000000e+00> : vector<2x16x8xf32>
    %60 = tpu.matmul %59, %46, %cst_15 {dimension_numbers = #tpu.dot_dimension_numbers<[2], [1], [1], [2], [0, 0, 0, 1, 1, 2], [0], [0]>} : vector<2x16x16xbf16>, vector<2x16x8xbf16>, vector<2x16x8xf32> -> vector<2x16x8xf32>
    "tpu.trace_stop"() : () -> ()
    %61 = vector.shape_cast %60 : vector<2x16x8xf32> to vector<32x8xf32>
    %62 = vector.extract_strided_slice %13 {offsets = [0, 16], sizes = [32, 8], strides = [1, 1]} : vector<32x96xf32> to vector<32x8xf32>
    %63 = vector.shape_cast %62 : vector<32x8xf32> to vector<2x16x8xf32>
    %64 = arith.truncf %63 : vector<2x16x8xf32> to vector<2x16x8xbf16>
    %65 = vector.extract_strided_slice %13 {offsets = [0, 48], sizes = [32, 8], strides = [1, 1]} : vector<32x96xf32> to vector<32x8xf32>
    %66 = vector.shape_cast %65 : vector<32x8xf32> to vector<2x16x8xf32>
    %67 = arith.truncf %66 : vector<2x16x8xf32> to vector<2x16x8xbf16>
    %68 = vector.extract_strided_slice %13 {offsets = [0, 80], sizes = [32, 8], strides = [1, 1]} : vector<32x96xf32> to vector<32x8xf32>
    %69 = vector.shape_cast %68 : vector<32x8xf32> to vector<2x16x8xf32>
    %70 = arith.truncf %69 : vector<2x16x8xf32> to vector<2x16x8xbf16>
    "tpu.trace_start"() <{level = 10 : i32, message = "bnd,bmd->bnm"}> : () -> ()
    %cst_16 = arith.constant dense<0.000000e+00> : vector<2x16x16xf32>
    %71 = tpu.matmul %64, %67, %cst_16 {dimension_numbers = #tpu.dot_dimension_numbers<[2], [2], [1], [1], [0, 0, 0, 1, 1, 1], [0], [0]>} : vector<2x16x8xbf16>, vector<2x16x8xbf16>, vector<2x16x16xf32> -> vector<2x16x16xf32>
    "tpu.trace_stop"() : () -> ()
    %cst_17 = arith.constant 0.353553385 : f32
    %72 = vector.broadcast %cst_17 : f32 to vector<2x16x16xf32>
    %73 = arith.mulf %71, %72 : vector<2x16x16xf32>
    %cst_18 = arith.constant dense<0xFF800000> : vector<2x16xf32>
    %74 = vector.multi_reduction <maximumf>, %73, %cst_18 [2] : vector<2x16x16xf32> to vector<2x16xf32>
    %75 = vector.shape_cast %74 : vector<2x16xf32> to vector<2x16x1xf32>
    %76 = vector.broadcast %75 : vector<2x16x1xf32> to vector<2x16x16xf32>
    %77 = arith.subf %73, %76 : vector<2x16x16xf32>
    %78 = math.exp %77 : vector<2x16x16xf32>
    %cst_19 = arith.constant dense<0.000000e+00> : vector<2x16xf32>
    %79 = vector.multi_reduction <add>, %78, %cst_19 [2] : vector<2x16x16xf32> to vector<2x16xf32>
    %80 = vector.shape_cast %79 : vector<2x16xf32> to vector<2x16x1xf32>
    %81 = vector.broadcast %80 : vector<2x16x1xf32> to vector<2x16x16xf32>
    %82 = arith.divf %78, %81 : vector<2x16x16xf32>
    %83 = arith.truncf %82 : vector<2x16x16xf32> to vector<2x16x16xbf16>
    "tpu.trace_start"() <{level = 10 : i32, message = "bnm,bmd->bnd"}> : () -> ()
    %cst_20 = arith.constant dense<0.000000e+00> : vector<2x16x8xf32>
    %84 = tpu.matmul %83, %70, %cst_20 {dimension_numbers = #tpu.dot_dimension_numbers<[2], [1], [1], [2], [0, 0, 0, 1, 1, 2], [0], [0]>} : vector<2x16x16xbf16>, vector<2x16x8xbf16>, vector<2x16x8xf32> -> vector<2x16x8xf32>
    "tpu.trace_stop"() : () -> ()
    %85 = vector.shape_cast %84 : vector<2x16x8xf32> to vector<32x8xf32>
    %86 = vector.extract_strided_slice %13 {offsets = [0, 24], sizes = [32, 8], strides = [1, 1]} : vector<32x96xf32> to vector<32x8xf32>
    %87 = vector.shape_cast %86 : vector<32x8xf32> to vector<2x16x8xf32>
    %88 = arith.truncf %87 : vector<2x16x8xf32> to vector<2x16x8xbf16>
    %89 = vector.extract_strided_slice %13 {offsets = [0, 56], sizes = [32, 8], strides = [1, 1]} : vector<32x96xf32> to vector<32x8xf32>
    %90 = vector.shape_cast %89 : vector<32x8xf32> to vector<2x16x8xf32>
    %91 = arith.truncf %90 : vector<2x16x8xf32> to vector<2x16x8xbf16>
    %92 = vector.extract_strided_slice %13 {offsets = [0, 88], sizes = [32, 8], strides = [1, 1]} : vector<32x96xf32> to vector<32x8xf32>
    %93 = vector.shape_cast %92 : vector<32x8xf32> to vector<2x16x8xf32>
    %94 = arith.truncf %93 : vector<2x16x8xf32> to vector<2x16x8xbf16>
    "tpu.trace_start"() <{level = 10 : i32, message = "bnd,bmd->bnm"}> : () -> ()
    %cst_21 = arith.constant dense<0.000000e+00> : vector<2x16x16xf32>
    %95 = tpu.matmul %88, %91, %cst_21 {dimension_numbers = #tpu.dot_dimension_numbers<[2], [2], [1], [1], [0, 0, 0, 1, 1, 1], [0], [0]>} : vector<2x16x8xbf16>, vector<2x16x8xbf16>, vector<2x16x16xf32> -> vector<2x16x16xf32>
    "tpu.trace_stop"() : () -> ()
    %cst_22 = arith.constant 0.353553385 : f32
    %96 = vector.broadcast %cst_22 : f32 to vector<2x16x16xf32>
    %97 = arith.mulf %95, %96 : vector<2x16x16xf32>
    %cst_23 = arith.constant dense<0xFF800000> : vector<2x16xf32>
    %98 = vector.multi_reduction <maximumf>, %97, %cst_23 [2] : vector<2x16x16xf32> to vector<2x16xf32>
    %99 = vector.shape_cast %98 : vector<2x16xf32> to vector<2x16x1xf32>
    %100 = vector.broadcast %99 : vector<2x16x1xf32> to vector<2x16x16xf32>
    %101 = arith.subf %97, %100 : vector<2x16x16xf32>
    %102 = math.exp %101 : vector<2x16x16xf32>
    %cst_24 = arith.constant dense<0.000000e+00> : vector<2x16xf32>
    %103 = vector.multi_reduction <add>, %102, %cst_24 [2] : vector<2x16x16xf32> to vector<2x16xf32>
    %104 = vector.shape_cast %103 : vector<2x16xf32> to vector<2x16x1xf32>
    %105 = vector.broadcast %104 : vector<2x16x1xf32> to vector<2x16x16xf32>
    %106 = arith.divf %102, %105 : vector<2x16x16xf32>
    %107 = arith.truncf %106 : vector<2x16x16xf32> to vector<2x16x16xbf16>
    "tpu.trace_start"() <{level = 10 : i32, message = "bnm,bmd->bnd"}> : () -> ()
    %cst_25 = arith.constant dense<0.000000e+00> : vector<2x16x8xf32>
    %108 = tpu.matmul %107, %94, %cst_25 {dimension_numbers = #tpu.dot_dimension_numbers<[2], [1], [1], [2], [0, 0, 0, 1, 1, 2], [0], [0]>} : vector<2x16x16xbf16>, vector<2x16x8xbf16>, vector<2x16x8xf32> -> vector<2x16x8xf32>
    "tpu.trace_stop"() : () -> ()
    %109 = vector.shape_cast %108 : vector<2x16x8xf32> to vector<32x8xf32>
    %110 = tpu.concatenate %37, %61, %85, %109 in 1 : vector<32x8xf32>, vector<32x8xf32>, vector<32x8xf32>, vector<32x8xf32> -> vector<32x32xf32>
    %111 = arith.truncf %110 : vector<32x32xf32> to vector<32x32xbf16>
    %112 = arith.index_cast %arg1 : i32 to index
    %c0_26 = arith.constant 0 : index
    %c0_27 = arith.constant 0 : index
    %113 = vector.load %arg10[%112, %c0_26, %c0_27] : memref<2x32x32xbf16, #tpu.memory_space<vmem>>, vector<1x32x32xbf16>
    %114 = vector.shape_cast %113 : vector<1x32x32xbf16> to vector<32x32xbf16>
    %cst_28 = arith.constant dense<0.000000e+00> : vector<32x32xf32>
    %115 = tpu.matmul %111, %114, %cst_28 {dimension_numbers = #tpu.dot_dimension_numbers<[1], [0], [0], [1], [0, 0, 1, 1], [], []>} : vector<32x32xbf16>, vector<32x32xbf16>, vector<32x32xf32> -> vector<32x32xf32>
    %116 = arith.index_cast %arg1 : i32 to index
    %c0_29 = arith.constant 0 : index
    %c0_30 = arith.constant 0 : index
    %117 = vector.load %arg11[%116, %c0_29, %c0_30] : memref<2x1x32xf32, #tpu.memory_space<vmem>>, vector<1x1x32xf32>
    %118 = vector.shape_cast %117 : vector<1x1x32xf32> to vector<1x32xf32>
    %119 = vector.broadcast %118 : vector<1x32xf32> to vector<32x32xf32>
    %120 = arith.addf %115, %119 : vector<32x32xf32>
    %121 = arith.addf %3, %120 : vector<32x32xf32>
    %122 = arith.index_cast %arg1 : i32 to index
    %c0_31 = arith.constant 0 : index
    %c0_32 = arith.constant 0 : index
    %123 = vector.load %arg12[%122, %c0_31, %c0_32] : memref<2x1x32xf32, #tpu.memory_space<vmem>>, vector<1x1x32xf32>
    %124 = vector.shape_cast %123 : vector<1x1x32xf32> to vector<1x32xf32>
    %125 = arith.index_cast %arg1 : i32 to index
    %c0_33 = arith.constant 0 : index
    %c0_34 = arith.constant 0 : index
    %126 = vector.load %arg13[%125, %c0_33, %c0_34] : memref<2x1x32xf32, #tpu.memory_space<vmem>>, vector<1x1x32xf32>
    %127 = vector.shape_cast %126 : vector<1x1x32xf32> to vector<1x32xf32>
    %cst_35 = arith.constant dense<0.000000e+00> : vector<32xf32>
    %128 = vector.multi_reduction <add>, %121, %cst_35 [1] : vector<32x32xf32> to vector<32xf32>
    %129 = vector.shape_cast %128 : vector<32xf32> to vector<32x1xf32>
    %cst_36 = arith.constant 3.200000e+01 : f32
    %130 = vector.broadcast %cst_36 : f32 to vector<32x1xf32>
    %131 = arith.divf %129, %130 : vector<32x1xf32>
    %132 = vector.broadcast %131 : vector<32x1xf32> to vector<32x32xf32>
    %133 = arith.subf %121, %132 : vector<32x32xf32>
    %134 = arith.mulf %133, %133 : vector<32x32xf32>
    %cst_37 = arith.constant dense<0.000000e+00> : vector<32xf32>
    %135 = vector.multi_reduction <add>, %134, %cst_37 [1] : vector<32x32xf32> to vector<32xf32>
    %136 = vector.shape_cast %135 : vector<32xf32> to vector<32x1xf32>
    %cst_38 = arith.constant 3.200000e+01 : f32
    %137 = vector.broadcast %cst_38 : f32 to vector<32x1xf32>
    %138 = arith.divf %136, %137 : vector<32x1xf32>
    %139 = vector.broadcast %131 : vector<32x1xf32> to vector<32x32xf32>
    %140 = arith.subf %121, %139 : vector<32x32xf32>
    %cst_39 = arith.constant 9.99999974E-6 : f32
    %141 = vector.broadcast %cst_39 : f32 to vector<32x1xf32>
    %142 = arith.addf %138, %141 : vector<32x1xf32>
    %143 = math.rsqrt %142 : vector<32x1xf32>
    %144 = vector.broadcast %143 : vector<32x1xf32> to vector<32x32xf32>
    %145 = arith.mulf %140, %144 : vector<32x32xf32>
    %146 = vector.broadcast %124 : vector<1x32xf32> to vector<32x32xf32>
    %147 = arith.mulf %145, %146 : vector<32x32xf32>
    %148 = vector.broadcast %127 : vector<1x32xf32> to vector<32x32xf32>
    %149 = arith.addf %147, %148 : vector<32x32xf32>
    %150 = arith.truncf %149 : vector<32x32xf32> to vector<32x32xbf16>
    %151 = arith.index_cast %arg1 : i32 to index
    %c0_40 = arith.constant 0 : index
    %c0_41 = arith.constant 0 : index
    %152 = vector.load %arg14[%151, %c0_40, %c0_41] : memref<2x32x64xbf16, #tpu.memory_space<vmem>>, vector<1x32x64xbf16>
    %153 = vector.shape_cast %152 : vector<1x32x64xbf16> to vector<32x64xbf16>
    %cst_42 = arith.constant dense<0.000000e+00> : vector<32x64xf32>
    %154 = tpu.matmul %150, %153, %cst_42 {dimension_numbers = #tpu.dot_dimension_numbers<[1], [0], [0], [1], [0, 0, 1, 1], [], []>} : vector<32x32xbf16>, vector<32x64xbf16>, vector<32x64xf32> -> vector<32x64xf32>
    %155 = arith.index_cast %arg1 : i32 to index
    %c0_43 = arith.constant 0 : index
    %c0_44 = arith.constant 0 : index
    %156 = vector.load %arg15[%155, %c0_43, %c0_44] : memref<2x1x64xf32, #tpu.memory_space<vmem>>, vector<1x1x64xf32>
    %157 = vector.shape_cast %156 : vector<1x1x64xf32> to vector<1x64xf32>
    %158 = vector.broadcast %157 : vector<1x64xf32> to vector<32x64xf32>
    %159 = arith.addf %154, %158 : vector<32x64xf32>
    %cst_45 = arith.constant 0.000000e+00 : f32
    %160 = vector.broadcast %cst_45 : f32 to vector<32x64xf32>
    %161 = arith.maximumf %159, %160 : vector<32x64xf32>
    %162 = arith.truncf %161 : vector<32x64xf32> to vector<32x64xbf16>
    %163 = arith.index_cast %arg1 : i32 to index
    %c0_46 = arith.constant 0 : index
    %c0_47 = arith.constant 0 : index
    %164 = vector.load %arg16[%163, %c0_46, %c0_47] : memref<2x64x32xbf16, #tpu.memory_space<vmem>>, vector<1x64x32xbf16>
    %165 = vector.shape_cast %164 : vector<1x64x32xbf16> to vector<64x32xbf16>
    %cst_48 = arith.constant dense<0.000000e+00> : vector<32x32xf32>
    %166 = tpu.matmul %162, %165, %cst_48 {dimension_numbers = #tpu.dot_dimension_numbers<[1], [0], [0], [1], [0, 0, 1, 1], [], []>} : vector<32x64xbf16>, vector<64x32xbf16>, vector<32x32xf32> -> vector<32x32xf32>
    %167 = arith.index_cast %arg1 : i32 to index
    %c0_49 = arith.constant 0 : index
    %c0_50 = arith.constant 0 : index
    %168 = vector.load %arg17[%167, %c0_49, %c0_50] : memref<2x1x32xf32, #tpu.memory_space<vmem>>, vector<1x1x32xf32>
    %169 = vector.shape_cast %168 : vector<1x1x32xf32> to vector<1x32xf32>
    %170 = vector.broadcast %169 : vector<1x32xf32> to vector<32x32xf32>
    %171 = arith.addf %166, %170 : vector<32x32xf32>
    %172 = arith.addf %149, %171 : vector<32x32xf32>
    %173 = arith.index_cast %arg1 : i32 to index
    %c0_51 = arith.constant 0 : index
    %c0_52 = arith.constant 0 : index
    %174 = vector.load %arg18[%173, %c0_51, %c0_52] : memref<2x1x32xf32, #tpu.memory_space<vmem>>, vector<1x1x32xf32>
    %175 = vector.shape_cast %174 : vector<1x1x32xf32> to vector<1x32xf32>
    %176 = arith.index_cast %arg1 : i32 to index
    %c0_53 = arith.constant 0 : index
    %c0_54 = arith.constant 0 : index
    %177 = vector.load %arg19[%176, %c0_53, %c0_54] : memref<2x1x32xf32, #tpu.memory_space<vmem>>, vector<1x1x32xf32>
    %178 = vector.shape_cast %177 : vector<1x1x32xf32> to vector<1x32xf32>
    %cst_55 = arith.constant dense<0.000000e+00> : vector<32xf32>
    %179 = vector.multi_reduction <add>, %172, %cst_55 [1] : vector<32x32xf32> to vector<32xf32>
    %180 = vector.shape_cast %179 : vector<32xf32> to vector<32x1xf32>
    %cst_56 = arith.constant 3.200000e+01 : f32
    %181 = vector.broadcast %cst_56 : f32 to vector<32x1xf32>
    %182 = arith.divf %180, %181 : vector<32x1xf32>
    %183 = vector.broadcast %182 : vector<32x1xf32> to vector<32x32xf32>
    %184 = arith.subf %172, %183 : vector<32x32xf32>
    %185 = arith.mulf %184, %184 : vector<32x32xf32>
    %cst_57 = arith.constant dense<0.000000e+00> : vector<32xf32>
    %186 = vector.multi_reduction <add>, %185, %cst_57 [1] : vector<32x32xf32> to vector<32xf32>
    %187 = vector.shape_cast %186 : vector<32xf32> to vector<32x1xf32>
    %cst_58 = arith.constant 3.200000e+01 : f32
    %188 = vector.broadcast %cst_58 : f32 to vector<32x1xf32>
    %189 = arith.divf %187, %188 : vector<32x1xf32>
    %190 = vector.broadcast %182 : vector<32x1xf32> to vector<32x32xf32>
    %191 = arith.subf %172, %190 : vector<32x32xf32>
    %cst_59 = arith.constant 9.99999974E-6 : f32
    %192 = vector.broadcast %cst_59 : f32 to vector<32x1xf32>
    %193 = arith.addf %189, %192 : vector<32x1xf32>
    %194 = math.rsqrt %193 : vector<32x1xf32>
    %195 = vector.broadcast %194 : vector<32x1xf32> to vector<32x32xf32>
    %196 = arith.mulf %191, %195 : vector<32x32xf32>
    %197 = vector.broadcast %175 : vector<1x32xf32> to vector<32x32xf32>
    %198 = arith.mulf %196, %197 : vector<32x32xf32>
    %199 = vector.broadcast %178 : vector<1x32xf32> to vector<32x32xf32>
    %200 = arith.addf %198, %199 : vector<32x32xf32>
    %c0_60 = arith.constant 0 : index
    %c0_61 = arith.constant 0 : index
    %201 = vector.load %arg24[%c0_60, %c0_61] : memref<32x32xf32, #tpu.memory_space<vmem>>, vector<32x32xf32>
    tpu.vector_store %arg24[%c0_60, %c0_61], %200 {strides = array<i32>} : memref<32x32xf32, #tpu.memory_space<vmem>>, vector<32x32xf32>,
    %c1_i32 = arith.constant 1 : i32
    %202 = arith.cmpi eq, %arg1, %c1_i32 : i32
    %203 = arith.extui %202 : i1 to i32
    %c0_i32_62 = arith.constant 0 : i32
    %204 = arith.cmpi ne, %203, %c0_i32_62 : i32
    scf.if %204 {
      %205 = vector.shape_cast %200 : vector<32x32xf32> to vector<2x16x32xf32>
      %206 = vector.extract_strided_slice %205 {offsets = [0, 8, 0], sizes = [2, 8, 32], strides = [1, 1, 1]} : vector<2x16x32xf32> to vector<2x8x32xf32>
      %cst_63 = arith.constant dense<0.000000e+00> : vector<2x32xf32>
      %207 = vector.multi_reduction <add>, %206, %cst_63 [1] : vector<2x8x32xf32> to vector<2x32xf32>
      %cst_64 = arith.constant 8.000000e+00 : f32
      %208 = vector.broadcast %cst_64 : f32 to vector<2x32xf32>
      %209 = arith.divf %207, %208 : vector<2x32xf32>
      %c0_65 = arith.constant 0 : index
      %c0_66 = arith.constant 0 : index
      %c0_67 = arith.constant 0 : index
      %210 = vector.load %arg3[%c0_65, %c0_66, %c0_67] : memref<2x1x4xf32, #tpu.memory_space<vmem>>, vector<2x1x4xf32>
      %211 = vector.shape_cast %210 : vector<2x1x4xf32> to vector<2x4xf32>
      %212 = tpu.concatenate %209, %211 in 1 : vector<2x32xf32>, vector<2x4xf32> -> vector<2x36xf32>
      %213 = arith.truncf %212 : vector<2x36xf32> to vector<2x36xbf16>
      %c0_68 = arith.constant 0 : index
      %c0_69 = arith.constant 0 : index
      %214 = vector.load %arg20[%c0_68, %c0_69] : memref<36x32xbf16, #tpu.memory_space<vmem>>, vector<36x32xbf16>
      %cst_70 = arith.constant dense<0.000000e+00> : vector<2x32xf32>
      %215 = tpu.matmul %213, %214, %cst_70 {dimension_numbers = #tpu.dot_dimension_numbers<[1], [0], [0], [1], [0, 0, 1, 1], [], []>} : vector<2x36xbf16>, vector<36x32xbf16>, vector<2x32xf32> -> vector<2x32xf32>
      %216 = vector.shape_cast %206 : vector<2x8x32xf32> to vector<16x32xf32>
      %217 = arith.truncf %216 : vector<16x32xf32> to vector<16x32xbf16>
      %c0_71 = arith.constant 0 : index
      %c0_72 = arith.constant 0 : index
      %218 = vector.load %arg21[%c0_71, %c0_72] : memref<32x32xbf16, #tpu.memory_space<vmem>>, vector<32x32xbf16>
      %cst_73 = arith.constant dense<0.000000e+00> : vector<16x32xf32>
      %219 = tpu.matmul %217, %218, %cst_73 {dimension_numbers = #tpu.dot_dimension_numbers<[1], [0], [0], [1], [0, 0, 1, 1], [], []>} : vector<16x32xbf16>, vector<32x32xbf16>, vector<16x32xf32> -> vector<16x32xf32>
      %220 = vector.shape_cast %219 : vector<16x32xf32> to vector<2x8x32xf32>
      %221 = vector.shape_cast %215 : vector<2x32xf32> to vector<2x1x32xf32>
      %222 = arith.truncf %221 : vector<2x1x32xf32> to vector<2x1x32xbf16>
      %223 = arith.truncf %220 : vector<2x8x32xf32> to vector<2x8x32xbf16>
      "tpu.trace_start"() <{level = 10 : i32, message = "bqd,bnd->bqn"}> : () -> ()
      %cst_74 = arith.constant dense<0.000000e+00> : vector<2x1x8xf32>
      %224 = tpu.matmul %222, %223, %cst_74 {dimension_numbers = #tpu.dot_dimension_numbers<[2], [2], [1], [1], [0, 0, 0, 1, 1, 1], [0], [0]>} : vector<2x1x32xbf16>, vector<2x8x32xbf16>, vector<2x1x8xf32> -> vector<2x1x8xf32>
      "tpu.trace_stop"() : () -> ()
      %cst_75 = arith.constant 0.176776692 : f32
      %225 = vector.broadcast %cst_75 : f32 to vector<2x1x8xf32>
      %226 = arith.mulf %224, %225 : vector<2x1x8xf32>
      %227 = math.tanh %226 : vector<2x1x8xf32>
      %cst_76 = arith.constant 6.000000e+00 : f32
      %228 = vector.broadcast %cst_76 : f32 to vector<2x1x8xf32>
      %229 = arith.mulf %228, %227 : vector<2x1x8xf32>
      %cst_77 = arith.constant -1.000000e+30 : f32
      %230 = vector.broadcast %cst_77 : f32 to vector<2x1x120xf32>
      %231 = tpu.concatenate %229, %230 in 2 : vector<2x1x8xf32>, vector<2x1x120xf32> -> vector<2x1x128xf32>
      %cst_78 = arith.constant dense<0xFF800000> : vector<2x1xf32>
      %232 = vector.multi_reduction <maximumf>, %231, %cst_78 [2] : vector<2x1x128xf32> to vector<2x1xf32>
      %233 = vector.shape_cast %232 : vector<2x1xf32> to vector<2x1x1xf32>
      %234 = vector.broadcast %233 : vector<2x1x1xf32> to vector<2x1x128xf32>
      %235 = arith.subf %231, %234 : vector<2x1x128xf32>
      %236 = math.exp %235 : vector<2x1x128xf32>
      %cst_79 = arith.constant dense<0.000000e+00> : vector<2x1xf32>
      %237 = vector.multi_reduction <add>, %236, %cst_79 [2] : vector<2x1x128xf32> to vector<2x1xf32>
      %238 = vector.shape_cast %237 : vector<2x1xf32> to vector<2x1x1xf32>
      %239 = math.log %238 : vector<2x1x1xf32>
      %240 = vector.broadcast %239 : vector<2x1x1xf32> to vector<2x1x128xf32>
      %241 = arith.subf %235, %240 : vector<2x1x128xf32>
      %c0_80 = arith.constant 0 : index
      %c0_81 = arith.constant 0 : index
      %c0_82 = arith.constant 0 : index
      %242 = vector.load %arg23[%c0_80, %c0_81, %c0_82] : memref<2x1x128xf32, #tpu.memory_space<vmem>>, vector<2x1x128xf32>
      tpu.vector_store %arg23[%c0_80, %c0_81, %c0_82], %241 {strides = array<i32>} : memref<2x1x128xf32, #tpu.memory_space<vmem>>, vector<2x1x128xf32>,
    } else {
    }
    return
  }
  func.func @transform_0(%arg0: i32, %arg1: i32) -> (i32, i32, i32) {
    %c0_i32 = arith.constant 0 : i32
    %c0_i32_0 = arith.constant 0 : i32
    %c0_i32_1 = arith.constant 0 : i32
    return %arg0, %c0_i32, %c0_i32_0 : i32, i32, i32
  }
  func.func @transform_1(%arg0: i32, %arg1: i32) -> (i32, i32, i32) {
    %c0_i32 = arith.constant 0 : i32
    %c0_i32_0 = arith.constant 0 : i32
    %c0_i32_1 = arith.constant 0 : i32
    return %arg0, %c0_i32, %c0_i32_0 : i32, i32, i32
  }
  func.func @transform_2(%arg0: i32, %arg1: i32) -> (i32, i32) {
    %c0_i32 = arith.constant 0 : i32
    %c0_i32_0 = arith.constant 0 : i32
    %c0_i32_1 = arith.constant 0 : i32
    return %c0_i32, %c0_i32_0 : i32, i32
  }
  func.func @transform_3(%arg0: i32, %arg1: i32) -> (i32, i32) {
    %c0_i32 = arith.constant 0 : i32
    %c0_i32_0 = arith.constant 0 : i32
    %c0_i32_1 = arith.constant 0 : i32
    return %c0_i32, %c0_i32_0 : i32, i32
  }
  func.func @transform_4(%arg0: i32, %arg1: i32) -> (i32, i32) {
    %c0_i32 = arith.constant 0 : i32
    %c0_i32_0 = arith.constant 0 : i32
    %c0_i32_1 = arith.constant 0 : i32
    return %c0_i32, %c0_i32_0 : i32, i32
  }
  func.func @transform_5(%arg0: i32, %arg1: i32) -> (i32, i32) {
    %c0_i32 = arith.constant 0 : i32
    %c0_i32_0 = arith.constant 0 : i32
    %c0_i32_1 = arith.constant 0 : i32
    return %c0_i32, %c0_i32_0 : i32, i32
  }
  func.func @transform_6(%arg0: i32, %arg1: i32) -> (i32, i32, i32) {
    %c0_i32 = arith.constant 0 : i32
    %c0_i32_0 = arith.constant 0 : i32
    %c0_i32_1 = arith.constant 0 : i32
    %c0_i32_2 = arith.constant 0 : i32
    return %c0_i32, %c0_i32_0, %c0_i32_1 : i32, i32, i32
  }
  func.func @transform_7(%arg0: i32, %arg1: i32) -> (i32, i32, i32) {
    %c0_i32 = arith.constant 0 : i32
    %c0_i32_0 = arith.constant 0 : i32
    %c0_i32_1 = arith.constant 0 : i32
    %c0_i32_2 = arith.constant 0 : i32
    return %c0_i32, %c0_i32_0, %c0_i32_1 : i32, i32, i32
  }
  func.func @transform_8(%arg0: i32, %arg1: i32) -> (i32, i32, i32) {
    %c0_i32 = arith.constant 0 : i32
    %c0_i32_0 = arith.constant 0 : i32
    %c0_i32_1 = arith.constant 0 : i32
    %c0_i32_2 = arith.constant 0 : i32
    return %c0_i32, %c0_i32_0, %c0_i32_1 : i32, i32, i32
  }
  func.func @transform_9(%arg0: i32, %arg1: i32) -> (i32, i32, i32) {
    %c0_i32 = arith.constant 0 : i32
    %c0_i32_0 = arith.constant 0 : i32
    %c0_i32_1 = arith.constant 0 : i32
    %c0_i32_2 = arith.constant 0 : i32
    return %c0_i32, %c0_i32_0, %c0_i32_1 : i32, i32, i32
  }
  func.func @transform_10(%arg0: i32, %arg1: i32) -> (i32, i32, i32) {
    %c0_i32 = arith.constant 0 : i32
    %c0_i32_0 = arith.constant 0 : i32
    %c0_i32_1 = arith.constant 0 : i32
    %c0_i32_2 = arith.constant 0 : i32
    return %c0_i32, %c0_i32_0, %c0_i32_1 : i32, i32, i32
  }
  func.func @transform_11(%arg0: i32, %arg1: i32) -> (i32, i32, i32) {
    %c0_i32 = arith.constant 0 : i32
    %c0_i32_0 = arith.constant 0 : i32
    %c0_i32_1 = arith.constant 0 : i32
    %c0_i32_2 = arith.constant 0 : i32
    return %c0_i32, %c0_i32_0, %c0_i32_1 : i32, i32, i32
  }
  func.func @transform_12(%arg0: i32, %arg1: i32) -> (i32, i32, i32) {
    %c0_i32 = arith.constant 0 : i32
    %c0_i32_0 = arith.constant 0 : i32
    %c0_i32_1 = arith.constant 0 : i32
    %c0_i32_2 = arith.constant 0 : i32
    return %c0_i32, %c0_i32_0, %c0_i32_1 : i32, i32, i32
  }
  func.func @transform_13(%arg0: i32, %arg1: i32) -> (i32, i32, i32) {
    %c0_i32 = arith.constant 0 : i32
    %c0_i32_0 = arith.constant 0 : i32
    %c0_i32_1 = arith.constant 0 : i32
    %c0_i32_2 = arith.constant 0 : i32
    return %c0_i32, %c0_i32_0, %c0_i32_1 : i32, i32, i32
  }
  func.func @transform_14(%arg0: i32, %arg1: i32) -> (i32, i32, i32) {
    %c0_i32 = arith.constant 0 : i32
    %c0_i32_0 = arith.constant 0 : i32
    %c0_i32_1 = arith.constant 0 : i32
    %c0_i32_2 = arith.constant 0 : i32
    return %c0_i32, %c0_i32_0, %c0_i32_1 : i32, i32, i32
  }
  func.func @transform_15(%arg0: i32, %arg1: i32) -> (i32, i32, i32) {
    %c0_i32 = arith.constant 0 : i32
    %c0_i32_0 = arith.constant 0 : i32
    %c0_i32_1 = arith.constant 0 : i32
    %c0_i32_2 = arith.constant 0 : i32
    return %c0_i32, %c0_i32_0, %c0_i32_1 : i32, i32, i32
  }
  func.func @transform_16(%arg0: i32, %arg1: i32) -> (i32, i32, i32) {
    %c0_i32 = arith.constant 0 : i32
    %c0_i32_0 = arith.constant 0 : i32
    %c0_i32_1 = arith.constant 0 : i32
    %c0_i32_2 = arith.constant 0 : i32
    return %c0_i32, %c0_i32_0, %c0_i32_1 : i32, i32, i32
  }
  func.func @transform_17(%arg0: i32, %arg1: i32) -> (i32, i32, i32) {
    %c0_i32 = arith.constant 0 : i32
    %c0_i32_0 = arith.constant 0 : i32
    %c0_i32_1 = arith.constant 0 : i32
    %c0_i32_2 = arith.constant 0 : i32
    return %c0_i32, %c0_i32_0, %c0_i32_1 : i32, i32, i32
  }
  func.func @transform_18(%arg0: i32, %arg1: i32) -> (i32, i32) {
    %c0_i32 = arith.constant 0 : i32
    %c0_i32_0 = arith.constant 0 : i32
    %c0_i32_1 = arith.constant 0 : i32
    return %c0_i32, %c0_i32_0 : i32, i32
  }
  func.func @transform_19(%arg0: i32, %arg1: i32) -> (i32, i32) {
    %c0_i32 = arith.constant 0 : i32
    %c0_i32_0 = arith.constant 0 : i32
    %c0_i32_1 = arith.constant 0 : i32
    return %c0_i32, %c0_i32_0 : i32, i32
  }
  func.func @transform_20(%arg0: i32, %arg1: i32) -> (i32, i32, i32) {
    %c0_i32 = arith.constant 0 : i32
    %c0_i32_0 = arith.constant 0 : i32
    %c0_i32_1 = arith.constant 0 : i32
    return %arg0, %c0_i32, %c0_i32_0 : i32, i32, i32
  }
  func.func @transform_21(%arg0: i32, %arg1: i32) -> (i32, i32, i32) {
    %c0_i32 = arith.constant 0 : i32
    %c0_i32_0 = arith.constant 0 : i32
    %c0_i32_1 = arith.constant 0 : i32
    return %arg0, %c0_i32, %c0_i32_0 : i32, i32, i32
  }
}

</mosaic_0001>

<llo_original>
// kernel: tpu_custom_call.1
$region0: #{tpu_custom_call.1}
  #allocation0 [shape = 'u32[]', space=smem, size = 0x4, offset = 0x4, fixed_abs, tag = 'smem constant byte address 0x4 - core index']
  #allocation1 [shape = 'u32[144,128]{1,0:T(1,128)}', space=vmem, size = 0x12000, scoped, tag = 'internal scratch']
  #allocation2 [shape = 'f32[32,32]{1,0:T(8,128)}', space=vmem, size = 0x4000, scoped, tag = 'scratch operand']
  %s0 = inlined_call_operand.vmem [shape: f32[2,16,2], index: 0, kind: input, shape index: {}]
  %s1 = inlined_call_operand.vmem [shape: f32[2,1,4], index: 1, kind: input, shape index: {}]
  %s2 = inlined_call_operand.vmem [shape: f32[2,32], index: 2, kind: input, shape index: {}]
  %s3 = inlined_call_operand.vmem [shape: f32[1,32], index: 3, kind: input, shape index: {}]
  %s4 = inlined_call_operand.vmem [shape: f32[2,32], index: 4, kind: input, shape index: {}]
  %s5 = inlined_call_operand.vmem [shape: f32[1,32], index: 5, kind: input, shape index: {}]
  %s6 = inlined_call_operand.vmem [shape: bf16[2,32,96], index: 6, kind: input, shape index: {}]
  %s7 = inlined_call_operand.vmem [shape: f32[2,1,96], index: 7, kind: input, shape index: {}]
  %s8 = inlined_call_operand.vmem [shape: bf16[2,32,32], index: 8, kind: input, shape index: {}]
  %s9 = inlined_call_operand.vmem [shape: f32[2,1,32], index: 9, kind: input, shape index: {}]
  %s10 = inlined_call_operand.vmem [shape: f32[2,1,32], index: 10, kind: input, shape index: {}]
  %s11 = inlined_call_operand.vmem [shape: f32[2,1,32], index: 11, kind: input, shape index: {}]
  %s12 = inlined_call_operand.vmem [shape: bf16[2,32,64], index: 12, kind: input, shape index: {}]
  %s13 = inlined_call_operand.vmem [shape: f32[2,1,64], index: 13, kind: input, shape index: {}]
  %s14 = inlined_call_operand.vmem [shape: bf16[2,64,32], index: 14, kind: input, shape index: {}]
  %s15 = inlined_call_operand.vmem [shape: f32[2,1,32], index: 15, kind: input, shape index: {}]
  %s16 = inlined_call_operand.vmem [shape: f32[2,1,32], index: 16, kind: input, shape index: {}]
  %s17 = inlined_call_operand.vmem [shape: f32[2,1,32], index: 17, kind: input, shape index: {}]
  %s18 = inlined_call_operand.vmem [shape: bf16[36,32], index: 18, kind: input, shape index: {}]
  %s19 = inlined_call_operand.vmem [shape: bf16[32,32], index: 19, kind: input, shape index: {}]
  %s20 = inlined_call_operand.hbm [shape: f32[2,16,32], index: 20, kind: output, shape index: {0}]
  %s21 = inlined_call_operand.hbm [shape: f32[2,1,128], index: 21, kind: output, shape index: {1}]
  %22 = xla_tuple %s20, %s21
  %s23 = sld [smem:[#allocation0]]
  $region129: #{tpu_custom_call.1} parent=0
    _
  %s25 = ssub.s32 1, %s23
  %s26 = scalar_select 0, %s25, %s23
  $region1: #{tpu_custom_call.1} parent=0
    #allocation3 [shape = 'u8[16384]{0}', space=vmem, size = 0x4000, scoped, tag = 'output window, operand 0, single buffered']
    #allocation4 [shape = 's32[2]{0}', space=sflag, size = 0x8, scoped, tag = 'scoped memory for tpu_custom_call.1']
    #allocation5 [shape = 'u8[1024]{0}', space=vmem, size = 0x400, scoped, tag = 'output window, operand 1, single buffered']
    #allocation6 [shape = 's32[1]{0}', space=sflag, size = 0x4, scoped, tag = 'scoped memory for tpu_custom_call.1']
    %27 = vsyncpa [#allocation4], 0
    %28 = vsyncpa [#allocation6], 0
    loop: start=0, step=1, limit=4
    $region2: #{tpu_custom_call.1} parent=1 // loop_pre_header
      _
    $region3: #{tpu_custom_call.1} parent=1 // loop_header
      %s30 = sphi 0, %s34
      %p31 = scmp.ge.s32.totalorder %s30, 4
      %s37 = sphi 0, %s49
      %s38 = sphi 0, %s45
      %s39 = sphi 0, %s37
      %s40 = sphi 0, %s38
      %s41 = sphi 0, %s39
      %s42 = sphi 0, %s40
      %s52 = sphi 0, %s54
      %s55 = sphi 0, %s52
      %s56 = sphi 0, %s55
      %s72 = sphi 0, %s56
      %s78 = sphi 0, %s80
      %s81 = sphi 0, %s78
      %s82 = sphi 0, %s81
      %s98 = sphi 0, %s82
      %s102 = sphi 0, %s102
      %s104 = sphi 0, %s102
      %s105 = sphi 0, %s104
      %s119 = sphi 0, %s105
      %s123 = sphi 0, %s123
      %s125 = sphi 0, %s123
      %s126 = sphi 0, %s125
      %s140 = sphi 0, %s126
      %s144 = sphi 0, %s144
      %s146 = sphi 0, %s144
      %s147 = sphi 0, %s146
      %s161 = sphi 0, %s147
      %s165 = sphi 0, %s165
      %s167 = sphi 0, %s165
      %s168 = sphi 0, %s167
      %s182 = sphi 0, %s168
      %s186 = sphi 0, %s186
      %s188 = sphi 0, %s186
      %s189 = sphi 0, %s188
      %s203 = sphi 0, %s189
      %s207 = sphi 0, %s207
      %s209 = sphi 0, %s207
      %s210 = sphi 0, %s209
      %s224 = sphi 0, %s210
      %s228 = sphi 0, %s228
      %s230 = sphi 0, %s228
      %s231 = sphi 0, %s230
      %s245 = sphi 0, %s231
      %s249 = sphi 0, %s249
      %s251 = sphi 0, %s249
      %s252 = sphi 0, %s251
      %s266 = sphi 0, %s252
      %s270 = sphi 0, %s270
      %s272 = sphi 0, %s270
      %s273 = sphi 0, %s272
      %s287 = sphi 0, %s273
      %s291 = sphi 0, %s291
      %s293 = sphi 0, %s291
      %s294 = sphi 0, %s293
      %s308 = sphi 0, %s294
      %s312 = sphi 0, %s312
      %s314 = sphi 0, %s312
      %s315 = sphi 0, %s314
      %s329 = sphi 0, %s315
      %s333 = sphi 0, %s333
      %s335 = sphi 0, %s333
      %s336 = sphi 0, %s335
      %s350 = sphi 0, %s336
      %s354 = sphi 0, %s354
      %s356 = sphi 0, %s354
      %s357 = sphi 0, %s356
      %s371 = sphi 0, %s357
      %s375 = sphi 0, %s375
      %s377 = sphi 0, %s375
      %s378 = sphi 0, %s377
      %s392 = sphi 0, %s378
      %s396 = sphi 0, %s396
      %s398 = sphi 0, %s396
      %s399 = sphi 0, %s398
      %s413 = sphi 0, %s399
      %s417 = sphi 0, %s417
      %s419 = sphi 0, %s417
      %s420 = sphi 0, %s419
      %s434 = sphi 0, %s420
      %s438 = sphi 0, %s438
      %s440 = sphi 0, %s438
      %s441 = sphi 0, %s440
      %s455 = sphi 0, %s441
      %s459 = sphi 0, %s459
      %s461 = sphi 0, %s459
      %s462 = sphi 0, %s461
      %s476 = sphi 0, %s462
      %s482 = sphi 0, %s484
      %s485 = sphi 0, %s482
      %s486 = sphi 0, %s485
      %s502 = sphi 0, %s486
      %s508 = sphi 0, %s510
      %s511 = sphi 0, %s508
      %s512 = sphi 0, %s511
      %s528 = sphi 0, %s512
    $region4: #{tpu_custom_call.1} parent=1 // loop_header_branch
      %33 = sbr.rel (%p31) target = $region8
    $region5: #{tpu_custom_call.1} parent=1 // loop_body
      %s35 = ssub.s32 %s30, 1
      %s36 = ssub.s32 %s30, 2
      %s43 = sadd.s32 1, %s38
      %p44 = scmp.ge.s32.totalorder %s43, 2
      %s45 = scalar_select %p44, 0, %s43
      %s46 = sadd.s32 1, %s37
      %s47 = scalar_select %p44, %s46, %s37
      %p48 = scmp.ge.s32.totalorder %s47, 1
      %s49 = scalar_select %p48, 0, %s47
      %s50 = ssub.s32 %s37, %s49
      %p51 = scmp.eq.s32.totalorder %s50, 0
      %s53 = sadd.s32 %s52, 1
      %s54 = scalar_select %p51, %s52, %s53
      %p57 = pneg %p51
      %p58 = scmp.eq.s32.totalorder %s30, 1
      %p59 = por %p57, %p58
      %p60 = scmp.ne.s32.totalorder %s52, %s55
      %p61 = scmp.eq.s32.totalorder %s30, 0
      %p62 = por %p60, %p61
      %p63 = scmp.ne.s32.totalorder %s52, %s55
      %p64 = scmp.eq.s32.totalorder %s35, 1
      %p65 = por %p63, %p64
      %p66 = scmp.ne.s32.totalorder %s55, %s56
      %p67 = scmp.eq.s32.totalorder %s35, 0
      %p68 = por %p66, %p67
      %p69 = scmp.ne.s32.totalorder %s55, %s56
      %p70 = scmp.eq.s32.totalorder %s36, 1
      %p71 = por %p69, %p70
      %p73 = scmp.ne.s32.totalorder %s56, %s72
      %p74 = scmp.eq.s32.totalorder %s36, 0
      %p75 = por %p73, %p74
      %s76 = ssub.s32 %s37, %s49
      %p77 = scmp.eq.s32.totalorder %s76, 0
      %s79 = sadd.s32 %s78, 1
      %s80 = scalar_select %p77, %s78, %s79
      %p83 = pneg %p77
      %p84 = scmp.eq.s32.totalorder %s30, 1
      %p85 = por %p83, %p84
      %p86 = scmp.ne.s32.totalorder %s78, %s81
      %p87 = scmp.eq.s32.totalorder %s30, 0
      %p88 = por %p86, %p87
      %p89 = scmp.ne.s32.totalorder %s78, %s81
      %p90 = scmp.eq.s32.totalorder %s35, 1
      %p91 = por %p89, %p90
      %p92 = scmp.ne.s32.totalorder %s81, %s82
      %p93 = scmp.eq.s32.totalorder %s35, 0
      %p94 = por %p92, %p93
      %p95 = scmp.ne.s32.totalorder %s81, %s82
      %p96 = scmp.eq.s32.totalorder %s36, 1
      %p97 = por %p95, %p96
      %p99 = scmp.ne.s32.totalorder %s82, %s98
      %p100 = scmp.eq.s32.totalorder %s36, 0
      %p101 = por %p99, %p100
      %s103 = sadd.s32 %s102, 1
      %p106 = scmp.eq.s32.totalorder %s30, 1
      %p107 = scmp.ne.s32.totalorder %s102, %s104
      %p108 = scmp.eq.s32.totalorder %s30, 0
      %p109 = por %p107, %p108
      %p110 = scmp.ne.s32.totalorder %s102, %s104
      %p111 = scmp.eq.s32.totalorder %s35, 1
      %p112 = por %p110, %p111
      %p113 = scmp.ne.s32.totalorder %s104, %s105
      %p114 = scmp.eq.s32.totalorder %s35, 0
      %p115 = por %p113, %p114
      %p116 = scmp.ne.s32.totalorder %s104, %s105
      %p117 = scmp.eq.s32.totalorder %s36, 1
      %p118 = por %p116, %p117
      %p120 = scmp.ne.s32.totalorder %s105, %s119
      %p121 = scmp.eq.s32.totalorder %s36, 0
      %p122 = por %p120, %p121
      %s124 = sadd.s32 %s123, 1
      %p127 = scmp.eq.s32.totalorder %s30, 1
      %p128 = scmp.ne.s32.totalorder %s123, %s125
      %p129 = scmp.eq.s32.totalorder %s30, 0
      %p130 = por %p128, %p129
      %p131 = scmp.ne.s32.totalorder %s123, %s125
      %p132 = scmp.eq.s32.totalorder %s35, 1
      %p133 = por %p131, %p132
      %p134 = scmp.ne.s32.totalorder %s125, %s126
      %p135 = scmp.eq.s32.totalorder %s35, 0
      %p136 = por %p134, %p135
      %p137 = scmp.ne.s32.totalorder %s125, %s126
      %p138 = scmp.eq.s32.totalorder %s36, 1
      %p139 = por %p137, %p138
      %p141 = scmp.ne.s32.totalorder %s126, %s140
      %p142 = scmp.eq.s32.totalorder %s36, 0
      %p143 = por %p141, %p142
      %s145 = sadd.s32 %s144, 1
      %p148 = scmp.eq.s32.totalorder %s30, 1
      %p149 = scmp.ne.s32.totalorder %s144, %s146
      %p150 = scmp.eq.s32.totalorder %s30, 0
      %p151 = por %p149, %p150
      %p152 = scmp.ne.s32.totalorder %s144, %s146
      %p153 = scmp.eq.s32.totalorder %s35, 1
      %p154 = por %p152, %p153
      %p155 = scmp.ne.s32.totalorder %s146, %s147
      %p156 = scmp.eq.s32.totalorder %s35, 0
      %p157 = por %p155, %p156
      %p158 = scmp.ne.s32.totalorder %s146, %s147
      %p159 = scmp.eq.s32.totalorder %s36, 1
      %p160 = por %p158, %p159
      %p162 = scmp.ne.s32.totalorder %s147, %s161
      %p163 = scmp.eq.s32.totalorder %s36, 0
      %p164 = por %p162, %p163
      %s166 = sadd.s32 %s165, 1
      %p169 = scmp.eq.s32.totalorder %s30, 1
      %p170 = scmp.ne.s32.totalorder %s165, %s167
      %p171 = scmp.eq.s32.totalorder %s30, 0
      %p172 = por %p170, %p171
      %p173 = scmp.ne.s32.totalorder %s165, %s167
      %p174 = scmp.eq.s32.totalorder %s35, 1
      %p175 = por %p173, %p174
      %p176 = scmp.ne.s32.totalorder %s167, %s168
      %p177 = scmp.eq.s32.totalorder %s35, 0
      %p178 = por %p176, %p177
      %p179 = scmp.ne.s32.totalorder %s167, %s168
      %p180 = scmp.eq.s32.totalorder %s36, 1
      %p181 = por %p179, %p180
      %p183 = scmp.ne.s32.totalorder %s168, %s182
      %p184 = scmp.eq.s32.totalorder %s36, 0
      %p185 = por %p183, %p184
      %s187 = sadd.s32 %s186, 1
      %p190 = scmp.eq.s32.totalorder %s30, 1
      %p191 = scmp.ne.s32.totalorder %s186, %s188
      %p192 = scmp.eq.s32.totalorder %s30, 0
      %p193 = por %p191, %p192
      %p194 = scmp.ne.s32.totalorder %s186, %s188
      %p195 = scmp.eq.s32.totalorder %s35, 1
      %p196 = por %p194, %p195
      %p197 = scmp.ne.s32.totalorder %s188, %s189
      %p198 = scmp.eq.s32.totalorder %s35, 0
      %p199 = por %p197, %p198
      %p200 = scmp.ne.s32.totalorder %s188, %s189
      %p201 = scmp.eq.s32.totalorder %s36, 1
      %p202 = por %p200, %p201
      %p204 = scmp.ne.s32.totalorder %s189, %s203
      %p205 = scmp.eq.s32.totalorder %s36, 0
      %p206 = por %p204, %p205
      %s208 = sadd.s32 %s207, 1
      %p211 = scmp.eq.s32.totalorder %s30, 1
      %p212 = scmp.ne.s32.totalorder %s207, %s209
      %p213 = scmp.eq.s32.totalorder %s30, 0
      %p214 = por %p212, %p213
      %p215 = scmp.ne.s32.totalorder %s207, %s209
      %p216 = scmp.eq.s32.totalorder %s35, 1
      %p217 = por %p215, %p216
      %p218 = scmp.ne.s32.totalorder %s209, %s210
      %p219 = scmp.eq.s32.totalorder %s35, 0
      %p220 = por %p218, %p219
      %p221 = scmp.ne.s32.totalorder %s209, %s210
      %p222 = scmp.eq.s32.totalorder %s36, 1
      %p223 = por %p221, %p222
      %p225 = scmp.ne.s32.totalorder %s210, %s224
      %p226 = scmp.eq.s32.totalorder %s36, 0
      %p227 = por %p225, %p226
      %s229 = sadd.s32 %s228, 1
      %p232 = scmp.eq.s32.totalorder %s30, 1
      %p233 = scmp.ne.s32.totalorder %s228, %s230
      %p234 = scmp.eq.s32.totalorder %s30, 0
      %p235 = por %p233, %p234
      %p236 = scmp.ne.s32.totalorder %s228, %s230
      %p237 = scmp.eq.s32.totalorder %s35, 1
      %p238 = por %p236, %p237
      %p239 = scmp.ne.s32.totalorder %s230, %s231
      %p240 = scmp.eq.s32.totalorder %s35, 0
      %p241 = por %p239, %p240
      %p242 = scmp.ne.s32.totalorder %s230, %s231
      %p243 = scmp.eq.s32.totalorder %s36, 1
      %p244 = por %p242, %p243
      %p246 = scmp.ne.s32.totalorder %s231, %s245
      %p247 = scmp.eq.s32.totalorder %s36, 0
      %p248 = por %p246, %p247
      %s250 = sadd.s32 %s249, 1
      %p253 = scmp.eq.s32.totalorder %s30, 1
      %p254 = scmp.ne.s32.totalorder %s249, %s251
      %p255 = scmp.eq.s32.totalorder %s30, 0
      %p256 = por %p254, %p255
      %p257 = scmp.ne.s32.totalorder %s249, %s251
      %p258 = scmp.eq.s32.totalorder %s35, 1
      %p259 = por %p257, %p258
      %p260 = scmp.ne.s32.totalorder %s251, %s252
      %p261 = scmp.eq.s32.totalorder %s35, 0
      %p262 = por %p260, %p261
      %p263 = scmp.ne.s32.totalorder %s251, %s252
      %p264 = scmp.eq.s32.totalorder %s36, 1
      %p265 = por %p263, %p264
      %p267 = scmp.ne.s32.totalorder %s252, %s266
      %p268 = scmp.eq.s32.totalorder %s36, 0
      %p269 = por %p267, %p268
      %s271 = sadd.s32 %s270, 1
      %p274 = scmp.eq.s32.totalorder %s30, 1
      %p275 = scmp.ne.s32.totalorder %s270, %s272
      %p276 = scmp.eq.s32.totalorder %s30, 0
      %p277 = por %p275, %p276
      %p278 = scmp.ne.s32.totalorder %s270, %s272
      %p279 = scmp.eq.s32.totalorder %s35, 1
      %p280 = por %p278, %p279
      %p281 = scmp.ne.s32.totalorder %s272, %s273
      %p282 = scmp.eq.s32.totalorder %s35, 0
      %p283 = por %p281, %p282
      %p284 = scmp.ne.s32.totalorder %s272, %s273
      %p285 = scmp.eq.s32.totalorder %s36, 1
      %p286 = por %p284, %p285
      %p288 = scmp.ne.s32.totalorder %s273, %s287
      %p289 = scmp.eq.s32.totalorder %s36, 0
      %p290 = por %p288, %p289
      %s292 = sadd.s32 %s291, 1
      %p295 = scmp.eq.s32.totalorder %s30, 1
      %p296 = scmp.ne.s32.totalorder %s291, %s293
      %p297 = scmp.eq.s32.totalorder %s30, 0
      %p298 = por %p296, %p297
      %p299 = scmp.ne.s32.totalorder %s291, %s293
      %p300 = scmp.eq.s32.totalorder %s35, 1
      %p301 = por %p299, %p300
      %p302 = scmp.ne.s32.totalorder %s293, %s294
      %p303 = scmp.eq.s32.totalorder %s35, 0
      %p304 = por %p302, %p303
      %p305 = scmp.ne.s32.totalorder %s293, %s294
      %p306 = scmp.eq.s32.totalorder %s36, 1
      %p307 = por %p305, %p306
      %p309 = scmp.ne.s32.totalorder %s294, %s308
      %p310 = scmp.eq.s32.totalorder %s36, 0
      %p311 = por %p309, %p310
      %s313 = sadd.s32 %s312, 1
      %p316 = scmp.eq.s32.totalorder %s30, 1
      %p317 = scmp.ne.s32.totalorder %s312, %s314
      %p318 = scmp.eq.s32.totalorder %s30, 0
      %p319 = por %p317, %p318
      %p320 = scmp.ne.s32.totalorder %s312, %s314
      %p321 = scmp.eq.s32.totalorder %s35, 1
      %p322 = por %p320, %p321
      %p323 = scmp.ne.s32.totalorder %s314, %s315
      %p324 = scmp.eq.s32.totalorder %s35, 0
      %p325 = por %p323, %p324
      %p326 = scmp.ne.s32.totalorder %s314, %s315
      %p327 = scmp.eq.s32.totalorder %s36, 1
      %p328 = por %p326, %p327
      %p330 = scmp.ne.s32.totalorder %s315, %s329
      %p331 = scmp.eq.s32.totalorder %s36, 0
      %p332 = por %p330, %p331
      %s334 = sadd.s32 %s333, 1
      %p337 = scmp.eq.s32.totalorder %s30, 1
      %p338 = scmp.ne.s32.totalorder %s333, %s335
      %p339 = scmp.eq.s32.totalorder %s30, 0
      %p340 = por %p338, %p339
      %p341 = scmp.ne.s32.totalorder %s333, %s335
      %p342 = scmp.eq.s32.totalorder %s35, 1
      %p343 = por %p341, %p342
      %p344 = scmp.ne.s32.totalorder %s335, %s336
      %p345 = scmp.eq.s32.totalorder %s35, 0
      %p346 = por %p344, %p345
      %p347 = scmp.ne.s32.totalorder %s335, %s336
      %p348 = scmp.eq.s32.totalorder %s36, 1
      %p349 = por %p347, %p348
      %p351 = scmp.ne.s32.totalorder %s336, %s350
      %p352 = scmp.eq.s32.totalorder %s36, 0
      %p353 = por %p351, %p352
      %s355 = sadd.s32 %s354, 1
      %p358 = scmp.eq.s32.totalorder %s30, 1
      %p359 = scmp.ne.s32.totalorder %s354, %s356
      %p360 = scmp.eq.s32.totalorder %s30, 0
      %p361 = por %p359, %p360
      %p362 = scmp.ne.s32.totalorder %s354, %s356
      %p363 = scmp.eq.s32.totalorder %s35, 1
      %p364 = por %p362, %p363
      %p365 = scmp.ne.s32.totalorder %s356, %s357
      %p366 = scmp.eq.s32.totalorder %s35, 0
      %p367 = por %p365, %p366
      %p368 = scmp.ne.s32.totalorder %s356, %s357
      %p369 = scmp.eq.s32.totalorder %s36, 1
      %p370 = por %p368, %p369
      %p372 = scmp.ne.s32.totalorder %s357, %s371
      %p373 = scmp.eq.s32.totalorder %s36, 0
      %p374 = por %p372, %p373
      %s376 = sadd.s32 %s375, 1
      %p379 = scmp.eq.s32.totalorder %s30, 1
      %p380 = scmp.ne.s32.totalorder %s375, %s377
      %p381 = scmp.eq.s32.totalorder %s30, 0
      %p382 = por %p380, %p381
      %p383 = scmp.ne.s32.totalorder %s375, %s377
      %p384 = scmp.eq.s32.totalorder %s35, 1
      %p385 = por %p383, %p384
      %p386 = scmp.ne.s32.totalorder %s377, %s378
      %p387 = scmp.eq.s32.totalorder %s35, 0
      %p388 = por %p386, %p387
      %p389 = scmp.ne.s32.totalorder %s377, %s378
      %p390 = scmp.eq.s32.totalorder %s36, 1
      %p391 = por %p389, %p390
      %p393 = scmp.ne.s32.totalorder %s378, %s392
      %p394 = scmp.eq.s32.totalorder %s36, 0
      %p395 = por %p393, %p394
      %s397 = sadd.s32 %s396, 1
      %p400 = scmp.eq.s32.totalorder %s30, 1
      %p401 = scmp.ne.s32.totalorder %s396, %s398
      %p402 = scmp.eq.s32.totalorder %s30, 0
      %p403 = por %p401, %p402
      %p404 = scmp.ne.s32.totalorder %s396, %s398
      %p405 = scmp.eq.s32.totalorder %s35, 1
      %p406 = por %p404, %p405
      %p407 = scmp.ne.s32.totalorder %s398, %s399
      %p408 = scmp.eq.s32.totalorder %s35, 0
      %p409 = por %p407, %p408
      %p410 = scmp.ne.s32.totalorder %s398, %s399
      %p411 = scmp.eq.s32.totalorder %s36, 1
      %p412 = por %p410, %p411
      %p414 = scmp.ne.s32.totalorder %s399, %s413
      %p415 = scmp.eq.s32.totalorder %s36, 0
      %p416 = por %p414, %p415
      %s418 = sadd.s32 %s417, 1
      %p421 = scmp.eq.s32.totalorder %s30, 1
      %p422 = scmp.ne.s32.totalorder %s417, %s419
      %p423 = scmp.eq.s32.totalorder %s30, 0
      %p424 = por %p422, %p423
      %p425 = scmp.ne.s32.totalorder %s417, %s419
      %p426 = scmp.eq.s32.totalorder %s35, 1
      %p427 = por %p425, %p426
      %p428 = scmp.ne.s32.totalorder %s419, %s420
      %p429 = scmp.eq.s32.totalorder %s35, 0
      %p430 = por %p428, %p429
      %p431 = scmp.ne.s32.totalorder %s419, %s420
      %p432 = scmp.eq.s32.totalorder %s36, 1
      %p433 = por %p431, %p432
      %p435 = scmp.ne.s32.totalorder %s420, %s434
      %p436 = scmp.eq.s32.totalorder %s36, 0
      %p437 = por %p435, %p436
      %s439 = sadd.s32 %s438, 1
      %p442 = scmp.eq.s32.totalorder %s30, 1
      %p443 = scmp.ne.s32.totalorder %s438, %s440
      %p444 = scmp.eq.s32.totalorder %s30, 0
      %p445 = por %p443, %p444
      %p446 = scmp.ne.s32.totalorder %s438, %s440
      %p447 = scmp.eq.s32.totalorder %s35, 1
      %p448 = por %p446, %p447
      %p449 = scmp.ne.s32.totalorder %s440, %s441
      %p450 = scmp.eq.s32.totalorder %s35, 0
      %p451 = por %p449, %p450
      %p452 = scmp.ne.s32.totalorder %s440, %s441
      %p453 = scmp.eq.s32.totalorder %s36, 1
      %p454 = por %p452, %p453
      %p456 = scmp.ne.s32.totalorder %s441, %s455
      %p457 = scmp.eq.s32.totalorder %s36, 0
      %p458 = por %p456, %p457
      %s460 = sadd.s32 %s459, 1
      %p463 = scmp.eq.s32.totalorder %s30, 1
      %p464 = scmp.ne.s32.totalorder %s459, %s461
      %p465 = scmp.eq.s32.totalorder %s30, 0
      %p466 = por %p464, %p465
      %p467 = scmp.ne.s32.totalorder %s459, %s461
      %p468 = scmp.eq.s32.totalorder %s35, 1
      %p469 = por %p467, %p468
      %p470 = scmp.ne.s32.totalorder %s461, %s462
      %p471 = scmp.eq.s32.totalorder %s35, 0
      %p472 = por %p470, %p471
      %p473 = scmp.ne.s32.totalorder %s461, %s462
      %p474 = scmp.eq.s32.totalorder %s36, 1
      %p475 = por %p473, %p474
      %p477 = scmp.ne.s32.totalorder %s462, %s476
      %p478 = scmp.eq.s32.totalorder %s36, 0
      %p479 = por %p477, %p478
      %s480 = ssub.s32 %s37, %s49
      %p481 = scmp.eq.s32.totalorder %s480, 0
      %s483 = sadd.s32 %s482, 1
      %s484 = scalar_select %p481, %s482, %s483
      %p487 = pneg %p481
      %p488 = scmp.eq.s32.totalorder %s30, 1
      %p489 = por %p487, %p488
      %p490 = scmp.ne.s32.totalorder %s482, %s485
      %p491 = scmp.eq.s32.totalorder %s30, 0
      %p492 = por %p490, %p491
      %p493 = scmp.ne.s32.totalorder %s482, %s485
      %p494 = scmp.eq.s32.totalorder %s35, 1
      %p495 = por %p493, %p494
      %p496 = scmp.ne.s32.totalorder %s485, %s486
      %p497 = scmp.eq.s32.totalorder %s35, 0
      %p498 = por %p496, %p497
      %p499 = scmp.ne.s32.totalorder %s485, %s486
      %p500 = scmp.eq.s32.totalorder %s36, 1
      %p501 = por %p499, %p500
      %p503 = scmp.ne.s32.totalorder %s486, %s502
      %p504 = scmp.eq.s32.totalorder %s36, 0
      %p505 = por %p503, %p504
      %s506 = ssub.s32 %s37, %s49
      %p507 = scmp.eq.s32.totalorder %s506, 0
      %s509 = sadd.s32 %s508, 1
      %s510 = scalar_select %p507, %s508, %s509
      %p513 = pneg %p507
      %p514 = scmp.eq.s32.totalorder %s30, 1
      %p515 = por %p513, %p514
      %p516 = scmp.ne.s32.totalorder %s508, %s511
      %p517 = scmp.eq.s32.totalorder %s30, 0
      %p518 = por %p516, %p517
      %p519 = scmp.ne.s32.totalorder %s508, %s511
      %p520 = scmp.eq.s32.totalorder %s35, 1
      %p521 = por %p519, %p520
      %p522 = scmp.ne.s32.totalorder %s511, %s512
      %p523 = scmp.eq.s32.totalorder %s35, 0
      %p524 = por %p522, %p523
      %p525 = scmp.ne.s32.totalorder %s511, %s512
      %p526 = scmp.eq.s32.totalorder %s36, 1
      %p527 = por %p525, %p526
      %p529 = scmp.ne.s32.totalorder %s512, %s528
      %p530 = scmp.eq.s32.totalorder %s36, 0
      %p531 = por %p529, %p530
      %p532 = scmp.le.s32.totalorder 1, %s30
      %p533 = scmp.lt.s32.totalorder %s30, 3
      %p534 = pnand %p532, %p533
      %p535 = pneg %p534
      // Predicated region
      $region9: #{tpu_custom_call.1} parent=5 // pred_check
        _
      $region10: #{tpu_custom_call.1} parent=5 // pred_check_branch
        %537 = sbr.rel (%p534) target = $region12
      $region11: #{tpu_custom_call.1} parent=5 // pred_region
        %s538 = ssub.s32 %s30, 1
        // Predicated region
        $region13: #{tpu_custom_call.1} parent=11 // pred_check
          %p539 = pneg %p68
        $region14: #{tpu_custom_call.1} parent=11 // pred_check_branch
          %541 = sbr.rel (%p539) target = $region16
        $region15: #{tpu_custom_call.1} parent=11 // pred_region
          %s542 = smul.u32 2, %s39
          %p543 = scmp.lt.s32.totalorder %s542, 1
          %s544 = scalar_select %p543, %s542, 1
          %s545 = smul.addr %s544, 2
          %s546 = smul.addr %s545, 8
          %s547 = scalar_lea.vmem %s0, %s546
          %s548 = smul.u32 2, %s39
        $region16: #{tpu_custom_call.1} parent=11 // pred_fallthru
          _
        // Predicated region
        $region17: #{tpu_custom_call.1} parent=11 // pred_check
          %p549 = pneg %p94
        $region18: #{tpu_custom_call.1} parent=11 // pred_check_branch
          %551 = sbr.rel (%p549) target = $region20
        $region19: #{tpu_custom_call.1} parent=11 // pred_region
          %s552 = smul.u32 2, %s39
          %p553 = scmp.lt.s32.totalorder %s552, 1
          %s554 = scalar_select %p553, %s552, 1
          %s555 = scalar_lea.vmem %s1, %s554
          %s556 = smul.u32 2, %s39
        $region20: #{tpu_custom_call.1} parent=11 // pred_fallthru
          _
        // Predicated region
        $region21: #{tpu_custom_call.1} parent=11 // pred_check
          %p557 = pneg %p115
        $region22: #{tpu_custom_call.1} parent=11 // pred_check_branch
          %559 = sbr.rel (%p557) target = $region24
        $region23: #{tpu_custom_call.1} parent=11 // pred_region
          _
        $region24: #{tpu_custom_call.1} parent=11 // pred_fallthru
          _
        // Predicated region
        $region25: #{tpu_custom_call.1} parent=11 // pred_check
          %p560 = pneg %p136
        $region26: #{tpu_custom_call.1} parent=11 // pred_check_branch
          %562 = sbr.rel (%p560) target = $region28
        $region27: #{tpu_custom_call.1} parent=11 // pred_region
          _
        $region28: #{tpu_custom_call.1} parent=11 // pred_fallthru
          _
        // Predicated region
        $region29: #{tpu_custom_call.1} parent=11 // pred_check
          %p563 = pneg %p157
        $region30: #{tpu_custom_call.1} parent=11 // pred_check_branch
          %565 = sbr.rel (%p563) target = $region32
        $region31: #{tpu_custom_call.1} parent=11 // pred_region
          _
        $region32: #{tpu_custom_call.1} parent=11 // pred_fallthru
          _
        // Predicated region
        $region33: #{tpu_custom_call.1} parent=11 // pred_check
          %p566 = pneg %p178
        $region34: #{tpu_custom_call.1} parent=11 // pred_check_branch
          %568 = sbr.rel (%p566) target = $region36
        $region35: #{tpu_custom_call.1} parent=11 // pred_region
          _
        $region36: #{tpu_custom_call.1} parent=11 // pred_fallthru
          _
        // Predicated region
        $region37: #{tpu_custom_call.1} parent=11 // pred_check
          %p569 = pneg %p199
        $region38: #{tpu_custom_call.1} parent=11 // pred_check_branch
          %571 = sbr.rel (%p569) target = $region40
        $region39: #{tpu_custom_call.1} parent=11 // pred_region
          _
        $region40: #{tpu_custom_call.1} parent=11 // pred_fallthru
          _
        // Predicated region
        $region41: #{tpu_custom_call.1} parent=11 // pred_check
          %p572 = pneg %p220
        $region42: #{tpu_custom_call.1} parent=11 // pred_check_branch
          %574 = sbr.rel (%p572) target = $region44
        $region43: #{tpu_custom_call.1} parent=11 // pred_region
          _
        $region44: #{tpu_custom_call.1} parent=11 // pred_fallthru
          _
        // Predicated region
        $region45: #{tpu_custom_call.1} parent=11 // pred_check
          %p575 = pneg %p241
        $region46: #{tpu_custom_call.1} parent=11 // pred_check_branch
          %577 = sbr.rel (%p575) target = $region48
        $region47: #{tpu_custom_call.1} parent=11 // pred_region
          _
        $region48: #{tpu_custom_call.1} parent=11 // pred_fallthru
          _
        // Predicated region
        $region49: #{tpu_custom_call.1} parent=11 // pred_check
          %p578 = pneg %p262
        $region50: #{tpu_custom_call.1} parent=11 // pred_check_branch
          %580 = sbr.rel (%p578) target = $region52
        $region51: #{tpu_custom_call.1} parent=11 // pred_region
          _
        $region52: #{tpu_custom_call.1} parent=11 // pred_fallthru
          _
        // Predicated region
        $region53: #{tpu_custom_call.1} parent=11 // pred_check
          %p581 = pneg %p283
        $region54: #{tpu_custom_call.1} parent=11 // pred_check_branch
          %583 = sbr.rel (%p581) target = $region56
        $region55: #{tpu_custom_call.1} parent=11 // pred_region
          _
        $region56: #{tpu_custom_call.1} parent=11 // pred_fallthru
          _
        // Predicated region
        $region57: #{tpu_custom_call.1} parent=11 // pred_check
          %p584 = pneg %p304
        $region58: #{tpu_custom_call.1} parent=11 // pred_check_branch
          %586 = sbr.rel (%p584) target = $region60
        $region59: #{tpu_custom_call.1} parent=11 // pred_region
          _
        $region60: #{tpu_custom_call.1} parent=11 // pred_fallthru
          _
        // Predicated region
        $region61: #{tpu_custom_call.1} parent=11 // pred_check
          %p587 = pneg %p325
        $region62: #{tpu_custom_call.1} parent=11 // pred_check_branch
          %589 = sbr.rel (%p587) target = $region64
        $region63: #{tpu_custom_call.1} parent=11 // pred_region
          _
        $region64: #{tpu_custom_call.1} parent=11 // pred_fallthru
          _
        // Predicated region
        $region65: #{tpu_custom_call.1} parent=11 // pred_check
          %p590 = pneg %p346
        $region66: #{tpu_custom_call.1} parent=11 // pred_check_branch
          %592 = sbr.rel (%p590) target = $region68
        $region67: #{tpu_custom_call.1} parent=11 // pred_region
          _
        $region68: #{tpu_custom_call.1} parent=11 // pred_fallthru
          _
        // Predicated region
        $region69: #{tpu_custom_call.1} parent=11 // pred_check
          %p593 = pneg %p367
        $region70: #{tpu_custom_call.1} parent=11 // pred_check_branch
          %595 = sbr.rel (%p593) target = $region72
        $region71: #{tpu_custom_call.1} parent=11 // pred_region
          _
        $region72: #{tpu_custom_call.1} parent=11 // pred_fallthru
          _
        // Predicated region
        $region73: #{tpu_custom_call.1} parent=11 // pred_check
          %p596 = pneg %p388
        $region74: #{tpu_custom_call.1} parent=11 // pred_check_branch
          %598 = sbr.rel (%p596) target = $region76
        $region75: #{tpu_custom_call.1} parent=11 // pred_region
          _
        $region76: #{tpu_custom_call.1} parent=11 // pred_fallthru
          _
        // Predicated region
        $region77: #{tpu_custom_call.1} parent=11 // pred_check
          %p599 = pneg %p409
        $region78: #{tpu_custom_call.1} parent=11 // pred_check_branch
          %601 = sbr.rel (%p599) target = $region80
        $region79: #{tpu_custom_call.1} parent=11 // pred_region
          _
        $region80: #{tpu_custom_call.1} parent=11 // pred_fallthru
          _
        // Predicated region
        $region81: #{tpu_custom_call.1} parent=11 // pred_check
          %p602 = pneg %p430
        $region82: #{tpu_custom_call.1} parent=11 // pred_check_branch
          %604 = sbr.rel (%p602) target = $region84
        $region83: #{tpu_custom_call.1} parent=11 // pred_region
          _
        $region84: #{tpu_custom_call.1} parent=11 // pred_fallthru
          _
        // Predicated region
        $region85: #{tpu_custom_call.1} parent=11 // pred_check
          %p605 = pneg %p451
        $region86: #{tpu_custom_call.1} parent=11 // pred_check_branch
          %607 = sbr.rel (%p605) target = $region88
        $region87: #{tpu_custom_call.1} parent=11 // pred_region
          _
        $region88: #{tpu_custom_call.1} parent=11 // pred_fallthru
          _
        // Predicated region
        $region89: #{tpu_custom_call.1} parent=11 // pred_check
          %p608 = pneg %p472
        $region90: #{tpu_custom_call.1} parent=11 // pred_check_branch
          %610 = sbr.rel (%p608) target = $region92
        $region91: #{tpu_custom_call.1} parent=11 // pred_region
          _
        $region92: #{tpu_custom_call.1} parent=11 // pred_fallthru
          _
      $region12: #{tpu_custom_call.1} parent=5 // pred_fallthru
        _
      %p611 = scmp.lt.s32.totalorder %s30, 2
      // Predicated region
      $region93: #{tpu_custom_call.1} parent=5 // pred_check
        %p612 = pneg %p611
      $region94: #{tpu_custom_call.1} parent=5 // pred_check_branch
        %614 = sbr.rel (%p612) target = $region96
      $region95: #{tpu_custom_call.1} parent=5 // pred_region
        _
      $region96: #{tpu_custom_call.1} parent=5 // pred_fallthru
        _
      %p615 = scmp.le.s32.totalorder 1, %s30
      %p616 = scmp.lt.s32.totalorder %s30, 3
      %p617 = pnand %p615, %p616
      %p618 = pneg %p617
      // Predicated region
      $region97: #{tpu_custom_call.1} parent=5 // pred_check
        _
      $region98: #{tpu_custom_call.1} parent=5 // pred_check_branch
        %620 = sbr.rel (%p617) target = $region100
      $region99: #{tpu_custom_call.1} parent=5 // pred_region
        %s621 = ssub.s32 %s30, 1
        %s622 = smul.u32 2, %s39
        %p623 = scmp.lt.s32.totalorder %s622, 1
        %s624 = scalar_select %p623, %s622, 1
        %s625 = smul.addr %s624, 2
        %s626 = smul.addr %s625, 8
        %s627 = scalar_lea.vmem %s0, %s626
        %p628 = pneg %p68
        %p629 = pneg %p65
        %s630 = smul.u32 2, %s39
        %p631 = scmp.lt.s32.totalorder %s630, 1
        %s632 = scalar_select %p631, %s630, 1
        %s633 = scalar_lea.vmem %s1, %s632
        %p634 = pneg %p94
        %p635 = pneg %p91
        %p636 = pneg %p115
        %p637 = pneg %p112
        %p638 = pneg %p136
        %p639 = pneg %p133
        %p640 = pneg %p157
        %p641 = pneg %p154
        %p642 = pneg %p178
        %p643 = pneg %p175
        %p644 = pneg %p199
        %p645 = pneg %p196
        %p646 = pneg %p220
        %p647 = pneg %p217
        %p648 = pneg %p241
        %p649 = pneg %p238
        %p650 = pneg %p262
        %p651 = pneg %p259
        %p652 = pneg %p283
        %p653 = pneg %p280
        %p654 = pneg %p304
        %p655 = pneg %p301
        %p656 = pneg %p325
        %p657 = pneg %p322
        %p658 = pneg %p346
        %p659 = pneg %p343
        %p660 = pneg %p367
        %p661 = pneg %p364
        %p662 = pneg %p388
        %p663 = pneg %p385
        %p664 = pneg %p409
        %p665 = pneg %p406
        %p666 = pneg %p430
        %p667 = pneg %p427
        %p668 = pneg %p451
        %p669 = pneg %p448
        %p670 = pneg %p472
        %p671 = pneg %p469
        %p672 = pneg %p498
        %p673 = pneg %p495
        %p674 = pneg %p524
        %p675 = pneg %p521
        %s676 = smul.u32 2, %s39
        %p677 = scmp.lt.s32.totalorder %s676, 1
        %s678 = scalar_select %p677, %s676, 1
        %s679 = smul.addr %s678, 2
        %s680 = smul.addr %s679, 8
        %s681 = scalar_lea.vmem %s0, %s680
        %s682 = smul.u32 2, %s39
        %s683 = smul.u32 2, %s39
        %p684 = scmp.lt.s32.totalorder %s683, 1
        %s685 = scalar_select %p684, %s683, 1
        %s686 = scalar_lea.vmem %s1, %s685
        %s687 = smul.u32 2, %s39
        %s688 = smul.u32 2, %s39
        %s689 = smul.u32 2, %s39
        %p691 = scmp.eq.s32.totalorder %s40, 0
        // Predicated region
        $region101: #{tpu_custom_call.1} parent=99 // pred_check
          %p692 = pneg %p691
        $region102: #{tpu_custom_call.1} parent=99 // pred_check_branch
          %694 = sbr.rel (%p692) target = $region104
        $region103: #{tpu_custom_call.1} parent=99 // pred_region
          %v695 = vld [vmem:[%s681] sm:$0xff]
          %v696 = vld [vmem:[%s681 + $0x8] sm:$0xff]
          %v697 = vld [vmem:[%s681 + $0x10] sm:$0xff]
          %v698 = vld [vmem:[%s681 + $0x18] sm:$0xff]
          %v699 = vld [vmem:[%s2] sm:$0x3]
          %v700 = vld [vmem:[%s4] sm:$0x3]
          %702 = vset.pattern.permute.xlu0 0
          %703 = vperm.xlu0 %702, %v695
          %v704 = vpop.permute.xlu0 %703
          %707 = vset.pattern.permute.xlu0 0
          %708 = vperm.xlu0 %707, %v696
          %v709 = vpop.permute.xlu0 %708
          %712 = vset.pattern.permute.xlu0 0
          %713 = vperm.xlu0 %712, %v697
          %v714 = vpop.permute.xlu0 %713
          %717 = vset.pattern.permute.xlu0 0
          %718 = vperm.xlu0 %717, %v698
          %v719 = vpop.permute.xlu0 %718
          %v721 = vlaneseq
          %v722 = vshrl.u32 %v721, 7
          %v723 = vsub.s32 0, %v722
          %v724 = vrot.slane %v699, %v723
          %v725 = vmul.f32 %v704, %v724
          %v726 = vmul.f32 %v709, %v724
          %v727 = vmul.f32 %v714, %v724
          %v728 = vmul.f32 %v719, %v724
          %729 = vset.pattern.permute.xlu0 1
          %730 = vperm.xlu0 %729, %v695
          %v731 = vpop.permute.xlu0 %730
          %733 = vset.pattern.permute.xlu0 1
          %734 = vperm.xlu0 %733, %v696
          %v735 = vpop.permute.xlu0 %734
          %737 = vset.pattern.permute.xlu0 1
          %738 = vperm.xlu0 %737, %v697
          %v739 = vpop.permute.xlu0 %738
          %741 = vset.pattern.permute.xlu0 1
          %742 = vperm.xlu0 %741, %v698
          %v743 = vpop.permute.xlu0 %742
          %v745 = vlaneseq
          %v746 = vshrl.u32 %v745, 7
          %v747 = vsub.s32 1, %v746
          %v748 = vrot.slane %v699, %v747
          %v749 = vmul.f32 %v731, %v748
          %v750 = vmul.f32 %v735, %v748
          %v751 = vmul.f32 %v739, %v748
          %v752 = vmul.f32 %v743, %v748
          %v753 = vadd.f32 %v725, %v749
          %v754 = vadd.f32 %v726, %v750
          %v755 = vadd.f32 %v727, %v751
          %v756 = vadd.f32 %v728, %v752
          %v757 = vld [vmem:[%s3] sm:$0x1]
          %v759 = vlaneseq
          %v760 = vshrl.u32 %v759, 7
          %v761 = vsub.s32 0, %v760
          %v762 = vrot.slane %v757, %v761
          %v764 = vadd.f32 %v753, %v762
          %v765 = vadd.f32 %v754, %v762
          %v766 = vadd.f32 %v755, %v762
          %v767 = vadd.f32 %v756, %v762
          %v768 = vlaneseq
          %v769 = vshrl.u32 %v768, 7
          %v770 = vsub.s32 0, %v769
          %v771 = vrot.slane %v700, %v770
          %v772 = vmul.f32 %v704, %v771
          %v773 = vmul.f32 %v709, %v771
          %v774 = vmul.f32 %v714, %v771
          %v775 = vmul.f32 %v719, %v771
          %v776 = vlaneseq
          %v777 = vshrl.u32 %v776, 7
          %v778 = vsub.s32 1, %v777
          %v779 = vrot.slane %v700, %v778
          %v780 = vmul.f32 %v731, %v779
          %v781 = vmul.f32 %v735, %v779
          %v782 = vmul.f32 %v739, %v779
          %v783 = vmul.f32 %v743, %v779
          %v784 = vadd.f32 %v772, %v780
          %v785 = vadd.f32 %v773, %v781
          %v786 = vadd.f32 %v774, %v782
          %v787 = vadd.f32 %v775, %v783
          %v788 = vld [vmem:[%s5] sm:$0x1]
          %v790 = vlaneseq
          %v791 = vshrl.u32 %v790, 7
          %v792 = vsub.s32 0, %v791
          %v793 = vrot.slane %v788, %v792
          %v795 = vadd.f32 %v784, %v793
          %v796 = vadd.f32 %v785, %v793
          %v797 = vadd.f32 %v786, %v793
          %v798 = vadd.f32 %v787, %v793
          %v799 = vlaneseq
          %v800 = vshrl.u32 %v799, 7
          %v801 = vadd.s32 %v800, 8
          %vm802 = vcmp.lt.s32.totalorder %v800, 8
          %vm803 = vcmp.lt.s32.totalorder %v801, 8
          %v804 = vsel %vm802, 1, 0
          %v805 = vsel %vm803, 1, 0
          %vm806 = vcmp.eq.s32.totalorder %v804, 1
          %vm807 = vcmp.eq.s32.totalorder %v805, 1
          %v808 = vsel %vm806, %v764, %v795
          %v809 = vsel %vm807, %v765, %v796
          %v810 = vsel %vm806, %v766, %v797
          %v811 = vsel %vm807, %v767, %v798
          %vm812 = vcmask 261120
          %813 = vst.msk [vmem:[#allocation3] sm:$0xff] %vm812, %v808
          %814 = vst.msk [vmem:[#allocation3 + $0x8] sm:$0xff] %vm812, %v809
          %815 = vst.msk [vmem:[#allocation3 + $0x10] sm:$0xff] %vm812, %v810
          %816 = vst.msk [vmem:[#allocation3 + $0x18] sm:$0xff] %vm812, %v811
          %817 = vst.msk [vmem:[#allocation2] sm:$0xff] %vm812, %v808
          %818 = vst.msk [vmem:[#allocation2 + $0x8] sm:$0xff] %vm812, %v809
          %819 = vst.msk [vmem:[#allocation2 + $0x10] sm:$0xff] %vm812, %v810
          %820 = vst.msk [vmem:[#allocation2 + $0x18] sm:$0xff] %vm812, %v811
        $region104: #{tpu_custom_call.1} parent=99 // pred_fallthru
          _
        %v821 = vld [vmem:[#allocation2] sm:$0xff]
        %v822 = vld [vmem:[#allocation2 + $0x8] sm:$0xff]
        %v823 = vld [vmem:[#allocation2 + $0x10] sm:$0xff]
        %v824 = vld [vmem:[#allocation2 + $0x18] sm:$0xff]
        %v825 = vpack.c.bf16 %v822, %v821
        %v826 = vpack.c.bf16 %v824, %v823
        %s827 = smul.u32 %s40, 4
        %s828 = smul.addr %s827, 4
        %s829 = scalar_lea.vmem %s6, %s828
        %v830 = vld [vmem:[%s829] sm:$0xf]
        %v831 = vld [vmem:[%s829 + $0x4] sm:$0xf]
        %v832 = vld [vmem:[%s829 + $0x8] sm:$0xf]
        %v833 = vld [vmem:[%s829 + $0xc] sm:$0xf]
        %s834 = scalar_lea.vmem %s7, %s40
        %v835 = vld [vmem:[%s834] sm:$0x1]
        %v837 = vlaneseq
        %v838 = vshrl.u32 %v837, 7
        %v839 = vsub.s32 0, %v838
        %v840 = vrot.slane %v835, %v839
        %v846 = vunpack.c.l.b16 %v830
        %v847 = vunpack.c.l.b16 %v831
        %v848 = vunpack.c.l.b16 %v832
        %v849 = vunpack.c.l.b16 %v833
        %v850 = vpack.c.b16 %v847, %v846
        %v851 = vpack.c.b16 %v849, %v848
        %vm854 = vcmask 261120
        %v856 = vsel %vm854, %v825, 0
        %v859 = vsel %vm854, %v826, 0
        %861 = vmatprep.subr.bf16.mxu0 0
        %862 = vmatpush1.bf16.msra.mxu0 %v850
        %863 = vmatprep.subr.bf16.mxu0 0
        %864 = vmatpush1.bf16.msra.mxu0 %v851
        %865 = vmatprep.subr.bf16.mxu0 0
        %866 = vmatpush1.bf16.msra.mxu0 0
        %867 = vmatprep.subr.bf16.mxu0 0
        %868 = vmatpush1.bf16.msra.mxu0 0
        %869 = vmatprep.subr.bf16.mxu0 0
        %870 = vmatpush1.bf16.msra.mxu0 0
        %871 = vmatprep.subr.bf16.mxu0 0
        %872 = vmatpush1.bf16.msra.mxu0 0
        %873 = vmatprep.subr.bf16.mxu0 0
        %874 = vmatpush1.bf16.msra.mxu0 0
        %875 = vmatprep.subr.bf16.mxu0 0
        %876 = vmatpush1.bf16.msra.mxu0 0
        %877 = vmatprep.subr.bf16.mxu0 0
        %878 = vmatpush1.bf16.msra.mxu0 0
        %879 = vmatprep.subr.bf16.mxu0 0
        %880 = vmatpush1.bf16.msra.mxu0 0
        %881 = vmatprep.subr.bf16.mxu0 0
        %882 = vmatpush1.bf16.msra.mxu0 0
        %883 = vmatprep.subr.bf16.mxu0 0
        %884 = vmatpush1.bf16.msra.mxu0 0
        %885 = vmatprep.subr.bf16.mxu0 0
        %886 = vmatpush1.bf16.msra.mxu0 0
        %887 = vmatprep.subr.bf16.mxu0 0
        %888 = vmatpush1.bf16.msra.mxu0 0
        %889 = vmatprep.subr.bf16.mxu0 0
        %890 = vmatpush1.bf16.msra.mxu0 0
        %891 = vmatprep.subr.bf16.mxu0 0
        %892 = vmatpush1.bf16.msra.mxu0 0
        %893 = vmatprep.mubr.bf16.mxu0 0
        %894 = vmatmul.mubr.bf16.gmra.mrb[0].mxu0 %v856
        %v895 = vpop.f32.mrb[0].mxu0
        %v896 = vadd.f32 %v840, %v895
        %v897 = vpop.f32.mrb[0].mxu0
        %v898 = vpop.f32.mrb[0].mxu0
        %v899 = vadd.f32 %v840, %v898
        %v900 = vpop.f32.mrb[0].mxu0
        %901 = vmatprep.mubr.bf16.mxu0 0
        %902 = vmatmul.mubr.bf16.gmra.mrb[0].mxu0 %v859
        %v903 = vpop.f32.mrb[0].mxu0
        %v904 = vadd.f32 %v840, %v903
        %v905 = vpop.f32.mrb[0].mxu0
        %v906 = vpop.f32.mrb[0].mxu0
        %v907 = vadd.f32 %v840, %v906
        %v908 = vpop.f32.mrb[0].mxu0
        %909 = vdwg.mxu0
        %v910 = vpack.c.bf16 %v899, %v896
        %v911 = vpack.c.bf16 %v907, %v904
        %913 = vrot.lane.b32.xlu0 %v910, 96
        %v914 = vpop.permute.xlu0 %913
        %vm915 = vcmask 64512
        %v917 = vsel %vm915, %v910, 0
        %v920 = vsel %vm915, %v914, 0
        %922 = vmatprep.subr.bf16.mxu0 0
        %923 = vmatpush1.bf16.xpose.msra.mxu0 %v920
        %924 = vmatprep.subr.bf16.mxu0 0
        %925 = vmatpush1.bf16.xpose.msra.mxu0 0
        %926 = vmatprep.subr.bf16.mxu0 0
        %927 = vmatpush1.bf16.xpose.msra.mxu0 0
        %928 = vmatprep.subr.bf16.mxu0 0
        %929 = vmatpush1.bf16.xpose.msra.mxu0 0
        %930 = vmatprep.subr.bf16.mxu0 0
        %931 = vmatpush1.bf16.xpose.msra.mxu0 0
        %932 = vmatprep.subr.bf16.mxu0 0
        %933 = vmatpush1.bf16.xpose.msra.mxu0 0
        %934 = vmatprep.subr.bf16.mxu0 0
        %935 = vmatpush1.bf16.xpose.msra.mxu0 0
        %936 = vmatprep.subr.bf16.mxu0 0
        %937 = vmatpush1.bf16.xpose.msra.mxu0 0
        %938 = vmatprep.subr.bf16.mxu0 0
        %939 = vmatpush1.bf16.xpose.msra.mxu0 0
        %940 = vmatprep.subr.bf16.mxu0 0
        %941 = vmatpush1.bf16.xpose.msra.mxu0 0
        %942 = vmatprep.subr.bf16.mxu0 0
        %943 = vmatpush1.bf16.xpose.msra.mxu0 0
        %944 = vmatprep.subr.bf16.mxu0 0
        %945 = vmatpush1.bf16.xpose.msra.mxu0 0
        %946 = vmatprep.subr.bf16.mxu0 0
        %947 = vmatpush1.bf16.xpose.msra.mxu0 0
        %948 = vmatprep.subr.bf16.mxu0 0
        %949 = vmatpush1.bf16.xpose.msra.mxu0 0
        %950 = vmatprep.subr.bf16.mxu0 0
        %951 = vmatpush1.bf16.xpose.msra.mxu0 0
        %952 = vmatprep.subr.bf16.mxu0 0
        %953 = vmatpush1.bf16.xpose.msra.mxu0 0
        %954 = vmatprep.mubr.bf16.mxu0 0
        %955 = vmatmul.mubr.bf16.gmra.mrb[0].mxu0 %v917
        %v956 = vpop.f32.mrb[0].mxu0
        %v957 = vadd.f32 0.0, %v956
        %v958 = vpop.f32.mrb[0].mxu0
        %v959 = vpop.f32.mrb[0].mxu0
        %v960 = vadd.f32 0.0, %v959
        %v961 = vpop.f32.mrb[0].mxu0
        %962 = vdwg.mxu0
        %964 = vrot.lane.b32.xlu0 %v911, 96
        %v965 = vpop.permute.xlu0 %964
        %v967 = vsel %vm915, %v911, 0
        %v970 = vsel %vm915, %v965, 0
        %972 = vmatprep.subr.bf16.mxu0 0
        %973 = vmatpush1.bf16.xpose.msra.mxu0 %v970
        %974 = vmatprep.subr.bf16.mxu0 0
        %975 = vmatpush1.bf16.xpose.msra.mxu0 0
        %976 = vmatprep.subr.bf16.mxu0 0
        %977 = vmatpush1.bf16.xpose.msra.mxu0 0
        %978 = vmatprep.subr.bf16.mxu0 0
        %979 = vmatpush1.bf16.xpose.msra.mxu0 0
        %980 = vmatprep.subr.bf16.mxu0 0
        %981 = vmatpush1.bf16.xpose.msra.mxu0 0
        %982 = vmatprep.subr.bf16.mxu0 0
        %983 = vmatpush1.bf16.xpose.msra.mxu0 0
        %984 = vmatprep.subr.bf16.mxu0 0
        %985 = vmatpush1.bf16.xpose.msra.mxu0 0
        %986 = vmatprep.subr.bf16.mxu0 0
        %987 = vmatpush1.bf16.xpose.msra.mxu0 0
        %988 = vmatprep.subr.bf16.mxu0 0
        %989 = vmatpush1.bf16.xpose.msra.mxu0 0
        %990 = vmatprep.subr.bf16.mxu0 0
        %991 = vmatpush1.bf16.xpose.msra.mxu0 0
        %992 = vmatprep.subr.bf16.mxu0 0
        %993 = vmatpush1.bf16.xpose.msra.mxu0 0
        %994 = vmatprep.subr.bf16.mxu0 0
        %995 = vmatpush1.bf16.xpose.msra.mxu0 0
        %996 = vmatprep.subr.bf16.mxu0 0
        %997 = vmatpush1.bf16.xpose.msra.mxu0 0
        %998 = vmatprep.subr.bf16.mxu0 0
        %999 = vmatpush1.bf16.xpose.msra.mxu0 0
        %1000 = vmatprep.subr.bf16.mxu0 0
        %1001 = vmatpush1.bf16.xpose.msra.mxu0 0
        %1002 = vmatprep.subr.bf16.mxu0 0
        %1003 = vmatpush1.bf16.xpose.msra.mxu0 0
        %1004 = vmatprep.mubr.bf16.mxu0 0
        %1005 = vmatmul.mubr.bf16.gmra.mrb[0].mxu0 %v967
        %v1006 = vpop.f32.mrb[0].mxu0
        %v1007 = vadd.f32 0.0, %v1006
        %v1008 = vpop.f32.mrb[0].mxu0
        %v1009 = vpop.f32.mrb[0].mxu0
        %v1010 = vadd.f32 0.0, %v1009
        %v1011 = vpop.f32.mrb[0].mxu0
        %1012 = vdwg.mxu0
        %v1013 = vmul.f32 %v957, 0.35355338
        %v1014 = vmul.f32 %v960, 0.35355338
        %v1015 = vmul.f32 %v1007, 0.35355338
        %v1016 = vmul.f32 %v1010, 0.35355338
        %vm1017 = vcmask 130048
        %v1018 = vsel %vm1017, %v1013, -inf
        %1019 = vmax.xlane.f32.xlu0 %v1018
        %v1020 = vpop.xlane.xlu0 %1019
        %v1021 = vsel %vm1017, %v1014, -inf
        %1022 = vmax.xlane.f32.xlu0 %v1021
        %v1023 = vpop.xlane.xlu0 %1022
        %v1024 = vsel %vm1017, %v1015, -inf
        %1025 = vmax.xlane.f32.xlu0 %v1024
        %v1026 = vpop.xlane.xlu0 %1025
        %v1027 = vsel %vm1017, %v1016, -inf
        %1028 = vmax.xlane.f32.xlu0 %v1027
        %v1029 = vpop.xlane.xlu0 %1028
        %v1030 = vsub.f32 %v1013, %v1020
        %v1031 = vsub.f32 %v1014, %v1023
        %v1032 = vsub.f32 %v1015, %v1026
        %v1033 = vsub.f32 %v1016, %v1029
        %v1034 = vmul.f32 %v1030, 1.442695
        %v1035 = vpow.pop %v1034
        %v1036 = vmul.f32 %v1031, 1.442695
        %v1037 = vpow.pop %v1036
        %v1038 = vmul.f32 %v1032, 1.442695
        %v1039 = vpow.pop %v1038
        %v1040 = vmul.f32 %v1033, 1.442695
        %v1041 = vpow.pop %v1040
        %v1042 = vsel %vm1017, %v1035, 0.0
        %1043 = vadd.xlane.f32.xlu0 %v1042
        %v1044 = vpop.xlane.xlu0 %1043
        %v1045 = vsel %vm1017, %v1037, 0.0
        %1046 = vadd.xlane.f32.xlu0 %v1045
        %v1047 = vpop.xlane.xlu0 %1046
        %v1048 = vsel %vm1017, %v1039, 0.0
        %1049 = vadd.xlane.f32.xlu0 %v1048
        %v1050 = vpop.xlane.xlu0 %1049
        %v1051 = vsel %vm1017, %v1041, 0.0
        %1052 = vadd.xlane.f32.xlu0 %v1051
        %v1053 = vpop.xlane.xlu0 %1052
        %v1054 = vrcp.pop %v1044
        %v1055 = vmul.f32 %v1035, %v1054
        %v1056 = vrcp.pop %v1047
        %v1057 = vmul.f32 %v1037, %v1056
        %v1058 = vrcp.pop %v1050
        %v1059 = vmul.f32 %v1039, %v1058
        %v1060 = vrcp.pop %v1053
        %v1061 = vmul.f32 %v1041, %v1060
        %v1062 = vpack.c.bf16 %v1057, %v1055
        %v1063 = vpack.c.bf16 %v1061, %v1059
        %1064 = vrot.lane.b32.xlu0 %v910, 64
        %v1065 = vpop.permute.xlu0 %1064
        %v1068 = vsel %vm1017, %v1062, 0
        %1070 = vmatprep.subr.bf16.mxu0 0
        %1071 = vmatpush1.bf16.msra.mxu0 %v1065
        %1072 = vmatprep.subr.bf16.mxu0 0
        %1073 = vmatpush1.bf16.msra.mxu0 0
        %1074 = vmatprep.subr.bf16.mxu0 0
        %1075 = vmatpush1.bf16.msra.mxu0 0
        %1076 = vmatprep.subr.bf16.mxu0 0
        %1077 = vmatpush1.bf16.msra.mxu0 0
        %1078 = vmatprep.subr.bf16.mxu0 0
        %1079 = vmatpush1.bf16.msra.mxu0 0
        %1080 = vmatprep.subr.bf16.mxu0 0
        %1081 = vmatpush1.bf16.msra.mxu0 0
        %1082 = vmatprep.subr.bf16.mxu0 0
        %1083 = vmatpush1.bf16.msra.mxu0 0
        %1084 = vmatprep.subr.bf16.mxu0 0
        %1085 = vmatpush1.bf16.msra.mxu0 0
        %1086 = vmatprep.subr.bf16.mxu0 0
        %1087 = vmatpush1.bf16.msra.mxu0 0
        %1088 = vmatprep.subr.bf16.mxu0 0
        %1089 = vmatpush1.bf16.msra.mxu0 0
        %1090 = vmatprep.subr.bf16.mxu0 0
        %1091 = vmatpush1.bf16.msra.mxu0 0
        %1092 = vmatprep.subr.bf16.mxu0 0
        %1093 = vmatpush1.bf16.msra.mxu0 0
        %1094 = vmatprep.subr.bf16.mxu0 0
        %1095 = vmatpush1.bf16.msra.mxu0 0
        %1096 = vmatprep.subr.bf16.mxu0 0
        %1097 = vmatpush1.bf16.msra.mxu0 0
        %1098 = vmatprep.subr.bf16.mxu0 0
        %1099 = vmatpush1.bf16.msra.mxu0 0
        %1100 = vmatprep.subr.bf16.mxu0 0
        %1101 = vmatpush1.bf16.msra.mxu0 0
        %1102 = vmatprep.mubr.bf16.mxu0 0
        %1103 = vmatmul.mubr.bf16.gmra.mrb[0].mxu0 %v1068
        %v1104 = vpop.f32.mrb[0].mxu0
        %v1105 = vadd.f32 0.0, %v1104
        %v1106 = vpop.f32.mrb[0].mxu0
        %v1107 = vpop.f32.mrb[0].mxu0
        %v1108 = vadd.f32 0.0, %v1107
        %v1109 = vpop.f32.mrb[0].mxu0
        %1110 = vdwg.mxu0
        %1111 = vrot.lane.b32.xlu0 %v911, 64
        %v1112 = vpop.permute.xlu0 %1111
        %v1115 = vsel %vm1017, %v1063, 0
        %1117 = vmatprep.subr.bf16.mxu0 0
        %1118 = vmatpush1.bf16.msra.mxu0 %v1112
        %1119 = vmatprep.subr.bf16.mxu0 0
        %1120 = vmatpush1.bf16.msra.mxu0 0
        %1121 = vmatprep.subr.bf16.mxu0 0
        %1122 = vmatpush1.bf16.msra.mxu0 0
        %1123 = vmatprep.subr.bf16.mxu0 0
        %1124 = vmatpush1.bf16.msra.mxu0 0
        %1125 = vmatprep.subr.bf16.mxu0 0
        %1126 = vmatpush1.bf16.msra.mxu0 0
        %1127 = vmatprep.subr.bf16.mxu0 0
        %1128 = vmatpush1.bf16.msra.mxu0 0
        %1129 = vmatprep.subr.bf16.mxu0 0
        %1130 = vmatpush1.bf16.msra.mxu0 0
        %1131 = vmatprep.subr.bf16.mxu0 0
        %1132 = vmatpush1.bf16.msra.mxu0 0
        %1133 = vmatprep.subr.bf16.mxu0 0
        %1134 = vmatpush1.bf16.msra.mxu0 0
        %1135 = vmatprep.subr.bf16.mxu0 0
        %1136 = vmatpush1.bf16.msra.mxu0 0
        %1137 = vmatprep.subr.bf16.mxu0 0
        %1138 = vmatpush1.bf16.msra.mxu0 0
        %1139 = vmatprep.subr.bf16.mxu0 0
        %1140 = vmatpush1.bf16.msra.mxu0 0
        %1141 = vmatprep.subr.bf16.mxu0 0
        %1142 = vmatpush1.bf16.msra.mxu0 0
        %1143 = vmatprep.subr.bf16.mxu0 0
        %1144 = vmatpush1.bf16.msra.mxu0 0
        %1145 = vmatprep.subr.bf16.mxu0 0
        %1146 = vmatpush1.bf16.msra.mxu0 0
        %1147 = vmatprep.subr.bf16.mxu0 0
        %1148 = vmatpush1.bf16.msra.mxu0 0
        %1149 = vmatprep.mubr.bf16.mxu0 0
        %1150 = vmatmul.mubr.bf16.gmra.mrb[0].mxu0 %v1115
        %v1151 = vpop.f32.mrb[0].mxu0
        %v1152 = vadd.f32 0.0, %v1151
        %v1153 = vpop.f32.mrb[0].mxu0
        %v1154 = vpop.f32.mrb[0].mxu0
        %v1155 = vadd.f32 0.0, %v1154
        %v1156 = vpop.f32.mrb[0].mxu0
        %1157 = vdwg.mxu0
        %1158 = vrot.lane.b32.xlu0 %v910, 120
        %v1159 = vpop.permute.xlu0 %1158
        %1160 = vrot.lane.b32.xlu0 %v910, 88
        %v1161 = vpop.permute.xlu0 %1160
        %v1163 = vsel %vm915, %v1159, 0
        %v1166 = vsel %vm915, %v1161, 0
        %1168 = vmatprep.subr.bf16.mxu0 0
        %1169 = vmatpush1.bf16.xpose.msra.mxu0 %v1166
        %1170 = vmatprep.subr.bf16.mxu0 0
        %1171 = vmatpush1.bf16.xpose.msra.mxu0 0
        %1172 = vmatprep.subr.bf16.mxu0 0
        %1173 = vmatpush1.bf16.xpose.msra.mxu0 0
        %1174 = vmatprep.subr.bf16.mxu0 0
        %1175 = vmatpush1.bf16.xpose.msra.mxu0 0
        %1176 = vmatprep.subr.bf16.mxu0 0
        %1177 = vmatpush1.bf16.xpose.msra.mxu0 0
        %1178 = vmatprep.subr.bf16.mxu0 0
        %1179 = vmatpush1.bf16.xpose.msra.mxu0 0
        %1180 = vmatprep.subr.bf16.mxu0 0
        %1181 = vmatpush1.bf16.xpose.msra.mxu0 0
        %1182 = vmatprep.subr.bf16.mxu0 0
        %1183 = vmatpush1.bf16.xpose.msra.mxu0 0
        %1184 = vmatprep.subr.bf16.mxu0 0
        %1185 = vmatpush1.bf16.xpose.msra.mxu0 0
        %1186 = vmatprep.subr.bf16.mxu0 0
        %1187 = vmatpush1.bf16.xpose.msra.mxu0 0
        %1188 = vmatprep.subr.bf16.mxu0 0
        %1189 = vmatpush1.bf16.xpose.msra.mxu0 0
        %1190 = vmatprep.subr.bf16.mxu0 0
        %1191 = vmatpush1.bf16.xpose.msra.mxu0 0
        %1192 = vmatprep.subr.bf16.mxu0 0
        %1193 = vmatpush1.bf16.xpose.msra.mxu0 0
        %1194 = vmatprep.subr.bf16.mxu0 0
        %1195 = vmatpush1.bf16.xpose.msra.mxu0 0
        %1196 = vmatprep.subr.bf16.mxu0 0
        %1197 = vmatpush1.bf16.xpose.msra.mxu0 0
        %1198 = vmatprep.subr.bf16.mxu0 0
        %1199 = vmatpush1.bf16.xpose.msra.mxu0 0
        %1200 = vmatprep.mubr.bf16.mxu0 0
        %1201 = vmatmul.mubr.bf16.gmra.mrb[0].mxu0 %v1163
        %v1202 = vpop.f32.mrb[0].mxu0
        %v1203 = vadd.f32 0.0, %v1202
        %v1204 = vpop.f32.mrb[0].mxu0
        %v1205 = vpop.f32.mrb[0].mxu0
        %v1206 = vadd.f32 0.0, %v1205
        %v1207 = vpop.f32.mrb[0].mxu0
        %1208 = vdwg.mxu0
        %1209 = vrot.lane.b32.xlu0 %v911, 120
        %v1210 = vpop.permute.xlu0 %1209
        %1211 = vrot.lane.b32.xlu0 %v911, 88
        %v1212 = vpop.permute.xlu0 %1211
        %v1214 = vsel %vm915, %v1210, 0
        %v1217 = vsel %vm915, %v1212, 0
        %1219 = vmatprep.subr.bf16.mxu0 0
        %1220 = vmatpush1.bf16.xpose.msra.mxu0 %v1217
        %1221 = vmatprep.subr.bf16.mxu0 0
        %1222 = vmatpush1.bf16.xpose.msra.mxu0 0
        %1223 = vmatprep.subr.bf16.mxu0 0
        %1224 = vmatpush1.bf16.xpose.msra.mxu0 0
        %1225 = vmatprep.subr.bf16.mxu0 0
        %1226 = vmatpush1.bf16.xpose.msra.mxu0 0
        %1227 = vmatprep.subr.bf16.mxu0 0
        %1228 = vmatpush1.bf16.xpose.msra.mxu0 0
        %1229 = vmatprep.subr.bf16.mxu0 0
        %1230 = vmatpush1.bf16.xpose.msra.mxu0 0
        %1231 = vmatprep.subr.bf16.mxu0 0
        %1232 = vmatpush1.bf16.xpose.msra.mxu0 0
        %1233 = vmatprep.subr.bf16.mxu0 0
        %1234 = vmatpush1.bf16.xpose.msra.mxu0 0
        %1235 = vmatprep.subr.bf16.mxu0 0
        %1236 = vmatpush1.bf16.xpose.msra.mxu0 0
        %1237 = vmatprep.subr.bf16.mxu0 0
        %1238 = vmatpush1.bf16.xpose.msra.mxu0 0
        %1239 = vmatprep.subr.bf16.mxu0 0
        %1240 = vmatpush1.bf16.xpose.msra.mxu0 0
        %1241 = vmatprep.subr.bf16.mxu0 0
        %1242 = vmatpush1.bf16.xpose.msra.mxu0 0
        %1243 = vmatprep.subr.bf16.mxu0 0
        %1244 = vmatpush1.bf16.xpose.msra.mxu0 0
        %1245 = vmatprep.subr.bf16.mxu0 0
        %1246 = vmatpush1.bf16.xpose.msra.mxu0 0
        %1247 = vmatprep.subr.bf16.mxu0 0
        %1248 = vmatpush1.bf16.xpose.msra.mxu0 0
        %1249 = vmatprep.subr.bf16.mxu0 0
        %1250 = vmatpush1.bf16.xpose.msra.mxu0 0
        %1251 = vmatprep.mubr.bf16.mxu0 0
        %1252 = vmatmul.mubr.bf16.gmra.mrb[0].mxu0 %v1214
        %v1253 = vpop.f32.mrb[0].mxu0
        %v1254 = vadd.f32 0.0, %v1253
        %v1255 = vpop.f32.mrb[0].mxu0
        %v1256 = vpop.f32.mrb[0].mxu0
        %v1257 = vadd.f32 0.0, %v1256
        %v1258 = vpop.f32.mrb[0].mxu0
        %1259 = vdwg.mxu0
        %v1260 = vmul.f32 %v1203, 0.35355338
        %v1261 = vmul.f32 %v1206, 0.35355338
        %v1262 = vmul.f32 %v1254, 0.35355338
        %v1263 = vmul.f32 %v1257, 0.35355338
        %v1264 = vsel %vm1017, %v1260, -inf
        %1265 = vmax.xlane.f32.xlu0 %v1264
        %v1266 = vpop.xlane.xlu0 %1265
        %v1267 = vsel %vm1017, %v1261, -inf
        %1268 = vmax.xlane.f32.xlu0 %v1267
        %v1269 = vpop.xlane.xlu0 %1268
        %v1270 = vsel %vm1017, %v1262, -inf
        %1271 = vmax.xlane.f32.xlu0 %v1270
        %v1272 = vpop.xlane.xlu0 %1271
        %v1273 = vsel %vm1017, %v1263, -inf
        %1274 = vmax.xlane.f32.xlu0 %v1273
        %v1275 = vpop.xlane.xlu0 %1274
        %v1276 = vsub.f32 %v1260, %v1266
        %v1277 = vsub.f32 %v1261, %v1269
        %v1278 = vsub.f32 %v1262, %v1272
        %v1279 = vsub.f32 %v1263, %v1275
        %v1280 = vmul.f32 %v1276, 1.442695
        %v1281 = vpow.pop %v1280
        %v1282 = vmul.f32 %v1277, 1.442695
        %v1283 = vpow.pop %v1282
        %v1284 = vmul.f32 %v1278, 1.442695
        %v1285 = vpow.pop %v1284
        %v1286 = vmul.f32 %v1279, 1.442695
        %v1287 = vpow.pop %v1286
        %v1288 = vsel %vm1017, %v1281, 0.0
        %1289 = vadd.xlane.f32.xlu0 %v1288
        %v1290 = vpop.xlane.xlu0 %1289
        %v1291 = vsel %vm1017, %v1283, 0.0
        %1292 = vadd.xlane.f32.xlu0 %v1291
        %v1293 = vpop.xlane.xlu0 %1292
        %v1294 = vsel %vm1017, %v1285, 0.0
        %1295 = vadd.xlane.f32.xlu0 %v1294
        %v1296 = vpop.xlane.xlu0 %1295
        %v1297 = vsel %vm1017, %v1287, 0.0
        %1298 = vadd.xlane.f32.xlu0 %v1297
        %v1299 = vpop.xlane.xlu0 %1298
        %v1300 = vrcp.pop %v1290
        %v1301 = vmul.f32 %v1281, %v1300
        %v1302 = vrcp.pop %v1293
        %v1303 = vmul.f32 %v1283, %v1302
        %v1304 = vrcp.pop %v1296
        %v1305 = vmul.f32 %v1285, %v1304
        %v1306 = vrcp.pop %v1299
        %v1307 = vmul.f32 %v1287, %v1306
        %v1308 = vpack.c.bf16 %v1303, %v1301
        %v1309 = vpack.c.bf16 %v1307, %v1305
        %1310 = vrot.lane.b32.xlu0 %v910, 56
        %v1311 = vpop.permute.xlu0 %1310
        %v1314 = vsel %vm1017, %v1308, 0
        %1316 = vmatprep.subr.bf16.mxu0 0
        %1317 = vmatpush1.bf16.msra.mxu0 %v1311
        %1318 = vmatprep.subr.bf16.mxu0 0
        %1319 = vmatpush1.bf16.msra.mxu0 0
        %1320 = vmatprep.subr.bf16.mxu0 0
        %1321 = vmatpush1.bf16.msra.mxu0 0
        %1322 = vmatprep.subr.bf16.mxu0 0
        %1323 = vmatpush1.bf16.msra.mxu0 0
        %1324 = vmatprep.subr.bf16.mxu0 0
        %1325 = vmatpush1.bf16.msra.mxu0 0
        %1326 = vmatprep.subr.bf16.mxu0 0
        %1327 = vmatpush1.bf16.msra.mxu0 0
        %1328 = vmatprep.subr.bf16.mxu0 0
        %1329 = vmatpush1.bf16.msra.mxu0 0
        %1330 = vmatprep.subr.bf16.mxu0 0
        %1331 = vmatpush1.bf16.msra.mxu0 0
        %1332 = vmatprep.subr.bf16.mxu0 0
        %1333 = vmatpush1.bf16.msra.mxu0 0
        %1334 = vmatprep.subr.bf16.mxu0 0
        %1335 = vmatpush1.bf16.msra.mxu0 0
        %1336 = vmatprep.subr.bf16.mxu0 0
        %1337 = vmatpush1.bf16.msra.mxu0 0
        %1338 = vmatprep.subr.bf16.mxu0 0
        %1339 = vmatpush1.bf16.msra.mxu0 0
        %1340 = vmatprep.subr.bf16.mxu0 0
        %1341 = vmatpush1.bf16.msra.mxu0 0
        %1342 = vmatprep.subr.bf16.mxu0 0
        %1343 = vmatpush1.bf16.msra.mxu0 0
        %1344 = vmatprep.subr.bf16.mxu0 0
        %1345 = vmatpush1.bf16.msra.mxu0 0
        %1346 = vmatprep.subr.bf16.mxu0 0
        %1347 = vmatpush1.bf16.msra.mxu0 0
        %1348 = vmatprep.mubr.bf16.mxu0 0
        %1349 = vmatmul.mubr.bf16.gmra.mrb[0].mxu0 %v1314
        %v1350 = vpop.f32.mrb[0].mxu0
        %v1351 = vadd.f32 0.0, %v1350
        %v1352 = vpop.f32.mrb[0].mxu0
        %v1353 = vpop.f32.mrb[0].mxu0
        %v1354 = vadd.f32 0.0, %v1353
        %v1355 = vpop.f32.mrb[0].mxu0
        %1356 = vdwg.mxu0
        %1357 = vrot.lane.b32.xlu0 %v911, 56
        %v1358 = vpop.permute.xlu0 %1357
        %v1361 = vsel %vm1017, %v1309, 0
        %1363 = vmatprep.subr.bf16.mxu0 0
        %1364 = vmatpush1.bf16.msra.mxu0 %v1358
        %1365 = vmatprep.subr.bf16.mxu0 0
        %1366 = vmatpush1.bf16.msra.mxu0 0
        %1367 = vmatprep.subr.bf16.mxu0 0
        %1368 = vmatpush1.bf16.msra.mxu0 0
        %1369 = vmatprep.subr.bf16.mxu0 0
        %1370 = vmatpush1.bf16.msra.mxu0 0
        %1371 = vmatprep.subr.bf16.mxu0 0
        %1372 = vmatpush1.bf16.msra.mxu0 0
        %1373 = vmatprep.subr.bf16.mxu0 0
        %1374 = vmatpush1.bf16.msra.mxu0 0
        %1375 = vmatprep.subr.bf16.mxu0 0
        %1376 = vmatpush1.bf16.msra.mxu0 0
        %1377 = vmatprep.subr.bf16.mxu0 0
        %1378 = vmatpush1.bf16.msra.mxu0 0
        %1379 = vmatprep.subr.bf16.mxu0 0
        %1380 = vmatpush1.bf16.msra.mxu0 0
        %1381 = vmatprep.subr.bf16.mxu0 0
        %1382 = vmatpush1.bf16.msra.mxu0 0
        %1383 = vmatprep.subr.bf16.mxu0 0
        %1384 = vmatpush1.bf16.msra.mxu0 0
        %1385 = vmatprep.subr.bf16.mxu0 0
        %1386 = vmatpush1.bf16.msra.mxu0 0
        %1387 = vmatprep.subr.bf16.mxu0 0
        %1388 = vmatpush1.bf16.msra.mxu0 0
        %1389 = vmatprep.subr.bf16.mxu0 0
        %1390 = vmatpush1.bf16.msra.mxu0 0
        %1391 = vmatprep.subr.bf16.mxu0 0
        %1392 = vmatpush1.bf16.msra.mxu0 0
        %1393 = vmatprep.subr.bf16.mxu0 0
        %1394 = vmatpush1.bf16.msra.mxu0 0
        %1395 = vmatprep.mubr.bf16.mxu0 0
        %1396 = vmatmul.mubr.bf16.gmra.mrb[0].mxu0 %v1361
        %v1397 = vpop.f32.mrb[0].mxu0
        %v1398 = vadd.f32 0.0, %v1397
        %v1399 = vpop.f32.mrb[0].mxu0
        %v1400 = vpop.f32.mrb[0].mxu0
        %v1401 = vadd.f32 0.0, %v1400
        %v1402 = vpop.f32.mrb[0].mxu0
        %1403 = vdwg.mxu0
        %1404 = vrot.lane.b32.xlu0 %v910, 112
        %v1405 = vpop.permute.xlu0 %1404
        %1406 = vrot.lane.b32.xlu0 %v910, 80
        %v1407 = vpop.permute.xlu0 %1406
        %v1409 = vsel %vm915, %v1405, 0
        %v1412 = vsel %vm915, %v1407, 0
        %1414 = vmatprep.subr.bf16.mxu0 0
        %1415 = vmatpush1.bf16.xpose.msra.mxu0 %v1412
        %1416 = vmatprep.subr.bf16.mxu0 0
        %1417 = vmatpush1.bf16.xpose.msra.mxu0 0
        %1418 = vmatprep.subr.bf16.mxu0 0
        %1419 = vmatpush1.bf16.xpose.msra.mxu0 0
        %1420 = vmatprep.subr.bf16.mxu0 0
        %1421 = vmatpush1.bf16.xpose.msra.mxu0 0
        %1422 = vmatprep.subr.bf16.mxu0 0
        %1423 = vmatpush1.bf16.xpose.msra.mxu0 0
        %1424 = vmatprep.subr.bf16.mxu0 0
        %1425 = vmatpush1.bf16.xpose.msra.mxu0 0
        %1426 = vmatprep.subr.bf16.mxu0 0
        %1427 = vmatpush1.bf16.xpose.msra.mxu0 0
        %1428 = vmatprep.subr.bf16.mxu0 0
        %1429 = vmatpush1.bf16.xpose.msra.mxu0 0
        %1430 = vmatprep.subr.bf16.mxu0 0
        %1431 = vmatpush1.bf16.xpose.msra.mxu0 0
        %1432 = vmatprep.subr.bf16.mxu0 0
        %1433 = vmatpush1.bf16.xpose.msra.mxu0 0
        %1434 = vmatprep.subr.bf16.mxu0 0
        %1435 = vmatpush1.bf16.xpose.msra.mxu0 0
        %1436 = vmatprep.subr.bf16.mxu0 0
        %1437 = vmatpush1.bf16.xpose.msra.mxu0 0
        %1438 = vmatprep.subr.bf16.mxu0 0
        %1439 = vmatpush1.bf16.xpose.msra.mxu0 0
        %1440 = vmatprep.subr.bf16.mxu0 0
        %1441 = vmatpush1.bf16.xpose.msra.mxu0 0
        %1442 = vmatprep.subr.bf16.mxu0 0
        %1443 = vmatpush1.bf16.xpose.msra.mxu0 0
        %1444 = vmatprep.subr.bf16.mxu0 0
        %1445 = vmatpush1.bf16.xpose.msra.mxu0 0
        %1446 = vmatprep.mubr.bf16.mxu0 0
        %1447 = vmatmul.mubr.bf16.gmra.mrb[0].mxu0 %v1409
        %v1448 = vpop.f32.mrb[0].mxu0
        %v1449 = vadd.f32 0.0, %v1448
        %v1450 = vpop.f32.mrb[0].mxu0
        %v1451 = vpop.f32.mrb[0].mxu0
        %v1452 = vadd.f32 0.0, %v1451
        %v1453 = vpop.f32.mrb[0].mxu0
        %1454 = vdwg.mxu0
        %1455 = vrot.lane.b32.xlu0 %v911, 112
        %v1456 = vpop.permute.xlu0 %1455
        %1457 = vrot.lane.b32.xlu0 %v911, 80
        %v1458 = vpop.permute.xlu0 %1457
        %v1460 = vsel %vm915, %v1456, 0
        %v1463 = vsel %vm915, %v1458, 0
        %1465 = vmatprep.subr.bf16.mxu0 0
        %1466 = vmatpush1.bf16.xpose.msra.mxu0 %v1463
        %1467 = vmatprep.subr.bf16.mxu0 0
        %1468 = vmatpush1.bf16.xpose.msra.mxu0 0
        %1469 = vmatprep.subr.bf16.mxu0 0
        %1470 = vmatpush1.bf16.xpose.msra.mxu0 0
        %1471 = vmatprep.subr.bf16.mxu0 0
        %1472 = vmatpush1.bf16.xpose.msra.mxu0 0
        %1473 = vmatprep.subr.bf16.mxu0 0
        %1474 = vmatpush1.bf16.xpose.msra.mxu0 0
        %1475 = vmatprep.subr.bf16.mxu0 0
        %1476 = vmatpush1.bf16.xpose.msra.mxu0 0
        %1477 = vmatprep.subr.bf16.mxu0 0
        %1478 = vmatpush1.bf16.xpose.msra.mxu0 0
        %1479 = vmatprep.subr.bf16.mxu0 0
        %1480 = vmatpush1.bf16.xpose.msra.mxu0 0
        %1481 = vmatprep.subr.bf16.mxu0 0
        %1482 = vmatpush1.bf16.xpose.msra.mxu0 0
        %1483 = vmatprep.subr.bf16.mxu0 0
        %1484 = vmatpush1.bf16.xpose.msra.mxu0 0
        %1485 = vmatprep.subr.bf16.mxu0 0
        %1486 = vmatpush1.bf16.xpose.msra.mxu0 0
        %1487 = vmatprep.subr.bf16.mxu0 0
        %1488 = vmatpush1.bf16.xpose.msra.mxu0 0
        %1489 = vmatprep.subr.bf16.mxu0 0
        %1490 = vmatpush1.bf16.xpose.msra.mxu0 0
        %1491 = vmatprep.subr.bf16.mxu0 0
        %1492 = vmatpush1.bf16.xpose.msra.mxu0 0
        %1493 = vmatprep.subr.bf16.mxu0 0
        %1494 = vmatpush1.bf16.xpose.msra.mxu0 0
        %1495 = vmatprep.subr.bf16.mxu0 0
        %1496 = vmatpush1.bf16.xpose.msra.mxu0 0
        %1497 = vmatprep.mubr.bf16.mxu0 0
        %1498 = vmatmul.mubr.bf16.gmra.mrb[0].mxu0 %v1460
        %v1499 = vpop.f32.mrb[0].mxu0
        %v1500 = vadd.f32 0.0, %v1499
        %v1501 = vpop.f32.mrb[0].mxu0
        %v1502 = vpop.f32.mrb[0].mxu0
        %v1503 = vadd.f32 0.0, %v1502
        %v1504 = vpop.f32.mrb[0].mxu0
        %1505 = vdwg.mxu0
        %v1506 = vmul.f32 %v1449, 0.35355338
        %v1507 = vmul.f32 %v1452, 0.35355338
        %v1508 = vmul.f32 %v1500, 0.35355338
        %v1509 = vmul.f32 %v1503, 0.35355338
        %v1510 = vsel %vm1017, %v1506, -inf
        %1511 = vmax.xlane.f32.xlu0 %v1510
        %v1512 = vpop.xlane.xlu0 %1511
        %v1513 = vsel %vm1017, %v1507, -inf
        %1514 = vmax.xlane.f32.xlu0 %v1513
        %v1515 = vpop.xlane.xlu0 %1514
        %v1516 = vsel %vm1017, %v1508, -inf
        %1517 = vmax.xlane.f32.xlu0 %v1516
        %v1518 = vpop.xlane.xlu0 %1517
        %v1519 = vsel %vm1017, %v1509, -inf
        %1520 = vmax.xlane.f32.xlu0 %v1519
        %v1521 = vpop.xlane.xlu0 %1520
        %v1522 = vsub.f32 %v1506, %v1512
        %v1523 = vsub.f32 %v1507, %v1515
        %v1524 = vsub.f32 %v1508, %v1518
        %v1525 = vsub.f32 %v1509, %v1521
        %v1526 = vmul.f32 %v1522, 1.442695
        %v1527 = vpow.pop %v1526
        %v1528 = vmul.f32 %v1523, 1.442695
        %v1529 = vpow.pop %v1528
        %v1530 = vmul.f32 %v1524, 1.442695
        %v1531 = vpow.pop %v1530
        %v1532 = vmul.f32 %v1525, 1.442695
        %v1533 = vpow.pop %v1532
        %v1534 = vsel %vm1017, %v1527, 0.0
        %1535 = vadd.xlane.f32.xlu0 %v1534
        %v1536 = vpop.xlane.xlu0 %1535
        %v1537 = vsel %vm1017, %v1529, 0.0
        %1538 = vadd.xlane.f32.xlu0 %v1537
        %v1539 = vpop.xlane.xlu0 %1538
        %v1540 = vsel %vm1017, %v1531, 0.0
        %1541 = vadd.xlane.f32.xlu0 %v1540
        %v1542 = vpop.xlane.xlu0 %1541
        %v1543 = vsel %vm1017, %v1533, 0.0
        %1544 = vadd.xlane.f32.xlu0 %v1543
        %v1545 = vpop.xlane.xlu0 %1544
        %v1546 = vrcp.pop %v1536
        %v1547 = vmul.f32 %v1527, %v1546
        %v1548 = vrcp.pop %v1539
        %v1549 = vmul.f32 %v1529, %v1548
        %v1550 = vrcp.pop %v1542
        %v1551 = vmul.f32 %v1531, %v1550
        %v1552 = vrcp.pop %v1545
        %v1553 = vmul.f32 %v1533, %v1552
        %v1554 = vpack.c.bf16 %v1549, %v1547
        %v1555 = vpack.c.bf16 %v1553, %v1551
        %1556 = vrot.lane.b32.xlu0 %v910, 48
        %v1557 = vpop.permute.xlu0 %1556
        %v1560 = vsel %vm1017, %v1554, 0
        %1562 = vmatprep.subr.bf16.mxu0 0
        %1563 = vmatpush1.bf16.msra.mxu0 %v1557
        %1564 = vmatprep.subr.bf16.mxu0 0
        %1565 = vmatpush1.bf16.msra.mxu0 0
        %1566 = vmatprep.subr.bf16.mxu0 0
        %1567 = vmatpush1.bf16.msra.mxu0 0
        %1568 = vmatprep.subr.bf16.mxu0 0
        %1569 = vmatpush1.bf16.msra.mxu0 0
        %1570 = vmatprep.subr.bf16.mxu0 0
        %1571 = vmatpush1.bf16.msra.mxu0 0
        %1572 = vmatprep.subr.bf16.mxu0 0
        %1573 = vmatpush1.bf16.msra.mxu0 0
        %1574 = vmatprep.subr.bf16.mxu0 0
        %1575 = vmatpush1.bf16.msra.mxu0 0
        %1576 = vmatprep.subr.bf16.mxu0 0
        %1577 = vmatpush1.bf16.msra.mxu0 0
        %1578 = vmatprep.subr.bf16.mxu0 0
        %1579 = vmatpush1.bf16.msra.mxu0 0
        %1580 = vmatprep.subr.bf16.mxu0 0
        %1581 = vmatpush1.bf16.msra.mxu0 0
        %1582 = vmatprep.subr.bf16.mxu0 0
        %1583 = vmatpush1.bf16.msra.mxu0 0
        %1584 = vmatprep.subr.bf16.mxu0 0
        %1585 = vmatpush1.bf16.msra.mxu0 0
        %1586 = vmatprep.subr.bf16.mxu0 0
        %1587 = vmatpush1.bf16.msra.mxu0 0
        %1588 = vmatprep.subr.bf16.mxu0 0
        %1589 = vmatpush1.bf16.msra.mxu0 0
        %1590 = vmatprep.subr.bf16.mxu0 0
        %1591 = vmatpush1.bf16.msra.mxu0 0
        %1592 = vmatprep.subr.bf16.mxu0 0
        %1593 = vmatpush1.bf16.msra.mxu0 0
        %1594 = vmatprep.mubr.bf16.mxu0 0
        %1595 = vmatmul.mubr.bf16.gmra.mrb[0].mxu0 %v1560
        %v1596 = vpop.f32.mrb[0].mxu0
        %v1597 = vadd.f32 0.0, %v1596
        %v1598 = vpop.f32.mrb[0].mxu0
        %v1599 = vpop.f32.mrb[0].mxu0
        %v1600 = vadd.f32 0.0, %v1599
        %v1601 = vpop.f32.mrb[0].mxu0
        %1602 = vdwg.mxu0
        %1603 = vrot.lane.b32.xlu0 %v911, 48
        %v1604 = vpop.permute.xlu0 %1603
        %v1607 = vsel %vm1017, %v1555, 0
        %1609 = vmatprep.subr.bf16.mxu0 0
        %1610 = vmatpush1.bf16.msra.mxu0 %v1604
        %1611 = vmatprep.subr.bf16.mxu0 0
        %1612 = vmatpush1.bf16.msra.mxu0 0
        %1613 = vmatprep.subr.bf16.mxu0 0
        %1614 = vmatpush1.bf16.msra.mxu0 0
        %1615 = vmatprep.subr.bf16.mxu0 0
        %1616 = vmatpush1.bf16.msra.mxu0 0
        %1617 = vmatprep.subr.bf16.mxu0 0
        %1618 = vmatpush1.bf16.msra.mxu0 0
        %1619 = vmatprep.subr.bf16.mxu0 0
        %1620 = vmatpush1.bf16.msra.mxu0 0
        %1621 = vmatprep.subr.bf16.mxu0 0
        %1622 = vmatpush1.bf16.msra.mxu0 0
        %1623 = vmatprep.subr.bf16.mxu0 0
        %1624 = vmatpush1.bf16.msra.mxu0 0
        %1625 = vmatprep.subr.bf16.mxu0 0
        %1626 = vmatpush1.bf16.msra.mxu0 0
        %1627 = vmatprep.subr.bf16.mxu0 0
        %1628 = vmatpush1.bf16.msra.mxu0 0
        %1629 = vmatprep.subr.bf16.mxu0 0
        %1630 = vmatpush1.bf16.msra.mxu0 0
        %1631 = vmatprep.subr.bf16.mxu0 0
        %1632 = vmatpush1.bf16.msra.mxu0 0
        %1633 = vmatprep.subr.bf16.mxu0 0
        %1634 = vmatpush1.bf16.msra.mxu0 0
        %1635 = vmatprep.subr.bf16.mxu0 0
        %1636 = vmatpush1.bf16.msra.mxu0 0
        %1637 = vmatprep.subr.bf16.mxu0 0
        %1638 = vmatpush1.bf16.msra.mxu0 0
        %1639 = vmatprep.subr.bf16.mxu0 0
        %1640 = vmatpush1.bf16.msra.mxu0 0
        %1641 = vmatprep.mubr.bf16.mxu0 0
        %1642 = vmatmul.mubr.bf16.gmra.mrb[0].mxu0 %v1607
        %v1643 = vpop.f32.mrb[0].mxu0
        %v1644 = vadd.f32 0.0, %v1643
        %v1645 = vpop.f32.mrb[0].mxu0
        %v1646 = vpop.f32.mrb[0].mxu0
        %v1647 = vadd.f32 0.0, %v1646
        %v1648 = vpop.f32.mrb[0].mxu0
        %1649 = vdwg.mxu0
        %1650 = vrot.lane.b32.xlu0 %v910, 104
        %v1651 = vpop.permute.xlu0 %1650
        %1652 = vrot.lane.b32.xlu0 %v910, 72
        %v1653 = vpop.permute.xlu0 %1652
        %v1655 = vsel %vm915, %v1651, 0
        %v1658 = vsel %vm915, %v1653, 0
        %1660 = vmatprep.subr.bf16.mxu0 0
        %1661 = vmatpush1.bf16.xpose.msra.mxu0 %v1658
        %1662 = vmatprep.subr.bf16.mxu0 0
        %1663 = vmatpush1.bf16.xpose.msra.mxu0 0
        %1664 = vmatprep.subr.bf16.mxu0 0
        %1665 = vmatpush1.bf16.xpose.msra.mxu0 0
        %1666 = vmatprep.subr.bf16.mxu0 0
        %1667 = vmatpush1.bf16.xpose.msra.mxu0 0
        %1668 = vmatprep.subr.bf16.mxu0 0
        %1669 = vmatpush1.bf16.xpose.msra.mxu0 0
        %1670 = vmatprep.subr.bf16.mxu0 0
        %1671 = vmatpush1.bf16.xpose.msra.mxu0 0
        %1672 = vmatprep.subr.bf16.mxu0 0
        %1673 = vmatpush1.bf16.xpose.msra.mxu0 0
        %1674 = vmatprep.subr.bf16.mxu0 0
        %1675 = vmatpush1.bf16.xpose.msra.mxu0 0
        %1676 = vmatprep.subr.bf16.mxu0 0
        %1677 = vmatpush1.bf16.xpose.msra.mxu0 0
        %1678 = vmatprep.subr.bf16.mxu0 0
        %1679 = vmatpush1.bf16.xpose.msra.mxu0 0
        %1680 = vmatprep.subr.bf16.mxu0 0
        %1681 = vmatpush1.bf16.xpose.msra.mxu0 0
        %1682 = vmatprep.subr.bf16.mxu0 0
        %1683 = vmatpush1.bf16.xpose.msra.mxu0 0
        %1684 = vmatprep.subr.bf16.mxu0 0
        %1685 = vmatpush1.bf16.xpose.msra.mxu0 0
        %1686 = vmatprep.subr.bf16.mxu0 0
        %1687 = vmatpush1.bf16.xpose.msra.mxu0 0
        %1688 = vmatprep.subr.bf16.mxu0 0
        %1689 = vmatpush1.bf16.xpose.msra.mxu0 0
        %1690 = vmatprep.subr.bf16.mxu0 0
        %1691 = vmatpush1.bf16.xpose.msra.mxu0 0
        %1692 = vmatprep.mubr.bf16.mxu0 0
        %1693 = vmatmul.mubr.bf16.gmra.mrb[0].mxu0 %v1655
        %v1694 = vpop.f32.mrb[0].mxu0
        %v1695 = vadd.f32 0.0, %v1694
        %v1696 = vpop.f32.mrb[0].mxu0
        %v1697 = vpop.f32.mrb[0].mxu0
        %v1698 = vadd.f32 0.0, %v1697
        %v1699 = vpop.f32.mrb[0].mxu0
        %1700 = vdwg.mxu0
        %1701 = vrot.lane.b32.xlu0 %v911, 104
        %v1702 = vpop.permute.xlu0 %1701
        %1703 = vrot.lane.b32.xlu0 %v911, 72
        %v1704 = vpop.permute.xlu0 %1703
        %v1706 = vsel %vm915, %v1702, 0
        %v1709 = vsel %vm915, %v1704, 0
        %1711 = vmatprep.subr.bf16.mxu0 0
        %1712 = vmatpush1.bf16.xpose.msra.mxu0 %v1709
        %1713 = vmatprep.subr.bf16.mxu0 0
        %1714 = vmatpush1.bf16.xpose.msra.mxu0 0
        %1715 = vmatprep.subr.bf16.mxu0 0
        %1716 = vmatpush1.bf16.xpose.msra.mxu0 0
        %1717 = vmatprep.subr.bf16.mxu0 0
        %1718 = vmatpush1.bf16.xpose.msra.mxu0 0
        %1719 = vmatprep.subr.bf16.mxu0 0
        %1720 = vmatpush1.bf16.xpose.msra.mxu0 0
        %1721 = vmatprep.subr.bf16.mxu0 0
        %1722 = vmatpush1.bf16.xpose.msra.mxu0 0
        %1723 = vmatprep.subr.bf16.mxu0 0
        %1724 = vmatpush1.bf16.xpose.msra.mxu0 0
        %1725 = vmatprep.subr.bf16.mxu0 0
        %1726 = vmatpush1.bf16.xpose.msra.mxu0 0
        %1727 = vmatprep.subr.bf16.mxu0 0
        %1728 = vmatpush1.bf16.xpose.msra.mxu0 0
        %1729 = vmatprep.subr.bf16.mxu0 0
        %1730 = vmatpush1.bf16.xpose.msra.mxu0 0
        %1731 = vmatprep.subr.bf16.mxu0 0
        %1732 = vmatpush1.bf16.xpose.msra.mxu0 0
        %1733 = vmatprep.subr.bf16.mxu0 0
        %1734 = vmatpush1.bf16.xpose.msra.mxu0 0
        %1735 = vmatprep.subr.bf16.mxu0 0
        %1736 = vmatpush1.bf16.xpose.msra.mxu0 0
        %1737 = vmatprep.subr.bf16.mxu0 0
        %1738 = vmatpush1.bf16.xpose.msra.mxu0 0
        %1739 = vmatprep.subr.bf16.mxu0 0
        %1740 = vmatpush1.bf16.xpose.msra.mxu0 0
        %1741 = vmatprep.subr.bf16.mxu0 0
        %1742 = vmatpush1.bf16.xpose.msra.mxu0 0
        %1743 = vmatprep.mubr.bf16.mxu0 0
        %1744 = vmatmul.mubr.bf16.gmra.mrb[0].mxu0 %v1706
        %v1745 = vpop.f32.mrb[0].mxu0
        %v1746 = vadd.f32 0.0, %v1745
        %v1747 = vpop.f32.mrb[0].mxu0
        %v1748 = vpop.f32.mrb[0].mxu0
        %v1749 = vadd.f32 0.0, %v1748
        %v1750 = vpop.f32.mrb[0].mxu0
        %1751 = vdwg.mxu0
        %v1752 = vmul.f32 %v1695, 0.35355338
        %v1753 = vmul.f32 %v1698, 0.35355338
        %v1754 = vmul.f32 %v1746, 0.35355338
        %v1755 = vmul.f32 %v1749, 0.35355338
        %v1756 = vsel %vm1017, %v1752, -inf
        %1757 = vmax.xlane.f32.xlu0 %v1756
        %v1758 = vpop.xlane.xlu0 %1757
        %v1759 = vsel %vm1017, %v1753, -inf
        %1760 = vmax.xlane.f32.xlu0 %v1759
        %v1761 = vpop.xlane.xlu0 %1760
        %v1762 = vsel %vm1017, %v1754, -inf
        %1763 = vmax.xlane.f32.xlu0 %v1762
        %v1764 = vpop.xlane.xlu0 %1763
        %v1765 = vsel %vm1017, %v1755, -inf
        %1766 = vmax.xlane.f32.xlu0 %v1765
        %v1767 = vpop.xlane.xlu0 %1766
        %v1768 = vsub.f32 %v1752, %v1758
        %v1769 = vsub.f32 %v1753, %v1761
        %v1770 = vsub.f32 %v1754, %v1764
        %v1771 = vsub.f32 %v1755, %v1767
        %v1772 = vmul.f32 %v1768, 1.442695
        %v1773 = vpow.pop %v1772
        %v1774 = vmul.f32 %v1769, 1.442695
        %v1775 = vpow.pop %v1774
        %v1776 = vmul.f32 %v1770, 1.442695
        %v1777 = vpow.pop %v1776
        %v1778 = vmul.f32 %v1771, 1.442695
        %v1779 = vpow.pop %v1778
        %v1780 = vsel %vm1017, %v1773, 0.0
        %1781 = vadd.xlane.f32.xlu0 %v1780
        %v1782 = vpop.xlane.xlu0 %1781
        %v1783 = vsel %vm1017, %v1775, 0.0
        %1784 = vadd.xlane.f32.xlu0 %v1783
        %v1785 = vpop.xlane.xlu0 %1784
        %v1786 = vsel %vm1017, %v1777, 0.0
        %1787 = vadd.xlane.f32.xlu0 %v1786
        %v1788 = vpop.xlane.xlu0 %1787
        %v1789 = vsel %vm1017, %v1779, 0.0
        %1790 = vadd.xlane.f32.xlu0 %v1789
        %v1791 = vpop.xlane.xlu0 %1790
        %v1792 = vrcp.pop %v1782
        %v1793 = vmul.f32 %v1773, %v1792
        %v1794 = vrcp.pop %v1785
        %v1795 = vmul.f32 %v1775, %v1794
        %v1796 = vrcp.pop %v1788
        %v1797 = vmul.f32 %v1777, %v1796
        %v1798 = vrcp.pop %v1791
        %v1799 = vmul.f32 %v1779, %v1798
        %v1800 = vpack.c.bf16 %v1795, %v1793
        %v1801 = vpack.c.bf16 %v1799, %v1797
        %1802 = vrot.lane.b32.xlu0 %v910, 40
        %v1803 = vpop.permute.xlu0 %1802
        %v1806 = vsel %vm1017, %v1800, 0
        %1808 = vmatprep.subr.bf16.mxu0 0
        %1809 = vmatpush1.bf16.msra.mxu0 %v1803
        %1810 = vmatprep.subr.bf16.mxu0 0
        %1811 = vmatpush1.bf16.msra.mxu0 0
        %1812 = vmatprep.subr.bf16.mxu0 0
        %1813 = vmatpush1.bf16.msra.mxu0 0
        %1814 = vmatprep.subr.bf16.mxu0 0
        %1815 = vmatpush1.bf16.msra.mxu0 0
        %1816 = vmatprep.subr.bf16.mxu0 0
        %1817 = vmatpush1.bf16.msra.mxu0 0
        %1818 = vmatprep.subr.bf16.mxu0 0
        %1819 = vmatpush1.bf16.msra.mxu0 0
        %1820 = vmatprep.subr.bf16.mxu0 0
        %1821 = vmatpush1.bf16.msra.mxu0 0
        %1822 = vmatprep.subr.bf16.mxu0 0
        %1823 = vmatpush1.bf16.msra.mxu0 0
        %1824 = vmatprep.subr.bf16.mxu0 0
        %1825 = vmatpush1.bf16.msra.mxu0 0
        %1826 = vmatprep.subr.bf16.mxu0 0
        %1827 = vmatpush1.bf16.msra.mxu0 0
        %1828 = vmatprep.subr.bf16.mxu0 0
        %1829 = vmatpush1.bf16.msra.mxu0 0
        %1830 = vmatprep.subr.bf16.mxu0 0
        %1831 = vmatpush1.bf16.msra.mxu0 0
        %1832 = vmatprep.subr.bf16.mxu0 0
        %1833 = vmatpush1.bf16.msra.mxu0 0
        %1834 = vmatprep.subr.bf16.mxu0 0
        %1835 = vmatpush1.bf16.msra.mxu0 0
        %1836 = vmatprep.subr.bf16.mxu0 0
        %1837 = vmatpush1.bf16.msra.mxu0 0
        %1838 = vmatprep.subr.bf16.mxu0 0
        %1839 = vmatpush1.bf16.msra.mxu0 0
        %1840 = vmatprep.mubr.bf16.mxu0 0
        %1841 = vmatmul.mubr.bf16.gmra.mrb[0].mxu0 %v1806
        %v1842 = vpop.f32.mrb[0].mxu0
        %v1843 = vadd.f32 0.0, %v1842
        %v1844 = vpop.f32.mrb[0].mxu0
        %v1845 = vpop.f32.mrb[0].mxu0
        %v1846 = vadd.f32 0.0, %v1845
        %v1847 = vpop.f32.mrb[0].mxu0
        %1848 = vdwg.mxu0
        %1849 = vrot.lane.b32.xlu0 %v911, 40
        %v1850 = vpop.permute.xlu0 %1849
        %v1853 = vsel %vm1017, %v1801, 0
        %1855 = vmatprep.subr.bf16.mxu0 0
        %1856 = vmatpush1.bf16.msra.mxu0 %v1850
        %1857 = vmatprep.subr.bf16.mxu0 0
        %1858 = vmatpush1.bf16.msra.mxu0 0
        %1859 = vmatprep.subr.bf16.mxu0 0
        %1860 = vmatpush1.bf16.msra.mxu0 0
        %1861 = vmatprep.subr.bf16.mxu0 0
        %1862 = vmatpush1.bf16.msra.mxu0 0
        %1863 = vmatprep.subr.bf16.mxu0 0
        %1864 = vmatpush1.bf16.msra.mxu0 0
        %1865 = vmatprep.subr.bf16.mxu0 0
        %1866 = vmatpush1.bf16.msra.mxu0 0
        %1867 = vmatprep.subr.bf16.mxu0 0
        %1868 = vmatpush1.bf16.msra.mxu0 0
        %1869 = vmatprep.subr.bf16.mxu0 0
        %1870 = vmatpush1.bf16.msra.mxu0 0
        %1871 = vmatprep.subr.bf16.mxu0 0
        %1872 = vmatpush1.bf16.msra.mxu0 0
        %1873 = vmatprep.subr.bf16.mxu0 0
        %1874 = vmatpush1.bf16.msra.mxu0 0
        %1875 = vmatprep.subr.bf16.mxu0 0
        %1876 = vmatpush1.bf16.msra.mxu0 0
        %1877 = vmatprep.subr.bf16.mxu0 0
        %1878 = vmatpush1.bf16.msra.mxu0 0
        %1879 = vmatprep.subr.bf16.mxu0 0
        %1880 = vmatpush1.bf16.msra.mxu0 0
        %1881 = vmatprep.subr.bf16.mxu0 0
        %1882 = vmatpush1.bf16.msra.mxu0 0
        %1883 = vmatprep.subr.bf16.mxu0 0
        %1884 = vmatpush1.bf16.msra.mxu0 0
        %1885 = vmatprep.subr.bf16.mxu0 0
        %1886 = vmatpush1.bf16.msra.mxu0 0
        %1887 = vmatprep.mubr.bf16.mxu0 0
        %1888 = vmatmul.mubr.bf16.gmra.mrb[0].mxu0 %v1853
        %v1889 = vpop.f32.mrb[0].mxu0
        %v1890 = vadd.f32 0.0, %v1889
        %v1891 = vpop.f32.mrb[0].mxu0
        %v1892 = vpop.f32.mrb[0].mxu0
        %v1893 = vadd.f32 0.0, %v1892
        %v1894 = vpop.f32.mrb[0].mxu0
        %1895 = vdwg.mxu0
        %1900 = vrot.lane.b32.xlu0 %v1351, 8
        %v1901 = vpop.permute.xlu0 %1900
        %1902 = vrot.lane.b32.xlu0 %v1354, 8
        %v1903 = vpop.permute.xlu0 %1902
        %1904 = vrot.lane.b32.xlu0 %v1398, 8
        %v1905 = vpop.permute.xlu0 %1904
        %1906 = vrot.lane.b32.xlu0 %v1401, 8
        %v1907 = vpop.permute.xlu0 %1906
        %1916 = vrot.lane.b32.xlu0 %v1597, 16
        %v1917 = vpop.permute.xlu0 %1916
        %1918 = vrot.lane.b32.xlu0 %v1600, 16
        %v1919 = vpop.permute.xlu0 %1918
        %1920 = vrot.lane.b32.xlu0 %v1644, 16
        %v1921 = vpop.permute.xlu0 %1920
        %1922 = vrot.lane.b32.xlu0 %v1647, 16
        %v1923 = vpop.permute.xlu0 %1922
        %1932 = vrot.lane.b32.xlu0 %v1843, 24
        %v1933 = vpop.permute.xlu0 %1932
        %1934 = vrot.lane.b32.xlu0 %v1846, 24
        %v1935 = vpop.permute.xlu0 %1934
        %1936 = vrot.lane.b32.xlu0 %v1890, 24
        %v1937 = vpop.permute.xlu0 %1936
        %1938 = vrot.lane.b32.xlu0 %v1893, 24
        %v1939 = vpop.permute.xlu0 %1938
        %v1944 = vsel %vm915, %v1105, %v1901
        %v1945 = vsel %vm915, %v1108, %v1903
        %v1946 = vsel %vm915, %v1152, %v1905
        %v1947 = vsel %vm915, %v1155, %v1907
        %v1948 = vsel %vm1017, %v1944, %v1917
        %v1949 = vsel %vm1017, %v1945, %v1919
        %v1950 = vsel %vm1017, %v1946, %v1921
        %v1951 = vsel %vm1017, %v1947, %v1923
        %vm1952 = vcmask 195584
        %v1953 = vsel %vm1952, %v1948, %v1933
        %v1954 = vsel %vm1952, %v1949, %v1935
        %v1955 = vsel %vm1952, %v1950, %v1937
        %v1956 = vsel %vm1952, %v1951, %v1939
        %v1957 = vpack.c.bf16 %v1954, %v1953
        %v1958 = vpack.c.bf16 %v1956, %v1955
        %s1959 = smul.addr %s827, 4
        %s1960 = scalar_lea.vmem %s8, %s1959
        %v1961 = vld [vmem:[%s1960] sm:$0xf]
        %v1962 = vld [vmem:[%s1960 + $0x4] sm:$0xf]
        %v1963 = vld [vmem:[%s1960 + $0x8] sm:$0xf]
        %v1964 = vld [vmem:[%s1960 + $0xc] sm:$0xf]
        %s1965 = scalar_lea.vmem %s9, %s40
        %v1966 = vld [vmem:[%s1965] sm:$0x1]
        %v1968 = vlaneseq
        %v1969 = vshrl.u32 %v1968, 7
        %v1970 = vsub.s32 0, %v1969
        %v1971 = vrot.slane %v1966, %v1970
        %v1977 = vunpack.c.l.b16 %v1961
        %v1978 = vunpack.c.l.b16 %v1962
        %v1979 = vunpack.c.l.b16 %v1963
        %v1980 = vunpack.c.l.b16 %v1964
        %v1981 = vpack.c.b16 %v1978, %v1977
        %v1982 = vpack.c.b16 %v1980, %v1979
        %v1986 = vsel %vm854, %v1957, 0
        %v1989 = vsel %vm854, %v1958, 0
        %1991 = vmatprep.subr.bf16.mxu0 0
        %1992 = vmatpush1.bf16.msra.mxu0 %v1981
        %1993 = vmatprep.subr.bf16.mxu0 0
        %1994 = vmatpush1.bf16.msra.mxu0 %v1982
        %1995 = vmatprep.subr.bf16.mxu0 0
        %1996 = vmatpush1.bf16.msra.mxu0 0
        %1997 = vmatprep.subr.bf16.mxu0 0
        %1998 = vmatpush1.bf16.msra.mxu0 0
        %1999 = vmatprep.subr.bf16.mxu0 0
        %2000 = vmatpush1.bf16.msra.mxu0 0
        %2001 = vmatprep.subr.bf16.mxu0 0
        %2002 = vmatpush1.bf16.msra.mxu0 0
        %2003 = vmatprep.subr.bf16.mxu0 0
        %2004 = vmatpush1.bf16.msra.mxu0 0
        %2005 = vmatprep.subr.bf16.mxu0 0
        %2006 = vmatpush1.bf16.msra.mxu0 0
        %2007 = vmatprep.subr.bf16.mxu0 0
        %2008 = vmatpush1.bf16.msra.mxu0 0
        %2009 = vmatprep.subr.bf16.mxu0 0
        %2010 = vmatpush1.bf16.msra.mxu0 0
        %2011 = vmatprep.subr.bf16.mxu0 0
        %2012 = vmatpush1.bf16.msra.mxu0 0
        %2013 = vmatprep.subr.bf16.mxu0 0
        %2014 = vmatpush1.bf16.msra.mxu0 0
        %2015 = vmatprep.subr.bf16.mxu0 0
        %2016 = vmatpush1.bf16.msra.mxu0 0
        %2017 = vmatprep.subr.bf16.mxu0 0
        %2018 = vmatpush1.bf16.msra.mxu0 0
        %2019 = vmatprep.subr.bf16.mxu0 0
        %2020 = vmatpush1.bf16.msra.mxu0 0
        %2021 = vmatprep.subr.bf16.mxu0 0
        %2022 = vmatpush1.bf16.msra.mxu0 0
        %2023 = vmatprep.mubr.bf16.mxu0 0
        %2024 = vmatmul.mubr.bf16.gmra.mrb[0].mxu0 %v1986
        %v2025 = vpop.f32.mrb[0].mxu0
        %v2026 = vadd.f32 %v1971, %v2025
        %v2027 = vpop.f32.mrb[0].mxu0
        %v2028 = vpop.f32.mrb[0].mxu0
        %v2029 = vadd.f32 %v1971, %v2028
        %v2030 = vpop.f32.mrb[0].mxu0
        %2031 = vmatprep.mubr.bf16.mxu0 0
        %2032 = vmatmul.mubr.bf16.gmra.mrb[0].mxu0 %v1989
        %v2033 = vpop.f32.mrb[0].mxu0
        %v2034 = vadd.f32 %v1971, %v2033
        %v2035 = vpop.f32.mrb[0].mxu0
        %v2036 = vpop.f32.mrb[0].mxu0
        %v2037 = vadd.f32 %v1971, %v2036
        %v2038 = vpop.f32.mrb[0].mxu0
        %2039 = vdwg.mxu0
        %v2040 = vadd.f32 %v821, %v2026
        %v2041 = vadd.f32 %v822, %v2029
        %v2042 = vadd.f32 %v823, %v2034
        %v2043 = vadd.f32 %v824, %v2037
        %s2044 = scalar_lea.vmem %s10, %s40
        %v2045 = vld [vmem:[%s2044] sm:$0x1]
        %s2046 = scalar_lea.vmem %s11, %s40
        %v2047 = vld [vmem:[%s2046] sm:$0x1]
        %v2048 = vsel %vm854, %v2040, 0.0
        %2049 = vadd.xlane.f32.xlu0 %v2048
        %v2050 = vpop.xlane.xlu0 %2049
        %v2051 = vsel %vm854, %v2041, 0.0
        %2052 = vadd.xlane.f32.xlu0 %v2051
        %v2053 = vpop.xlane.xlu0 %2052
        %v2054 = vsel %vm854, %v2042, 0.0
        %2055 = vadd.xlane.f32.xlu0 %v2054
        %v2056 = vpop.xlane.xlu0 %2055
        %v2057 = vsel %vm854, %v2043, 0.0
        %2058 = vadd.xlane.f32.xlu0 %v2057
        %v2059 = vpop.xlane.xlu0 %2058
        %v2060 = vrcp.pop 32.0
        %v2061 = vmul.f32 %v2050, %v2060
        %v2062 = vmul.f32 %v2053, %v2060
        %v2063 = vmul.f32 %v2056, %v2060
        %v2064 = vmul.f32 %v2059, %v2060
        %v2065 = vsub.f32 %v2040, %v2061
        %v2066 = vsub.f32 %v2041, %v2062
        %v2067 = vsub.f32 %v2042, %v2063
        %v2068 = vsub.f32 %v2043, %v2064
        %v2069 = vmul.f32 %v2065, %v2065
        %v2070 = vmul.f32 %v2066, %v2066
        %v2071 = vmul.f32 %v2067, %v2067
        %v2072 = vmul.f32 %v2068, %v2068
        %v2073 = vsel %vm854, %v2069, 0.0
        %2074 = vadd.xlane.f32.xlu0 %v2073
        %v2075 = vpop.xlane.xlu0 %2074
        %v2076 = vsel %vm854, %v2070, 0.0
        %2077 = vadd.xlane.f32.xlu0 %v2076
        %v2078 = vpop.xlane.xlu0 %2077
        %v2079 = vsel %vm854, %v2071, 0.0
        %2080 = vadd.xlane.f32.xlu0 %v2079
        %v2081 = vpop.xlane.xlu0 %2080
        %v2082 = vsel %vm854, %v2072, 0.0
        %2083 = vadd.xlane.f32.xlu0 %v2082
        %v2084 = vpop.xlane.xlu0 %2083
        %v2085 = vmul.f32 %v2075, %v2060
        %v2086 = vmul.f32 %v2078, %v2060
        %v2087 = vmul.f32 %v2081, %v2060
        %v2088 = vmul.f32 %v2084, %v2060
        %v2089 = vadd.f32 %v2085, 1e-05
        %v2090 = vadd.f32 %v2086, 1e-05
        %v2091 = vadd.f32 %v2087, 1e-05
        %v2092 = vadd.f32 %v2088, 1e-05
        %v2093 = vrsqrt.pop %v2089
        %v2094 = vrsqrt.pop %v2090
        %v2095 = vrsqrt.pop %v2091
        %v2096 = vrsqrt.pop %v2092
        %v2097 = vmul.f32 %v2065, %v2093
        %v2098 = vmul.f32 %v2066, %v2094
        %v2099 = vmul.f32 %v2067, %v2095
        %v2100 = vmul.f32 %v2068, %v2096
        %v2102 = vlaneseq
        %v2103 = vshrl.u32 %v2102, 7
        %v2104 = vsub.s32 0, %v2103
        %v2105 = vrot.slane %v2045, %v2104
        %v2107 = vmul.f32 %v2097, %v2105
        %v2108 = vmul.f32 %v2098, %v2105
        %v2109 = vmul.f32 %v2099, %v2105
        %v2110 = vmul.f32 %v2100, %v2105
        %v2112 = vlaneseq
        %v2113 = vshrl.u32 %v2112, 7
        %v2114 = vsub.s32 0, %v2113
        %v2115 = vrot.slane %v2047, %v2114
        %v2117 = vadd.f32 %v2107, %v2115
        %v2118 = vadd.f32 %v2108, %v2115
        %v2119 = vadd.f32 %v2109, %v2115
        %v2120 = vadd.f32 %v2110, %v2115
        %v2121 = vpack.c.bf16 %v2118, %v2117
        %v2122 = vpack.c.bf16 %v2120, %v2119
        %s2123 = smul.addr %s827, 4
        %s2124 = scalar_lea.vmem %s12, %s2123
        %v2125 = vld [vmem:[%s2124] sm:$0xf]
        %v2126 = vld [vmem:[%s2124 + $0x4] sm:$0xf]
        %v2127 = vld [vmem:[%s2124 + $0x8] sm:$0xf]
        %v2128 = vld [vmem:[%s2124 + $0xc] sm:$0xf]
        %s2129 = scalar_lea.vmem %s13, %s40
        %v2130 = vld [vmem:[%s2129] sm:$0x1]
        %v2132 = vlaneseq
        %v2133 = vshrl.u32 %v2132, 7
        %v2134 = vsub.s32 0, %v2133
        %v2135 = vrot.slane %v2130, %v2134
        %v2141 = vunpack.c.l.b16 %v2125
        %v2142 = vunpack.c.l.b16 %v2126
        %v2143 = vunpack.c.l.b16 %v2127
        %v2144 = vunpack.c.l.b16 %v2128
        %v2145 = vpack.c.b16 %v2142, %v2141
        %v2146 = vpack.c.b16 %v2144, %v2143
        %v2150 = vsel %vm854, %v2121, 0
        %v2153 = vsel %vm854, %v2122, 0
        %2155 = vmatprep.subr.bf16.mxu0 0
        %2156 = vmatpush1.bf16.msra.mxu0 %v2145
        %2157 = vmatprep.subr.bf16.mxu0 0
        %2158 = vmatpush1.bf16.msra.mxu0 %v2146
        %2159 = vmatprep.subr.bf16.mxu0 0
        %2160 = vmatpush1.bf16.msra.mxu0 0
        %2161 = vmatprep.subr.bf16.mxu0 0
        %2162 = vmatpush1.bf16.msra.mxu0 0
        %2163 = vmatprep.subr.bf16.mxu0 0
        %2164 = vmatpush1.bf16.msra.mxu0 0
        %2165 = vmatprep.subr.bf16.mxu0 0
        %2166 = vmatpush1.bf16.msra.mxu0 0
        %2167 = vmatprep.subr.bf16.mxu0 0
        %2168 = vmatpush1.bf16.msra.mxu0 0
        %2169 = vmatprep.subr.bf16.mxu0 0
        %2170 = vmatpush1.bf16.msra.mxu0 0
        %2171 = vmatprep.subr.bf16.mxu0 0
        %2172 = vmatpush1.bf16.msra.mxu0 0
        %2173 = vmatprep.subr.bf16.mxu0 0
        %2174 = vmatpush1.bf16.msra.mxu0 0
        %2175 = vmatprep.subr.bf16.mxu0 0
        %2176 = vmatpush1.bf16.msra.mxu0 0
        %2177 = vmatprep.subr.bf16.mxu0 0
        %2178 = vmatpush1.bf16.msra.mxu0 0
        %2179 = vmatprep.subr.bf16.mxu0 0
        %2180 = vmatpush1.bf16.msra.mxu0 0
        %2181 = vmatprep.subr.bf16.mxu0 0
        %2182 = vmatpush1.bf16.msra.mxu0 0
        %2183 = vmatprep.subr.bf16.mxu0 0
        %2184 = vmatpush1.bf16.msra.mxu0 0
        %2185 = vmatprep.subr.bf16.mxu0 0
        %2186 = vmatpush1.bf16.msra.mxu0 0
        %2187 = vmatprep.mubr.bf16.mxu0 0
        %2188 = vmatmul.mubr.bf16.gmra.mrb[0].mxu0 %v2150
        %v2189 = vpop.f32.mrb[0].mxu0
        %v2190 = vadd.f32 %v2135, %v2189
        %v2191 = vpop.f32.mrb[0].mxu0
        %v2192 = vpop.f32.mrb[0].mxu0
        %v2193 = vadd.f32 %v2135, %v2192
        %v2194 = vpop.f32.mrb[0].mxu0
        %2195 = vmatprep.mubr.bf16.mxu0 0
        %2196 = vmatmul.mubr.bf16.gmra.mrb[0].mxu0 %v2153
        %v2197 = vpop.f32.mrb[0].mxu0
        %v2198 = vadd.f32 %v2135, %v2197
        %v2199 = vpop.f32.mrb[0].mxu0
        %v2200 = vpop.f32.mrb[0].mxu0
        %v2201 = vadd.f32 %v2135, %v2200
        %v2202 = vpop.f32.mrb[0].mxu0
        %2203 = vdwg.mxu0
        %v2204 = vmax.f32 %v2190, 0.0
        %v2205 = vmax.f32 %v2193, 0.0
        %v2206 = vmax.f32 %v2198, 0.0
        %v2207 = vmax.f32 %v2201, 0.0
        %v2208 = vpack.c.bf16 %v2205, %v2204
        %v2209 = vpack.c.bf16 %v2207, %v2206
        %s2210 = smul.u32 %s40, 8
        %s2211 = smul.addr %s2210, 4
        %s2212 = scalar_lea.vmem %s14, %s2211
        %v2213 = vld [vmem:[%s2212] sm:$0xf]
        %v2214 = vld [vmem:[%s2212 + $0x4] sm:$0xf]
        %v2215 = vld [vmem:[%s2212 + $0x8] sm:$0xf]
        %v2216 = vld [vmem:[%s2212 + $0xc] sm:$0xf]
        %v2217 = vld [vmem:[%s2212 + $0x10] sm:$0xf]
        %v2218 = vld [vmem:[%s2212 + $0x14] sm:$0xf]
        %v2219 = vld [vmem:[%s2212 + $0x18] sm:$0xf]
        %v2220 = vld [vmem:[%s2212 + $0x1c] sm:$0xf]
        %s2221 = scalar_lea.vmem %s15, %s40
        %v2222 = vld [vmem:[%s2221] sm:$0x1]
        %v2224 = vlaneseq
        %v2225 = vshrl.u32 %v2224, 7
        %v2226 = vsub.s32 0, %v2225
        %v2227 = vrot.slane %v2222, %v2226
        %v2237 = vunpack.c.l.b16 %v2213
        %v2238 = vunpack.c.l.b16 %v2214
        %v2239 = vunpack.c.l.b16 %v2215
        %v2240 = vunpack.c.l.b16 %v2216
        %v2241 = vunpack.c.l.b16 %v2217
        %v2242 = vunpack.c.l.b16 %v2218
        %v2243 = vunpack.c.l.b16 %v2219
        %v2244 = vunpack.c.l.b16 %v2220
        %v2245 = vpack.c.b16 %v2238, %v2237
        %v2246 = vpack.c.b16 %v2240, %v2239
        %v2247 = vpack.c.b16 %v2242, %v2241
        %v2248 = vpack.c.b16 %v2244, %v2243
        %vm2253 = vcmask 523264
        %v2255 = vsel %vm2253, %v2208, 0
        %v2258 = vsel %vm2253, %v2209, 0
        %2260 = vmatprep.subr.bf16.mxu0 0
        %2261 = vmatpush1.bf16.msra.mxu0 %v2245
        %2262 = vmatprep.subr.bf16.mxu0 0
        %2263 = vmatpush1.bf16.msra.mxu0 %v2246
        %2264 = vmatprep.subr.bf16.mxu0 0
        %2265 = vmatpush1.bf16.msra.mxu0 %v2247
        %2266 = vmatprep.subr.bf16.mxu0 0
        %2267 = vmatpush1.bf16.msra.mxu0 %v2248
        %2268 = vmatprep.subr.bf16.mxu0 0
        %2269 = vmatpush1.bf16.msra.mxu0 0
        %2270 = vmatprep.subr.bf16.mxu0 0
        %2271 = vmatpush1.bf16.msra.mxu0 0
        %2272 = vmatprep.subr.bf16.mxu0 0
        %2273 = vmatpush1.bf16.msra.mxu0 0
        %2274 = vmatprep.subr.bf16.mxu0 0
        %2275 = vmatpush1.bf16.msra.mxu0 0
        %2276 = vmatprep.subr.bf16.mxu0 0
        %2277 = vmatpush1.bf16.msra.mxu0 0
        %2278 = vmatprep.subr.bf16.mxu0 0
        %2279 = vmatpush1.bf16.msra.mxu0 0
        %2280 = vmatprep.subr.bf16.mxu0 0
        %2281 = vmatpush1.bf16.msra.mxu0 0
        %2282 = vmatprep.subr.bf16.mxu0 0
        %2283 = vmatpush1.bf16.msra.mxu0 0
        %2284 = vmatprep.subr.bf16.mxu0 0
        %2285 = vmatpush1.bf16.msra.mxu0 0
        %2286 = vmatprep.subr.bf16.mxu0 0
        %2287 = vmatpush1.bf16.msra.mxu0 0
        %2288 = vmatprep.subr.bf16.mxu0 0
        %2289 = vmatpush1.bf16.msra.mxu0 0
        %2290 = vmatprep.subr.bf16.mxu0 0
        %2291 = vmatpush1.bf16.msra.mxu0 0
        %2292 = vmatprep.mubr.bf16.mxu0 0
        %2293 = vmatmul.mubr.bf16.gmra.mrb[0].mxu0 %v2255
        %v2294 = vpop.f32.mrb[0].mxu0
        %v2295 = vadd.f32 %v2227, %v2294
        %v2296 = vpop.f32.mrb[0].mxu0
        %v2297 = vpop.f32.mrb[0].mxu0
        %v2298 = vadd.f32 %v2227, %v2297
        %v2299 = vpop.f32.mrb[0].mxu0
        %2300 = vmatprep.mubr.bf16.mxu0 0
        %2301 = vmatmul.mubr.bf16.gmra.mrb[0].mxu0 %v2258
        %v2302 = vpop.f32.mrb[0].mxu0
        %v2303 = vadd.f32 %v2227, %v2302
        %v2304 = vpop.f32.mrb[0].mxu0
        %v2305 = vpop.f32.mrb[0].mxu0
        %v2306 = vadd.f32 %v2227, %v2305
        %v2307 = vpop.f32.mrb[0].mxu0
        %2308 = vdwg.mxu0
        %v2309 = vadd.f32 %v2117, %v2295
        %v2310 = vadd.f32 %v2118, %v2298
        %v2311 = vadd.f32 %v2119, %v2303
        %v2312 = vadd.f32 %v2120, %v2306
        %s2313 = scalar_lea.vmem %s16, %s40
        %v2314 = vld [vmem:[%s2313] sm:$0x1]
        %s2315 = scalar_lea.vmem %s17, %s40
        %v2316 = vld [vmem:[%s2315] sm:$0x1]
        %v2317 = vsel %vm854, %v2309, 0.0
        %2318 = vadd.xlane.f32.xlu0 %v2317
        %v2319 = vpop.xlane.xlu0 %2318
        %v2320 = vsel %vm854, %v2310, 0.0
        %2321 = vadd.xlane.f32.xlu0 %v2320
        %v2322 = vpop.xlane.xlu0 %2321
        %v2323 = vsel %vm854, %v2311, 0.0
        %2324 = vadd.xlane.f32.xlu0 %v2323
        %v2325 = vpop.xlane.xlu0 %2324
        %v2326 = vsel %vm854, %v2312, 0.0
        %2327 = vadd.xlane.f32.xlu0 %v2326
        %v2328 = vpop.xlane.xlu0 %2327
        %v2329 = vmul.f32 %v2319, %v2060
        %v2330 = vmul.f32 %v2322, %v2060
        %v2331 = vmul.f32 %v2325, %v2060
        %v2332 = vmul.f32 %v2328, %v2060
        %v2333 = vsub.f32 %v2309, %v2329
        %v2334 = vsub.f32 %v2310, %v2330
        %v2335 = vsub.f32 %v2311, %v2331
        %v2336 = vsub.f32 %v2312, %v2332
        %v2337 = vmul.f32 %v2333, %v2333
        %v2338 = vmul.f32 %v2334, %v2334
        %v2339 = vmul.f32 %v2335, %v2335
        %v2340 = vmul.f32 %v2336, %v2336
        %v2341 = vsel %vm854, %v2337, 0.0
        %2342 = vadd.xlane.f32.xlu0 %v2341
        %v2343 = vpop.xlane.xlu0 %2342
        %v2344 = vsel %vm854, %v2338, 0.0
        %2345 = vadd.xlane.f32.xlu0 %v2344
        %v2346 = vpop.xlane.xlu0 %2345
        %v2347 = vsel %vm854, %v2339, 0.0
        %2348 = vadd.xlane.f32.xlu0 %v2347
        %v2349 = vpop.xlane.xlu0 %2348
        %v2350 = vsel %vm854, %v2340, 0.0
        %2351 = vadd.xlane.f32.xlu0 %v2350
        %v2352 = vpop.xlane.xlu0 %2351
        %v2353 = vmul.f32 %v2343, %v2060
        %v2354 = vmul.f32 %v2346, %v2060
        %v2355 = vmul.f32 %v2349, %v2060
        %v2356 = vmul.f32 %v2352, %v2060
        %v2357 = vadd.f32 %v2353, 1e-05
        %v2358 = vadd.f32 %v2354, 1e-05
        %v2359 = vadd.f32 %v2355, 1e-05
        %v2360 = vadd.f32 %v2356, 1e-05
        %v2361 = vrsqrt.pop %v2357
        %v2362 = vrsqrt.pop %v2358
        %v2363 = vrsqrt.pop %v2359
        %v2364 = vrsqrt.pop %v2360
        %v2365 = vmul.f32 %v2333, %v2361
        %v2366 = vmul.f32 %v2334, %v2362
        %v2367 = vmul.f32 %v2335, %v2363
        %v2368 = vmul.f32 %v2336, %v2364
        %v2370 = vlaneseq
        %v2371 = vshrl.u32 %v2370, 7
        %v2372 = vsub.s32 0, %v2371
        %v2373 = vrot.slane %v2314, %v2372
        %v2375 = vmul.f32 %v2365, %v2373
        %v2376 = vmul.f32 %v2366, %v2373
        %v2377 = vmul.f32 %v2367, %v2373
        %v2378 = vmul.f32 %v2368, %v2373
        %v2380 = vlaneseq
        %v2381 = vshrl.u32 %v2380, 7
        %v2382 = vsub.s32 0, %v2381
        %v2383 = vrot.slane %v2316, %v2382
        %v2385 = vadd.f32 %v2375, %v2383
        %v2386 = vadd.f32 %v2376, %v2383
        %v2387 = vadd.f32 %v2377, %v2383
        %v2388 = vadd.f32 %v2378, %v2383
        %2389 = vst.msk [vmem:[#allocation2] sm:$0xff] %vm854, %v2385
        %2390 = vst.msk [vmem:[#allocation2 + $0x8] sm:$0xff] %vm854, %v2386
        %2391 = vst.msk [vmem:[#allocation2 + $0x10] sm:$0xff] %vm854, %v2387
        %2392 = vst.msk [vmem:[#allocation2 + $0x18] sm:$0xff] %vm854, %v2388
        %p2393 = scmp.eq.s32.totalorder %s40, 1
        // Predicated region
        $region105: #{tpu_custom_call.1} parent=99 // pred_check
          %p2394 = pneg %p2393
        $region106: #{tpu_custom_call.1} parent=99 // pred_check_branch
          %2396 = sbr.rel (%p2394) target = $region108
        $region107: #{tpu_custom_call.1} parent=99 // pred_region
          %v2397 = vsel %vm854, %v2386, 0.0
          %v2398 = vrot.slane %v2397, 4
          %v2399 = vadd.f32 %v2397, %v2398
          %v2400 = vrot.slane %v2399, 2
          %v2401 = vadd.f32 %v2399, %v2400
          %v2402 = vrot.slane %v2401, 1
          %v2403 = vadd.f32 %v2401, %v2402
          %v2404 = vsel %vm854, %v2388, 0.0
          %v2405 = vrot.slane %v2404, 4
          %v2406 = vadd.f32 %v2404, %v2405
          %v2407 = vrot.slane %v2406, 2
          %v2408 = vadd.f32 %v2406, %v2407
          %v2409 = vrot.slane %v2408, 1
          %v2410 = vadd.f32 %v2408, %v2409
          %v2411 = vrcp.pop 8.0
          %v2412 = vmul.f32 %v2403, %v2411
          %v2413 = vmul.f32 %v2410, %v2411
          %v2414 = vld [vmem:[%s686] sm:$0x1]
          %v2415 = vld [vmem:[%s686 + $0x1] sm:$0x1]
          %vm2418 = vcmask 1041409
          %v2419 = vsel %vm2418, %v2413, %v2412
          %v2423 = vcombine.low %v2414, %v2415
          %v2425 = vunpack.c.l.s4 1966171168
          %v2426 = vunpack.c.0.s8 %v2425
          %v2427 = vlaneseq
          %v2428 = vshrl.u32 %v2427, 7
          %v2429 = vsub.s32 %v2426, %v2428
          %v2430 = vrot.slane %v2423, %v2429
          %v2432 = vunpack.c.l.s4 1966171168
          %v2433 = vunpack.c.0.s8 %v2432
          %v2434 = vlaneseq
          %v2435 = vshrl.u32 %v2434, 7
          %v2436 = vsub.s32 %v2433, %v2435
          %v2437 = vrot.slane %v2430, %v2436
          %2438 = vrot.lane.b32.xlu0 %v2437, 32
          %v2439 = vpop.permute.xlu0 %2438
          %v2441 = vsel %vm854, %v2419, %v2439
          %v2442 = vpack.c.bf16 %v2441, %v2441
          %v2443 = vld [vmem:[%s18] sm:$0xf]
          %v2444 = vld [vmem:[%s18 + $0x4] sm:$0xf]
          %v2445 = vld [vmem:[%s18 + $0x8] sm:$0xf]
          %v2446 = vld [vmem:[%s18 + $0xc] sm:$0xf]
          %v2447 = vld [vmem:[%s18 + $0x10] sm:$0x3]
          %v2453 = vunpack.c.l.b16 %v2443
          %v2454 = vunpack.c.l.b16 %v2444
          %v2455 = vunpack.c.l.b16 %v2445
          %v2456 = vunpack.c.l.b16 %v2446
          %v2457 = vunpack.c.l.b16 %v2447
          %v2458 = vpack.c.b16 %v2454, %v2453
          %v2459 = vpack.c.b16 %v2456, %v2455
          %v2460 = vpack.c.b16 %v2457, %v2457
          %vm2463 = vcmask 293888
          %v2465 = vsel %vm2463, %v2442, 0
          %vm2467 = vcmask 1041408
          %v2469 = vsel %vm2467, %v2460, 0
          %2471 = vmatprep.subr.bf16.mxu0 0
          %2472 = vmatpush1.bf16.msra.mxu0 %v2458
          %2473 = vmatprep.subr.bf16.mxu0 0
          %2474 = vmatpush1.bf16.msra.mxu0 %v2459
          %2475 = vmatprep.subr.bf16.mxu0 0
          %2476 = vmatpush1.bf16.msra.mxu0 %v2469
          %2477 = vmatprep.subr.bf16.mxu0 0
          %2478 = vmatpush1.bf16.msra.mxu0 0
          %2479 = vmatprep.subr.bf16.mxu0 0
          %2480 = vmatpush1.bf16.msra.mxu0 0
          %2481 = vmatprep.subr.bf16.mxu0 0
          %2482 = vmatpush1.bf16.msra.mxu0 0
          %2483 = vmatprep.subr.bf16.mxu0 0
          %2484 = vmatpush1.bf16.msra.mxu0 0
          %2485 = vmatprep.subr.bf16.mxu0 0
          %2486 = vmatpush1.bf16.msra.mxu0 0
          %2487 = vmatprep.subr.bf16.mxu0 0
          %2488 = vmatpush1.bf16.msra.mxu0 0
          %2489 = vmatprep.subr.bf16.mxu0 0
          %2490 = vmatpush1.bf16.msra.mxu0 0
          %2491 = vmatprep.subr.bf16.mxu0 0
          %2492 = vmatpush1.bf16.msra.mxu0 0
          %2493 = vmatprep.subr.bf16.mxu0 0
          %2494 = vmatpush1.bf16.msra.mxu0 0
          %2495 = vmatprep.subr.bf16.mxu0 0
          %2496 = vmatpush1.bf16.msra.mxu0 0
          %2497 = vmatprep.subr.bf16.mxu0 0
          %2498 = vmatpush1.bf16.msra.mxu0 0
          %2499 = vmatprep.subr.bf16.mxu0 0
          %2500 = vmatpush1.bf16.msra.mxu0 0
          %2501 = vmatprep.subr.bf16.mxu0 0
          %2502 = vmatpush1.bf16.msra.mxu0 0
          %2503 = vmatprep.mubr.bf16.mxu0 0
          %2504 = vmatmul.mubr.bf16.gmra.mrb[0].mxu0 %v2465
          %v2505 = vpop.f32.mrb[0].mxu0
          %v2506 = vadd.f32 0.0, %v2505
          %v2507 = vpop.f32.mrb[0].mxu0
          %v2508 = vpop.f32.mrb[0].mxu0
          %v2509 = vpop.f32.mrb[0].mxu0
          %2510 = vdwg.mxu0
          %v2511 = vpack.c.bf16 %v2388, %v2386
          %v2512 = vld [vmem:[%s19] sm:$0xf]
          %v2513 = vld [vmem:[%s19 + $0x4] sm:$0xf]
          %v2514 = vld [vmem:[%s19 + $0x8] sm:$0xf]
          %v2515 = vld [vmem:[%s19 + $0xc] sm:$0xf]
          %v2520 = vunpack.c.l.b16 %v2512
          %v2521 = vunpack.c.l.b16 %v2513
          %v2522 = vunpack.c.l.b16 %v2514
          %v2523 = vunpack.c.l.b16 %v2515
          %v2524 = vpack.c.b16 %v2521, %v2520
          %v2525 = vpack.c.b16 %v2523, %v2522
          %v2529 = vsel %vm854, %v2511, 0
          %2531 = vmatprep.subr.bf16.mxu0 0
          %2532 = vmatpush1.bf16.msra.mxu0 %v2524
          %2533 = vmatprep.subr.bf16.mxu0 0
          %2534 = vmatpush1.bf16.msra.mxu0 %v2525
          %2535 = vmatprep.subr.bf16.mxu0 0
          %2536 = vmatpush1.bf16.msra.mxu0 0
          %2537 = vmatprep.subr.bf16.mxu0 0
          %2538 = vmatpush1.bf16.msra.mxu0 0
          %2539 = vmatprep.subr.bf16.mxu0 0
          %2540 = vmatpush1.bf16.msra.mxu0 0
          %2541 = vmatprep.subr.bf16.mxu0 0
          %2542 = vmatpush1.bf16.msra.mxu0 0
          %2543 = vmatprep.subr.bf16.mxu0 0
          %2544 = vmatpush1.bf16.msra.mxu0 0
          %2545 = vmatprep.subr.bf16.mxu0 0
          %2546 = vmatpush1.bf16.msra.mxu0 0
          %2547 = vmatprep.subr.bf16.mxu0 0
          %2548 = vmatpush1.bf16.msra.mxu0 0
          %2549 = vmatprep.subr.bf16.mxu0 0
          %2550 = vmatpush1.bf16.msra.mxu0 0
          %2551 = vmatprep.subr.bf16.mxu0 0
          %2552 = vmatpush1.bf16.msra.mxu0 0
          %2553 = vmatprep.subr.bf16.mxu0 0
          %2554 = vmatpush1.bf16.msra.mxu0 0
          %2555 = vmatprep.subr.bf16.mxu0 0
          %2556 = vmatpush1.bf16.msra.mxu0 0
          %2557 = vmatprep.subr.bf16.mxu0 0
          %2558 = vmatpush1.bf16.msra.mxu0 0
          %2559 = vmatprep.subr.bf16.mxu0 0
          %2560 = vmatpush1.bf16.msra.mxu0 0
          %2561 = vmatprep.subr.bf16.mxu0 0
          %2562 = vmatpush1.bf16.msra.mxu0 0
          %2563 = vmatprep.mubr.bf16.mxu0 0
          %2564 = vmatmul.mubr.bf16.gmra.mrb[0].mxu0 %v2529
          %v2565 = vpop.f32.mrb[0].mxu0
          %v2566 = vadd.f32 0.0, %v2565
          %v2567 = vpop.f32.mrb[0].mxu0
          %v2568 = vpop.f32.mrb[0].mxu0
          %v2569 = vadd.f32 0.0, %v2568
          %v2570 = vpop.f32.mrb[0].mxu0
          %2571 = vdwg.mxu0
          %v2574 = vunpack.c.l.s4 1966171168
          %v2575 = vunpack.c.0.s8 %v2574
          %v2576 = vlaneseq
          %v2577 = vshrl.u32 %v2576, 7
          %v2578 = vsub.s32 %v2575, %v2577
          %v2579 = vrot.slane %v2506, %v2578
          %v2580 = vcombine.high %v2579, %v2579
          %v2582 = vunpack.c.l.s4 1966171168
          %v2583 = vunpack.c.0.s8 %v2582
          %v2584 = vlaneseq
          %v2585 = vshrl.u32 %v2584, 7
          %v2586 = vsub.s32 %v2583, %v2585
          %v2587 = vrot.slane %v2579, %v2586
          %v2589 = vunpack.c.l.s4 1966171168
          %v2590 = vunpack.c.0.s8 %v2589
          %v2591 = vlaneseq
          %v2592 = vshrl.u32 %v2591, 7
          %v2593 = vsub.s32 %v2590, %v2592
          %v2594 = vrot.slane %v2580, %v2593
          %v2597 = vpack.c.bf16 %v2587, %v2587
          %v2598 = vpack.c.bf16 %v2594, %v2594
          %v2599 = vpack.c.bf16 %v2566, %v2566
          %v2600 = vpack.c.bf16 %v2569, %v2569
          %v2602 = vsel %vm854, %v2597, 0
          %v2605 = vsel %vm854, %v2599, 0
          %2607 = vmatprep.subr.bf16.mxu0 0
          %2608 = vmatpush1.bf16.xpose.msra.mxu0 %v2605
          %2609 = vmatprep.subr.bf16.mxu0 0
          %2610 = vmatpush1.bf16.xpose.msra.mxu0 0
          %2611 = vmatprep.subr.bf16.mxu0 0
          %2612 = vmatpush1.bf16.xpose.msra.mxu0 0
          %2613 = vmatprep.subr.bf16.mxu0 0
          %2614 = vmatpush1.bf16.xpose.msra.mxu0 0
          %2615 = vmatprep.subr.bf16.mxu0 0
          %2616 = vmatpush1.bf16.xpose.msra.mxu0 0
          %2617 = vmatprep.subr.bf16.mxu0 0
          %2618 = vmatpush1.bf16.xpose.msra.mxu0 0
          %2619 = vmatprep.subr.bf16.mxu0 0
          %2620 = vmatpush1.bf16.xpose.msra.mxu0 0
          %2621 = vmatprep.subr.bf16.mxu0 0
          %2622 = vmatpush1.bf16.xpose.msra.mxu0 0
          %2623 = vmatprep.subr.bf16.mxu0 0
          %2624 = vmatpush1.bf16.xpose.msra.mxu0 0
          %2625 = vmatprep.subr.bf16.mxu0 0
          %2626 = vmatpush1.bf16.xpose.msra.mxu0 0
          %2627 = vmatprep.subr.bf16.mxu0 0
          %2628 = vmatpush1.bf16.xpose.msra.mxu0 0
          %2629 = vmatprep.subr.bf16.mxu0 0
          %2630 = vmatpush1.bf16.xpose.msra.mxu0 0
          %2631 = vmatprep.subr.bf16.mxu0 0
          %2632 = vmatpush1.bf16.xpose.msra.mxu0 0
          %2633 = vmatprep.subr.bf16.mxu0 0
          %2634 = vmatpush1.bf16.xpose.msra.mxu0 0
          %2635 = vmatprep.subr.bf16.mxu0 0
          %2636 = vmatpush1.bf16.xpose.msra.mxu0 0
          %2637 = vmatprep.subr.bf16.mxu0 0
          %2638 = vmatpush1.bf16.xpose.msra.mxu0 0
          %2639 = vmatprep.mubr.bf16.mxu0 0
          %2640 = vmatmul.mubr.bf16.gmra.mrb[0].mxu0 %v2602
          %v2641 = vpop.f32.mrb[0].mxu0
          %v2642 = vadd.f32 0.0, %v2641
          %v2643 = vpop.f32.mrb[0].mxu0
          %v2644 = vpop.f32.mrb[0].mxu0
          %v2645 = vpop.f32.mrb[0].mxu0
          %2646 = vdwg.mxu0
          %v2648 = vsel %vm854, %v2598, 0
          %v2651 = vsel %vm854, %v2600, 0
          %2653 = vmatprep.subr.bf16.mxu0 0
          %2654 = vmatpush1.bf16.xpose.msra.mxu0 %v2651
          %2655 = vmatprep.subr.bf16.mxu0 0
          %2656 = vmatpush1.bf16.xpose.msra.mxu0 0
          %2657 = vmatprep.subr.bf16.mxu0 0
          %2658 = vmatpush1.bf16.xpose.msra.mxu0 0
          %2659 = vmatprep.subr.bf16.mxu0 0
          %2660 = vmatpush1.bf16.xpose.msra.mxu0 0
          %2661 = vmatprep.subr.bf16.mxu0 0
          %2662 = vmatpush1.bf16.xpose.msra.mxu0 0
          %2663 = vmatprep.subr.bf16.mxu0 0
          %2664 = vmatpush1.bf16.xpose.msra.mxu0 0
          %2665 = vmatprep.subr.bf16.mxu0 0
          %2666 = vmatpush1.bf16.xpose.msra.mxu0 0
          %2667 = vmatprep.subr.bf16.mxu0 0
          %2668 = vmatpush1.bf16.xpose.msra.mxu0 0
          %2669 = vmatprep.subr.bf16.mxu0 0
          %2670 = vmatpush1.bf16.xpose.msra.mxu0 0
          %2671 = vmatprep.subr.bf16.mxu0 0
          %2672 = vmatpush1.bf16.xpose.msra.mxu0 0
          %2673 = vmatprep.subr.bf16.mxu0 0
          %2674 = vmatpush1.bf16.xpose.msra.mxu0 0
          %2675 = vmatprep.subr.bf16.mxu0 0
          %2676 = vmatpush1.bf16.xpose.msra.mxu0 0
          %2677 = vmatprep.subr.bf16.mxu0 0
          %2678 = vmatpush1.bf16.xpose.msra.mxu0 0
          %2679 = vmatprep.subr.bf16.mxu0 0
          %2680 = vmatpush1.bf16.xpose.msra.mxu0 0
          %2681 = vmatprep.subr.bf16.mxu0 0
          %2682 = vmatpush1.bf16.xpose.msra.mxu0 0
          %2683 = vmatprep.subr.bf16.mxu0 0
          %2684 = vmatpush1.bf16.xpose.msra.mxu0 0
          %2685 = vmatprep.mubr.bf16.mxu0 0
          %2686 = vmatmul.mubr.bf16.gmra.mrb[0].mxu0 %v2648
          %v2687 = vpop.f32.mrb[0].mxu0
          %v2688 = vadd.f32 0.0, %v2687
          %v2689 = vpop.f32.mrb[0].mxu0
          %v2690 = vpop.f32.mrb[0].mxu0
          %v2691 = vpop.f32.mrb[0].mxu0
          %2692 = vdwg.mxu0
          %v2693 = vmul.f32 %v2642, 0.17677669
          %v2694 = vmul.f32 %v2688, 0.17677669
          %v2695 = vtanh.pop %v2693
          %v2696 = vtanh.pop %v2694
          %v2697 = vmul.f32 %v2695, 6.0
          %v2698 = vmul.f32 %v2696, 6.0
          %v2699 = vsel %vm915, %v2697, -1e+30
          %v2700 = vsel %vm915, %v2698, -1e+30
          %vm2701 = vcmask 1040384
          %v2702 = vsel %vm2701, %v2699, -inf
          %2703 = vmax.xlane.f32.xlu0 %v2702
          %v2704 = vpop.xlane.xlu0 %2703
          %v2705 = vsel %vm2701, %v2700, -inf
          %2706 = vmax.xlane.f32.xlu0 %v2705
          %v2707 = vpop.xlane.xlu0 %2706
          %v2708 = vsub.f32 %v2699, %v2704
          %v2709 = vsub.f32 %v2700, %v2707
          %v2710 = vmul.f32 %v2708, 1.442695
          %v2711 = vpow.pop %v2710
          %v2712 = vmul.f32 %v2709, 1.442695
          %v2713 = vpow.pop %v2712
          %v2714 = vsel %vm2701, %v2711, 0.0
          %2715 = vadd.xlane.f32.xlu0 %v2714
          %v2716 = vpop.xlane.xlu0 %2715
          %v2717 = vsel %vm2701, %v2713, 0.0
          %2718 = vadd.xlane.f32.xlu0 %v2717
          %v2719 = vpop.xlane.xlu0 %2718
          %v2720 = vlog2.pop %v2716
          %v2721 = vmul.f32 %v2720, 0.6931472
          %v2722 = vlog2.pop %v2719
          %v2723 = vmul.f32 %v2722, 0.6931472
          %v2724 = vsub.f32 %v2708, %v2721
          %v2725 = vsub.f32 %v2709, %v2723
          %2726 = vst [vmem:[#allocation5] sm:$0x1] %v2724
          %2727 = vst [vmem:[#allocation5 + $0x1] sm:$0x1] %v2725
        $region108: #{tpu_custom_call.1} parent=99 // pred_fallthru
          _
        // Predicated region
        $region109: #{tpu_custom_call.1} parent=99 // pred_check
          %p2728 = pneg %p495
        $region110: #{tpu_custom_call.1} parent=99 // pred_check_branch
          %2730 = sbr.rel (%p2728) target = $region112
        $region111: #{tpu_custom_call.1} parent=99 // pred_region
          %s2731 = smul.u32 2, %s39
          %s2733 = ssub.s32 512, 512
          %2734 = vsyncadd [#allocation4], %s2733
          %s2735 = smul.addr %s2731, 2
          %s2736 = smul.addr %s2735, 128
          %s2737 = scalar_lea.hbm %s20, %s2736
          %s2738 = sshll.u32 [#allocation3], 4
          %s2739 = int_to_ptr.vmem [resolvable:$true] %s2738
          %2744 = dma.vmem_to_hbm [thread:$0]  %s2739, 512, %s2737, [#allocation4], 128, 128, 8
        $region112: #{tpu_custom_call.1} parent=99 // pred_fallthru
          _
        // Predicated region
        $region113: #{tpu_custom_call.1} parent=99 // pred_check
          %p2745 = pneg %p521
        $region114: #{tpu_custom_call.1} parent=99 // pred_check_branch
          %2747 = sbr.rel (%p2745) target = $region116
        $region115: #{tpu_custom_call.1} parent=99 // pred_region
          %s2748 = smul.u32 2, %s39
          %s2750 = ssub.s32 32, 32
          %2751 = vsyncadd [#allocation6], %s2750
          %s2752 = smul.addr %s2748, 16
          %s2753 = scalar_lea.hbm %s21, %s2752
          %s2754 = sshll.u32 [#allocation5], 4
          %s2755 = int_to_ptr.vmem [resolvable:$true] %s2754
          %2760 = dma.vmem_to_hbm [thread:$0]  %s2755, 32, %s2753, [#allocation6], 16, 16, 1
        $region116: #{tpu_custom_call.1} parent=99 // pred_fallthru
          _
        // Predicated region
        $region117: #{tpu_custom_call.1} parent=99 // pred_check
          %p2761 = pneg %p495
        $region118: #{tpu_custom_call.1} parent=99 // pred_check_branch
          %2763 = sbr.rel (%p2761) target = $region120
        $region119: #{tpu_custom_call.1} parent=99 // pred_region
          %2764 = dma.done [#allocation4], 512
        $region120: #{tpu_custom_call.1} parent=99 // pred_fallthru
          _
        // Predicated region
        $region121: #{tpu_custom_call.1} parent=99 // pred_check
          %p2765 = pneg %p521
        $region122: #{tpu_custom_call.1} parent=99 // pred_check_branch
          %2767 = sbr.rel (%p2765) target = $region124
        $region123: #{tpu_custom_call.1} parent=99 // pred_region
          %2768 = dma.done [#allocation6], 32
        $region124: #{tpu_custom_call.1} parent=99 // pred_fallthru
          _
      $region100: #{tpu_custom_call.1} parent=5 // pred_fallthru
        _
      %p2769 = scmp.le.s32.totalorder 2, %s30
      // Predicated region
      $region125: #{tpu_custom_call.1} parent=5 // pred_check
        %p2770 = pneg %p2769
      $region126: #{tpu_custom_call.1} parent=5 // pred_check_branch
        %2772 = sbr.rel (%p2770) target = $region128
      $region127: #{tpu_custom_call.1} parent=5 // pred_region
        %s2773 = ssub.s32 %s30, 2
      $region128: #{tpu_custom_call.1} parent=5 // pred_fallthru
        _
    $region6: #{tpu_custom_call.1} parent=1 // loop_footer
      %s34 = sadd.s32 1, %s30
    $region7: #{tpu_custom_call.1} parent=1 // loop_footer_branch
      %29 = sbr.rel target = $region3
    $region8: #{tpu_custom_call.1} parent=1 // loop_exit
      _
    %2774 = vsyncpa [#allocation4], 1
    %s2775 = scalar_lea.sflag [#allocation4], 1
    %2776 = vsyncpa %s2775, 1
    %2777 = vsyncpa [#allocation6], 1

</llo_original>
